<compile_context>
chip_gen: v5e
topology: v5e:2x2
jax: 0.10.0
libtpu: 0.0.40
codegen_flags: <defaults>
</compile_context>

<pallas_src>
import functools

import numpy as np
import jax
import jax.numpy as jnp
from jax.experimental import pallas as pl
from jax.experimental.pallas import tpu as pltpu

# ----- config (mirrors the module's hyper-parameters at small, aligned sizes) -----
B = 4                  # batch size per view  -> 2B = 8 rows = one full sublane group
C, H, W = 4, 16, 16    # image shape (NCHW)
FEAT_IN = C * H * W    # 1024
HIDDEN = 128           # lane-dense hidden width
DIM = 128              # feature dim ("dim" in ModelMoCo, default 128)
K_QUEUE = 128          # queue size ("K"), lane/sublane aligned; K % (2B) == 0
M_MOM = 0.99           # momentum "m"
TEMP = 0.1             # temperature "T"
NKEYS = 2 * B          # keys enqueued per step (symmetric=True)
assert K_QUEUE % NKEYS == 0

VMEM = pltpu.MemorySpace.VMEM
SMEM = pltpu.MemorySpace.SMEM


# --------------------------- fused Pallas kernel ---------------------------

def _moco_fused_kernel(
    # inputs
    ptr_ref,                                    # SMEM (1,) int32 : queue_ptr
    x_ref,                                      # VMEM (2B, FEAT_IN): [im1; im2] flattened
    w1q_ref, b1q_ref, w2q_ref, b2q_ref,         # query encoder params (VMEM, f32)
    w1k_ref, b1k_ref, w2k_ref, b2k_ref,         # key encoder params   (VMEM, f32)
    queue_in_hbm,                               # ANY  (K, D): queue, HBM resident
    # outputs
    loss_ref,                                   # SMEM (1, 1) f32
    w1k_out, b1k_out, w2k_out, b2k_out,         # updated key params (aliased in place)
    queue_out_hbm,                              # ANY  (K, D): same HBM buffer as input
    ptr_out,                                    # SMEM (1,) int32
    # scratch
    queue_vmem,                                 # VMEM (K, D) f32
    keys_vmem,                                  # VMEM (2B, D) f32
    dma_sems,                                   # DMA semaphores (2,)
):
    # Kick off the queue HBM -> VMEM fetch; it overlaps with the encoder matmuls.
    queue_fetch = pltpu.make_async_copy(queue_in_hbm, queue_vmem, dma_sems.at[0])
    queue_fetch.start()

    ptr = ptr_ref[0]                            # scalar read before any DMA wait

    # ---- momentum update of the key encoder (f32 EMA state):
    #      param_k = param_k + (param_q - param_k) * (1 - m)  (2 VALU ops/elem)
    one_minus_m = 1.0 - M_MOM
    w1k_out[...] = w1k_ref[...] + (w1q_ref[...] - w1k_ref[...]) * one_minus_m
    b1k_out[...] = b1k_ref[...] + (b1q_ref[...] - b1k_ref[...]) * one_minus_m
    w2k_out[...] = w2k_ref[...] + (w2q_ref[...] - w2k_ref[...]) * one_minus_m
    b2k_out[...] = b2k_ref[...] + (b2q_ref[...] - b2k_ref[...]) * one_minus_m

    # ---- layer 1, fused across the q- and k-encoders (bf16 operands, f32 accum) ----
    x_bf = x_ref[...].astype(jnp.bfloat16)                                   # (2B, FEAT_IN)
    w1_cat = jnp.concatenate(
        [w1q_ref[...].astype(jnp.bfloat16), w1k_out[...].astype(jnp.bfloat16)],
        axis=1)                                                              # (FEAT_IN, 2*HIDDEN)
    h_cat = jnp.dot(x_bf, w1_cat, preferred_element_type=jnp.float32)        # (2B, 2*HIDDEN)
    h_q = jnp.maximum(h_cat[:, :HIDDEN] + b1q_ref[...], 0.0)
    h_k = jnp.maximum(h_cat[:, HIDDEN:] + b1k_out[...], 0.0)

    # ---- layer 2 + F.normalize(dim=1, eps=1e-12) via rsqrt (EUP) ----
    def head(h, w2, b2):
        f = jnp.dot(h.astype(jnp.bfloat16), w2.astype(jnp.bfloat16),
                    preferred_element_type=jnp.float32) + b2
        inv = jax.lax.rsqrt(jnp.maximum(jnp.sum(f * f, axis=1, keepdims=True), 1e-24))
        return f * inv

    q_all = head(h_q, w2q_ref[...], b2q_ref[...])                            # [q1; q2]
    k_all = head(h_k, w2k_out[...], b2k_out[...])                            # [k1; k2]

    # Stage the new keys and launch the enqueue DMA as soon as the pre-enqueue
    # queue copy has landed in VMEM (queue_out aliases queue_in, so the write must
    # not start before the fetch completes). The write then overlaps the loss math.
    keys_vmem[...] = k_all                       # keys = cat([k1, k2]); queue stored (K, D)
    queue_fetch.wait()

    ptr_aligned = pl.multiple_of(ptr, NKEYS)     # ptr advances in steps of 2B
    enq = pltpu.make_async_copy(
        keys_vmem, queue_out_hbm.at[pl.ds(ptr_aligned, NKEYS), :], dma_sems.at[1])
    enq.start()

    # positives: q1 pairs with k2, q2 pairs with k1 -> single XLU sublane rotate
    k_swap = pltpu.roll(k_all, shift=B, axis=0)
    l_pos = jnp.sum(q_all * k_swap, axis=1, keepdims=True)                   # (2B, 1)

    # negatives for both directions in one matmul:
    # l_neg[n, k] = sum_d q_all[n, d] * queue[k, d]  (== einsum 'nc,ck->nk' in PyTorch)
    l_neg = jax.lax.dot_general(
        q_all.astype(jnp.bfloat16), queue_vmem[...].astype(jnp.bfloat16),
        dimension_numbers=(((1,), (1,)), ((), ())),
        preferred_element_type=jnp.float32)                                  # (2B, K)

    # cross entropy with target class 0 (the positive column), /T, logsumexp form
    inv_t = 1.0 / TEMP
    pos = l_pos * inv_t
    neg = l_neg * inv_t
    mx = jnp.maximum(jnp.max(neg, axis=1, keepdims=True), pos)
    lse = jnp.log(jnp.exp(pos - mx) +
                  jnp.sum(jnp.exp(neg - mx), axis=1, keepdims=True)) + mx
    ce = lse - pos                                                           # (2B, 1)
    # loss = mean(ce[:B]) + mean(ce[B:])  (the two symmetric directions) = sum(ce)/B
    loss_ref[0, 0] = jnp.sum(ce) * (1.0 / B)

    # scalar SMEM store BEFORE the DMA wait (wait breaks sst->sld forwarding)
    ptr_out[0] = (ptr + NKEYS) % K_QUEUE
    enq.wait()


def _build_moco_call():
    out_shape = (
        jax.ShapeDtypeStruct((1, 1), jnp.float32),               # loss
        jax.ShapeDtypeStruct((FEAT_IN, HIDDEN), jnp.float32),    # w1_k (updated)
        jax.ShapeDtypeStruct((1, HIDDEN), jnp.float32),          # b1_k
        jax.ShapeDtypeStruct((HIDDEN, DIM), jnp.float32),        # w2_k
        jax.ShapeDtypeStruct((1, DIM), jnp.float32),             # b2_k
        jax.ShapeDtypeStruct((K_QUEUE, DIM), jnp.float32),       # queue (updated in place)
        jax.ShapeDtypeStruct((1,), jnp.int32),                   # queue_ptr (updated)
    )
    in_specs = [
        pl.BlockSpec(memory_space=SMEM),        # ptr
        pl.BlockSpec(memory_space=VMEM),        # x (2B, FEAT_IN)
        pl.BlockSpec(memory_space=VMEM),        # w1_q
        pl.BlockSpec(memory_space=VMEM),        # b1_q
        pl.BlockSpec(memory_space=VMEM),        # w2_q
        pl.BlockSpec(memory_space=VMEM),        # b2_q
        pl.BlockSpec(memory_space=VMEM),        # w1_k
        pl.BlockSpec(memory_space=VMEM),        # b1_k
        pl.BlockSpec(memory_space=VMEM),        # w2_k
        pl.BlockSpec(memory_space=VMEM),        # b2_k
        pl.BlockSpec(memory_space=pl.ANY),      # queue, stays in HBM (manual DMA)
    ]
    out_specs = (
        pl.BlockSpec(memory_space=SMEM),        # loss
        pl.BlockSpec(memory_space=VMEM),        # w1_k'
        pl.BlockSpec(memory_space=VMEM),        # b1_k'
        pl.BlockSpec(memory_space=VMEM),        # w2_k'
        pl.BlockSpec(memory_space=VMEM),        # b2_k'
        pl.BlockSpec(memory_space=pl.ANY),      # queue' (same HBM buffer as input)
        pl.BlockSpec(memory_space=SMEM),        # ptr'
    )
    scratch_shapes = [
        pltpu.VMEM((K_QUEUE, DIM), jnp.float32),   # queue copy for the l_neg matmul
        pltpu.VMEM((NKEYS, DIM), jnp.float32),     # staging buffer for the enqueue DMA
        pltpu.SemaphoreType.DMA((2,)),             # [queue fetch, enqueue write]
    ]
    # in-place updates: key params (inputs 6..9 -> outputs 1..4), queue (10 -> 5)
    aliases = {6: 1, 7: 2, 8: 3, 9: 4, 10: 5}
    return pl.pallas_call(
        _moco_fused_kernel,
        out_shape=out_shape,
        in_specs=in_specs,
        out_specs=out_specs,
        scratch_shapes=scratch_shapes,
        input_output_aliases=aliases,
    )


# --------------------------- MoCo forward (thin wrapper) ---------------------------

@functools.partial(jax.jit, donate_argnums=(1, 2))
def moco_forward(params_q, params_k, queue_kd, queue_ptr, im1, im2):
    # NCHW row-major flatten of both views, batched through the encoders together.
    x = jnp.concatenate([im1, im2], axis=0).reshape(2 * B, FEAT_IN)
    (loss, w1k, b1k, w2k, b2k, queue_kd, queue_ptr) = _build_moco_call()(
        queue_ptr, x, *params_q, *params_k, queue_kd)
    return loss[0, 0], (w1k, b1k, w2k, b2k), queue_kd, queue_ptr


# --------------------------- deterministic init ---------------------------

def init_encoder_params(key):
    k1, k2 = jax.random.split(key)
    w1 = jax.random.normal(k1, (FEAT_IN, HIDDEN), jnp.float32) * 0.02
    b1 = jnp.zeros((1, HIDDEN), jnp.float32)
    w2 = jax.random.normal(k2, (HIDDEN, DIM), jnp.float32) * 0.02
    b2 = jnp.zeros((1, DIM), jnp.float32)
    return (w1, b1, w2, b2)


if __name__ == "__main__":
    root = jax.random.PRNGKey(0)
    k_params, k_queue, k_im1, k_im2 = jax.random.split(root, 4)

    # encoder_q; encoder_k starts as an exact copy (param_k.copy_(param_q))
    params_q = init_encoder_params(k_params)
    params_k = tuple(jnp.copy(p) for p in params_q)

    # queue buffer: randn(dim, K) normalized along dim=0, stored transposed as (K, D)
    # so each row (one stored key) is unit-norm.
    queue_kd = jax.random.normal(k_queue, (K_QUEUE, DIM), jnp.float32)
    queue_kd = queue_kd / jnp.linalg.norm(queue_kd, axis=1, keepdims=True)
    queue_ptr = jnp.zeros((1,), jnp.int32)

    im1 = jax.random.normal(k_im1, (B, C, H, W), jnp.float32)
    im2 = jax.random.normal(k_im2, (B, C, H, W), jnp.float32)

    # host-side snapshot for sanity checks (the device queue buffer is donated)
    queue_before = np.asarray(queue_kd)

    loss, params_k, queue_kd, queue_ptr = moco_forward(
        params_q, params_k, queue_kd, queue_ptr, im1, im2)
    jax.block_until_ready((loss, params_k, queue_kd, queue_ptr))

    # sanity checks
    assert loss.shape == () and bool(jnp.isfinite(loss))
    assert int(queue_ptr[0]) == NKEYS
    q_np = np.asarray(queue_kd)
    # only the first 2B rows were enqueued; the rest of the queue is untouched
    assert np.allclose(q_np[NKEYS:], queue_before[NKEYS:])
    # enqueued keys are L2-normalized encoder outputs (normalize done in f32)
    assert np.allclose(np.linalg.norm(q_np[:NKEYS], axis=1), 1.0, atol=1e-4)

    print("KERNEL_OK")
</pallas_src>

<mosaic_0001>
module attributes {stable_mosaic.version = 11 : i64} {
  func.func @_moco_fused_kernel(%arg0: memref<1xi32, #tpu.memory_space<smem>>, %arg1: memref<8x1024xf32, #tpu.memory_space<vmem>>, %arg2: memref<1024x128xf32, #tpu.memory_space<vmem>>, %arg3: memref<1x128xf32, #tpu.memory_space<vmem>>, %arg4: memref<128x128xf32, #tpu.memory_space<vmem>>, %arg5: memref<1x128xf32, #tpu.memory_space<vmem>>, %arg6: memref<1024x128xf32, #tpu.memory_space<vmem>>, %arg7: memref<1x128xf32, #tpu.memory_space<vmem>>, %arg8: memref<128x128xf32, #tpu.memory_space<vmem>>, %arg9: memref<1x128xf32, #tpu.memory_space<vmem>>, %arg10: memref<128x128xf32, #tpu.memory_space<any>>, %arg11: memref<1x1xf32, #tpu.memory_space<smem>>, %arg12: memref<1024x128xf32, #tpu.memory_space<vmem>>, %arg13: memref<1x128xf32, #tpu.memory_space<vmem>>, %arg14: memref<128x128xf32, #tpu.memory_space<vmem>>, %arg15: memref<1x128xf32, #tpu.memory_space<vmem>>, %arg16: memref<128x128xf32, #tpu.memory_space<any>>, %arg17: memref<1xi32, #tpu.memory_space<smem>>, %arg18: memref<128x128xf32, #tpu.memory_space<vmem>>, %arg19: memref<8x128xf32, #tpu.memory_space<vmem>>, %arg20: memref<2x!tpu.dma_semaphore, #tpu.memory_space<semaphore_mem>>) attributes {dimension_semantics = [], scalar_prefetch = 0 : i64, scratch_operands = 3 : i64, tpu.core_type = #tpu.core_type<tc>} {
    %c0_i32 = arith.constant 0 : i32
    %0 = tpu.memref_slice %arg20[%c0_i32] : memref<2x!tpu.dma_semaphore, #tpu.memory_space<semaphore_mem>> -> memref<1x!tpu.dma_semaphore, #tpu.memory_space<semaphore_mem>>
    %1 = tpu.memref_squeeze %0 : memref<1x!tpu.dma_semaphore, #tpu.memory_space<semaphore_mem>> -> memref<!tpu.dma_semaphore, #tpu.memory_space<semaphore_mem>>
    tpu.enqueue_dma source(%arg10 : memref<128x128xf32, #tpu.memory_space<any>>) target(%arg18 : memref<128x128xf32, #tpu.memory_space<vmem>>) target_semaphore(%1 : memref<!tpu.dma_semaphore, #tpu.memory_space<semaphore_mem>>)
    %c0 = arith.constant 0 : index
    %2 = memref.load %arg0[%c0] : memref<1xi32, #tpu.memory_space<smem>>
    %c0_0 = arith.constant 0 : index
    %c0_1 = arith.constant 0 : index
    %3 = vector.load %arg6[%c0_0, %c0_1] : memref<1024x128xf32, #tpu.memory_space<vmem>>, vector<1024x128xf32>
    %c0_2 = arith.constant 0 : index
    %c0_3 = arith.constant 0 : index
    %4 = vector.load %arg2[%c0_2, %c0_3] : memref<1024x128xf32, #tpu.memory_space<vmem>>, vector<1024x128xf32>
    %c0_4 = arith.constant 0 : index
    %c0_5 = arith.constant 0 : index
    %5 = vector.load %arg6[%c0_4, %c0_5] : memref<1024x128xf32, #tpu.memory_space<vmem>>, vector<1024x128xf32>
    %6 = arith.subf %4, %5 : vector<1024x128xf32>
    %cst = arith.constant 0.00999999977 : f32
    %7 = vector.broadcast %cst : f32 to vector<1024x128xf32>
    %8 = arith.mulf %6, %7 : vector<1024x128xf32>
    %9 = arith.addf %3, %8 : vector<1024x128xf32>
    %c0_6 = arith.constant 0 : index
    %c0_7 = arith.constant 0 : index
    %10 = vector.load %arg12[%c0_6, %c0_7] : memref<1024x128xf32, #tpu.memory_space<vmem>>, vector<1024x128xf32>
    tpu.vector_store %arg12[%c0_6, %c0_7], %9 {strides = array<i32>} : memref<1024x128xf32, #tpu.memory_space<vmem>>, vector<1024x128xf32>,
    %c0_8 = arith.constant 0 : index
    %c0_9 = arith.constant 0 : index
    %11 = vector.load %arg7[%c0_8, %c0_9] : memref<1x128xf32, #tpu.memory_space<vmem>>, vector<1x128xf32>
    %c0_10 = arith.constant 0 : index
    %c0_11 = arith.constant 0 : index
    %12 = vector.load %arg3[%c0_10, %c0_11] : memref<1x128xf32, #tpu.memory_space<vmem>>, vector<1x128xf32>
    %c0_12 = arith.constant 0 : index
    %c0_13 = arith.constant 0 : index
    %13 = vector.load %arg7[%c0_12, %c0_13] : memref<1x128xf32, #tpu.memory_space<vmem>>, vector<1x128xf32>
    %14 = arith.subf %12, %13 : vector<1x128xf32>
    %cst_14 = arith.constant 0.00999999977 : f32
    %15 = vector.broadcast %cst_14 : f32 to vector<1x128xf32>
    %16 = arith.mulf %14, %15 : vector<1x128xf32>
    %17 = arith.addf %11, %16 : vector<1x128xf32>
    %c0_15 = arith.constant 0 : index
    %c0_16 = arith.constant 0 : index
    %18 = vector.load %arg13[%c0_15, %c0_16] : memref<1x128xf32, #tpu.memory_space<vmem>>, vector<1x128xf32>
    tpu.vector_store %arg13[%c0_15, %c0_16], %17 {strides = array<i32>} : memref<1x128xf32, #tpu.memory_space<vmem>>, vector<1x128xf32>,
    %c0_17 = arith.constant 0 : index
    %c0_18 = arith.constant 0 : index
    %19 = vector.load %arg8[%c0_17, %c0_18] : memref<128x128xf32, #tpu.memory_space<vmem>>, vector<128x128xf32>
    %c0_19 = arith.constant 0 : index
    %c0_20 = arith.constant 0 : index
    %20 = vector.load %arg4[%c0_19, %c0_20] : memref<128x128xf32, #tpu.memory_space<vmem>>, vector<128x128xf32>
    %c0_21 = arith.constant 0 : index
    %c0_22 = arith.constant 0 : index
    %21 = vector.load %arg8[%c0_21, %c0_22] : memref<128x128xf32, #tpu.memory_space<vmem>>, vector<128x128xf32>
    %22 = arith.subf %20, %21 : vector<128x128xf32>
    %cst_23 = arith.constant 0.00999999977 : f32
    %23 = vector.broadcast %cst_23 : f32 to vector<128x128xf32>
    %24 = arith.mulf %22, %23 : vector<128x128xf32>
    %25 = arith.addf %19, %24 : vector<128x128xf32>
    %c0_24 = arith.constant 0 : index
    %c0_25 = arith.constant 0 : index
    %26 = vector.load %arg14[%c0_24, %c0_25] : memref<128x128xf32, #tpu.memory_space<vmem>>, vector<128x128xf32>
    tpu.vector_store %arg14[%c0_24, %c0_25], %25 {strides = array<i32>} : memref<128x128xf32, #tpu.memory_space<vmem>>, vector<128x128xf32>,
    %c0_26 = arith.constant 0 : index
    %c0_27 = arith.constant 0 : index
    %27 = vector.load %arg9[%c0_26, %c0_27] : memref<1x128xf32, #tpu.memory_space<vmem>>, vector<1x128xf32>
    %c0_28 = arith.constant 0 : index
    %c0_29 = arith.constant 0 : index
    %28 = vector.load %arg5[%c0_28, %c0_29] : memref<1x128xf32, #tpu.memory_space<vmem>>, vector<1x128xf32>
    %c0_30 = arith.constant 0 : index
    %c0_31 = arith.constant 0 : index
    %29 = vector.load %arg9[%c0_30, %c0_31] : memref<1x128xf32, #tpu.memory_space<vmem>>, vector<1x128xf32>
    %30 = arith.subf %28, %29 : vector<1x128xf32>
    %cst_32 = arith.constant 0.00999999977 : f32
    %31 = vector.broadcast %cst_32 : f32 to vector<1x128xf32>
    %32 = arith.mulf %30, %31 : vector<1x128xf32>
    %33 = arith.addf %27, %32 : vector<1x128xf32>
    %c0_33 = arith.constant 0 : index
    %c0_34 = arith.constant 0 : index
    %34 = vector.load %arg15[%c0_33, %c0_34] : memref<1x128xf32, #tpu.memory_space<vmem>>, vector<1x128xf32>
    tpu.vector_store %arg15[%c0_33, %c0_34], %33 {strides = array<i32>} : memref<1x128xf32, #tpu.memory_space<vmem>>, vector<1x128xf32>,
    %c0_35 = arith.constant 0 : index
    %c0_36 = arith.constant 0 : index
    %35 = vector.load %arg1[%c0_35, %c0_36] : memref<8x1024xf32, #tpu.memory_space<vmem>>, vector<8x1024xf32>
    %36 = arith.truncf %35 : vector<8x1024xf32> to vector<8x1024xbf16>
    %c0_37 = arith.constant 0 : index
    %c0_38 = arith.constant 0 : index
    %37 = vector.load %arg2[%c0_37, %c0_38] : memref<1024x128xf32, #tpu.memory_space<vmem>>, vector<1024x128xf32>
    %38 = arith.truncf %37 : vector<1024x128xf32> to vector<1024x128xbf16>
    %c0_39 = arith.constant 0 : index
    %c0_40 = arith.constant 0 : index
    %39 = vector.load %arg12[%c0_39, %c0_40] : memref<1024x128xf32, #tpu.memory_space<vmem>>, vector<1024x128xf32>
    %40 = arith.truncf %39 : vector<1024x128xf32> to vector<1024x128xbf16>
    %41 = tpu.concatenate %38, %40 in 1 : vector<1024x128xbf16>, vector<1024x128xbf16> -> vector<1024x256xbf16>
    %cst_41 = arith.constant dense<0.000000e+00> : vector<8x256xf32>
    %42 = tpu.matmul %36, %41, %cst_41 {dimension_numbers = #tpu.dot_dimension_numbers<[1], [0], [0], [1], [0, 0, 1, 1], [], []>} : vector<8x1024xbf16>, vector<1024x256xbf16>, vector<8x256xf32> -> vector<8x256xf32>
    %43 = vector.extract_strided_slice %42 {offsets = [0, 0], sizes = [8, 128], strides = [1, 1]} : vector<8x256xf32> to vector<8x128xf32>
    %c0_42 = arith.constant 0 : index
    %c0_43 = arith.constant 0 : index
    %44 = vector.load %arg3[%c0_42, %c0_43] : memref<1x128xf32, #tpu.memory_space<vmem>>, vector<1x128xf32>
    %45 = vector.broadcast %44 : vector<1x128xf32> to vector<8x128xf32>
    %46 = arith.addf %43, %45 : vector<8x128xf32>
    %cst_44 = arith.constant 0.000000e+00 : f32
    %47 = vector.broadcast %cst_44 : f32 to vector<8x128xf32>
    %48 = arith.maximumf %46, %47 : vector<8x128xf32>
    %49 = vector.extract_strided_slice %42 {offsets = [0, 128], sizes = [8, 128], strides = [1, 1]} : vector<8x256xf32> to vector<8x128xf32>
    %c0_45 = arith.constant 0 : index
    %c0_46 = arith.constant 0 : index
    %50 = vector.load %arg13[%c0_45, %c0_46] : memref<1x128xf32, #tpu.memory_space<vmem>>, vector<1x128xf32>
    %51 = vector.broadcast %50 : vector<1x128xf32> to vector<8x128xf32>
    %52 = arith.addf %49, %51 : vector<8x128xf32>
    %cst_47 = arith.constant 0.000000e+00 : f32
    %53 = vector.broadcast %cst_47 : f32 to vector<8x128xf32>
    %54 = arith.maximumf %52, %53 : vector<8x128xf32>
    %c0_48 = arith.constant 0 : index
    %c0_49 = arith.constant 0 : index
    %55 = vector.load %arg4[%c0_48, %c0_49] : memref<128x128xf32, #tpu.memory_space<vmem>>, vector<128x128xf32>
    %c0_50 = arith.constant 0 : index
    %c0_51 = arith.constant 0 : index
    %56 = vector.load %arg5[%c0_50, %c0_51] : memref<1x128xf32, #tpu.memory_space<vmem>>, vector<1x128xf32>
    %57 = arith.truncf %48 : vector<8x128xf32> to vector<8x128xbf16>
    %58 = arith.truncf %55 : vector<128x128xf32> to vector<128x128xbf16>
    %cst_52 = arith.constant dense<0.000000e+00> : vector<8x128xf32>
    %59 = tpu.matmul %57, %58, %cst_52 {dimension_numbers = #tpu.dot_dimension_numbers<[1], [0], [0], [1], [0, 0, 1, 1], [], []>} : vector<8x128xbf16>, vector<128x128xbf16>, vector<8x128xf32> -> vector<8x128xf32>
    %60 = vector.broadcast %56 : vector<1x128xf32> to vector<8x128xf32>
    %61 = arith.addf %59, %60 : vector<8x128xf32>
    %62 = arith.mulf %61, %61 : vector<8x128xf32>
    %cst_53 = arith.constant dense<0.000000e+00> : vector<8xf32>
    %63 = vector.multi_reduction <add>, %62, %cst_53 [1] : vector<8x128xf32> to vector<8xf32>
    %64 = vector.shape_cast %63 : vector<8xf32> to vector<8x1xf32>
    %cst_54 = arith.constant 1.000000e-24 : f32
    %65 = vector.broadcast %cst_54 : f32 to vector<8x1xf32>
    %66 = arith.maximumf %64, %65 : vector<8x1xf32>
    %67 = math.rsqrt %66 : vector<8x1xf32>
    %68 = vector.broadcast %67 : vector<8x1xf32> to vector<8x128xf32>
    %69 = arith.mulf %61, %68 : vector<8x128xf32>
    %c0_55 = arith.constant 0 : index
    %c0_56 = arith.constant 0 : index
    %70 = vector.load %arg14[%c0_55, %c0_56] : memref<128x128xf32, #tpu.memory_space<vmem>>, vector<128x128xf32>
    %c0_57 = arith.constant 0 : index
    %c0_58 = arith.constant 0 : index
    %71 = vector.load %arg15[%c0_57, %c0_58] : memref<1x128xf32, #tpu.memory_space<vmem>>, vector<1x128xf32>
    %72 = arith.truncf %54 : vector<8x128xf32> to vector<8x128xbf16>
    %73 = arith.truncf %70 : vector<128x128xf32> to vector<128x128xbf16>
    %cst_59 = arith.constant dense<0.000000e+00> : vector<8x128xf32>
    %74 = tpu.matmul %72, %73, %cst_59 {dimension_numbers = #tpu.dot_dimension_numbers<[1], [0], [0], [1], [0, 0, 1, 1], [], []>} : vector<8x128xbf16>, vector<128x128xbf16>, vector<8x128xf32> -> vector<8x128xf32>
    %75 = vector.broadcast %71 : vector<1x128xf32> to vector<8x128xf32>
    %76 = arith.addf %74, %75 : vector<8x128xf32>
    %77 = arith.mulf %76, %76 : vector<8x128xf32>
    %cst_60 = arith.constant dense<0.000000e+00> : vector<8xf32>
    %78 = vector.multi_reduction <add>, %77, %cst_60 [1] : vector<8x128xf32> to vector<8xf32>
    %79 = vector.shape_cast %78 : vector<8xf32> to vector<8x1xf32>
    %cst_61 = arith.constant 1.000000e-24 : f32
    %80 = vector.broadcast %cst_61 : f32 to vector<8x1xf32>
    %81 = arith.maximumf %79, %80 : vector<8x1xf32>
    %82 = math.rsqrt %81 : vector<8x1xf32>
    %83 = vector.broadcast %82 : vector<8x1xf32> to vector<8x128xf32>
    %84 = arith.mulf %76, %83 : vector<8x128xf32>
    %c0_62 = arith.constant 0 : index
    %c0_63 = arith.constant 0 : index
    %85 = vector.load %arg19[%c0_62, %c0_63] : memref<8x128xf32, #tpu.memory_space<vmem>>, vector<8x128xf32>
    tpu.vector_store %arg19[%c0_62, %c0_63], %84 {strides = array<i32>} : memref<8x128xf32, #tpu.memory_space<vmem>>, vector<8x128xf32>,
    %c0_i32_64 = arith.constant 0 : i32
    %86 = tpu.memref_slice %arg20[%c0_i32_64] : memref<2x!tpu.dma_semaphore, #tpu.memory_space<semaphore_mem>> -> memref<1x!tpu.dma_semaphore, #tpu.memory_space<semaphore_mem>>
    %87 = tpu.memref_squeeze %86 : memref<1x!tpu.dma_semaphore, #tpu.memory_space<semaphore_mem>> -> memref<!tpu.dma_semaphore, #tpu.memory_space<semaphore_mem>>
    tpu.wait_dma2 semaphore(%87 : memref<!tpu.dma_semaphore, #tpu.memory_space<semaphore_mem>>) src(%arg10 : memref<128x128xf32, #tpu.memory_space<any>>) dst(%arg18 : memref<128x128xf32, #tpu.memory_space<vmem>>)
    %88 = tpu.assume_multiple %2, 8 : i32
    %c1_i32 = arith.constant 1 : i32
    %c0_i32_65 = arith.constant 0 : i32
    %89 = tpu.memref_slice %arg16[%88, %c0_i32_65] : memref<128x128xf32, #tpu.memory_space<any>> -> memref<8x128xf32, #tpu.memory_space<any>>
    %90 = tpu.memref_slice %arg20[%c1_i32] : memref<2x!tpu.dma_semaphore, #tpu.memory_space<semaphore_mem>> -> memref<1x!tpu.dma_semaphore, #tpu.memory_space<semaphore_mem>>
    %91 = tpu.memref_squeeze %90 : memref<1x!tpu.dma_semaphore, #tpu.memory_space<semaphore_mem>> -> memref<!tpu.dma_semaphore, #tpu.memory_space<semaphore_mem>>
    tpu.enqueue_dma source(%arg19 : memref<8x128xf32, #tpu.memory_space<vmem>>) target(%89 : memref<8x128xf32, #tpu.memory_space<any>>) target_semaphore(%91 : memref<!tpu.dma_semaphore, #tpu.memory_space<semaphore_mem>>)
    %c4_i32 = arith.constant 4 : i32
    %92 = tpu.dynamic_rotate %84 by %c4_i32 dim 0 : vector<8x128xf32>, i32 -> vector<8x128xf32>
    %93 = arith.mulf %69, %92 : vector<8x128xf32>
    %cst_66 = arith.constant dense<0.000000e+00> : vector<8xf32>
    %94 = vector.multi_reduction <add>, %93, %cst_66 [1] : vector<8x128xf32> to vector<8xf32>
    %95 = vector.shape_cast %94 : vector<8xf32> to vector<8x1xf32>
    %96 = arith.truncf %69 : vector<8x128xf32> to vector<8x128xbf16>
    %c0_67 = arith.constant 0 : index
    %c0_68 = arith.constant 0 : index
    %97 = vector.load %arg18[%c0_67, %c0_68] : memref<128x128xf32, #tpu.memory_space<vmem>>, vector<128x128xf32>
    %98 = arith.truncf %97 : vector<128x128xf32> to vector<128x128xbf16>
    %cst_69 = arith.constant dense<0.000000e+00> : vector<8x128xf32>
    %99 = tpu.matmul %96, %98, %cst_69 {dimension_numbers = #tpu.dot_dimension_numbers<[1], [1], [0], [0], [0, 0, 1, 0], [], []>} : vector<8x128xbf16>, vector<128x128xbf16>, vector<8x128xf32> -> vector<8x128xf32>
    %cst_70 = arith.constant 1.000000e+01 : f32
    %100 = vector.broadcast %cst_70 : f32 to vector<8x1xf32>
    %101 = arith.mulf %95, %100 : vector<8x1xf32>
    %cst_71 = arith.constant 1.000000e+01 : f32
    %102 = vector.broadcast %cst_71 : f32 to vector<8x128xf32>
    %103 = arith.mulf %99, %102 : vector<8x128xf32>
    %cst_72 = arith.constant dense<0xFF800000> : vector<8xf32>
    %104 = vector.multi_reduction <maximumf>, %103, %cst_72 [1] : vector<8x128xf32> to vector<8xf32>
    %105 = vector.shape_cast %104 : vector<8xf32> to vector<8x1xf32>
    %106 = arith.maximumf %105, %101 : vector<8x1xf32>
    %107 = arith.subf %101, %106 : vector<8x1xf32>
    %108 = math.exp %107 : vector<8x1xf32>
    %109 = vector.broadcast %106 : vector<8x1xf32> to vector<8x128xf32>
    %110 = arith.subf %103, %109 : vector<8x128xf32>
    %111 = math.exp %110 : vector<8x128xf32>
    %cst_73 = arith.constant dense<0.000000e+00> : vector<8xf32>
    %112 = vector.multi_reduction <add>, %111, %cst_73 [1] : vector<8x128xf32> to vector<8xf32>
    %113 = vector.shape_cast %112 : vector<8xf32> to vector<8x1xf32>
    %114 = arith.addf %108, %113 : vector<8x1xf32>
    %115 = math.log %114 : vector<8x1xf32>
    %116 = arith.addf %115, %106 : vector<8x1xf32>
    %117 = arith.subf %116, %101 : vector<8x1xf32>
    %118 = vector.shape_cast %117 : vector<8x1xf32> to vector<1x8x1xf32>
    %cst_74 = arith.constant dense<0.000000e+00> : vector<1xf32>
    %119 = vector.multi_reduction <add>, %118, %cst_74 [1, 2] : vector<1x8x1xf32> to vector<1xf32>
    %120 = vector.shape_cast %119 : vector<1xf32> to vector<1x1x1xf32>
    %121 = vector.extract %120[0, 0, 0] : f32 from vector<1x1x1xf32>
    %cst_75 = arith.constant 2.500000e-01 : f32
    %122 = arith.mulf %121, %cst_75 : f32
    %c0_76 = arith.constant 0 : index
    %c0_77 = arith.constant 0 : index
    %123 = memref.load %arg11[%c0_76, %c0_77] : memref<1x1xf32, #tpu.memory_space<smem>>
    memref.store %122, %arg11[%c0_76, %c0_77] : memref<1x1xf32, #tpu.memory_space<smem>>
    %c8_i32 = arith.constant 8 : i32
    %124 = arith.addi %2, %c8_i32 : i32
    %c128_i32 = arith.constant 128 : i32
    %c0_i32_78 = arith.constant 0 : i32
    %125 = arith.cmpi eq, %c128_i32, %c0_i32_78 : i32
    %c1_i32_79 = arith.constant 1 : i32
    %126 = arith.select %125, %c1_i32_79, %c128_i32 : i32
    %127 = arith.remsi %124, %126 : i32
    %c0_i32_80 = arith.constant 0 : i32
    %128 = arith.cmpi ne, %127, %c0_i32_80 : i32
    %c0_i32_81 = arith.constant 0 : i32
    %129 = arith.cmpi slt, %127, %c0_i32_81 : i32
    %c0_i32_82 = arith.constant 0 : i32
    %130 = arith.cmpi slt, %126, %c0_i32_82 : i32
    %131 = arith.xori %129, %130 : i1
    %132 = arith.andi %131, %128 : i1
    %133 = arith.addi %127, %126 : i32
    %134 = arith.select %132, %133, %127 : i32
    %c0_83 = arith.constant 0 : index
    %135 = memref.load %arg17[%c0_83] : memref<1xi32, #tpu.memory_space<smem>>
    memref.store %134, %arg17[%c0_83] : memref<1xi32, #tpu.memory_space<smem>>
    %c1_i32_84 = arith.constant 1 : i32
    %c0_i32_85 = arith.constant 0 : i32
    %136 = tpu.memref_slice %arg16[%88, %c0_i32_85] : memref<128x128xf32, #tpu.memory_space<any>> -> memref<8x128xf32, #tpu.memory_space<any>>
    %137 = tpu.memref_slice %arg20[%c1_i32_84] : memref<2x!tpu.dma_semaphore, #tpu.memory_space<semaphore_mem>> -> memref<1x!tpu.dma_semaphore, #tpu.memory_space<semaphore_mem>>
    %138 = tpu.memref_squeeze %137 : memref<1x!tpu.dma_semaphore, #tpu.memory_space<semaphore_mem>> -> memref<!tpu.dma_semaphore, #tpu.memory_space<semaphore_mem>>
    tpu.wait_dma2 semaphore(%138 : memref<!tpu.dma_semaphore, #tpu.memory_space<semaphore_mem>>) src(%arg19 : memref<8x128xf32, #tpu.memory_space<vmem>>) dst(%136 : memref<8x128xf32, #tpu.memory_space<any>>)
    return
  }
}

</mosaic_0001>

<llo_original>
// kernel: moco_forward.1
$region0: #{moco_forward.1}
  #allocation0 [shape = 'u32[]', space=smem, size = 0x4, offset = 0x4, fixed_abs, tag = 'smem constant byte address 0x4 - core index']
  #allocation1 [shape = 'u32[72,128]{1,0:T(1,128)}', space=vmem, size = 0x9000, scoped, tag = 'internal scratch']
  #allocation2 [shape = 'f32[128,128]{1,0:T(8,128)}', space=vmem, size = 0x10000, scoped, tag = 'scratch operand']
  #allocation3 [shape = 'f32[8,128]{1,0:T(8,128)}', space=vmem, size = 0x1000, scoped, tag = 'scratch operand']
  #allocation4 [shape = 's32[2]{0}', space=sflag, size = 0x8, scoped, tag = 'scratch operand']
  #allocation5 [shape = 's32[1]{0:T(128)S(6)}', space=smem, size = 0x200, scoped, tag = 'scoped memory for moco_forward.1']
  #allocation12 [shape = 's32[]', space=sflag, size = 0x4, offset = 0, fixed_abs, tag = 'sflag constant byte address 0x0 - dummy sync flag']
  #allocation13 [shape = 's32[]', space=sflag, size = 0x4, offset = 0, fixed_abs, tag = 'sflag constant byte address 0x0 - dummy sync flag']
  %s0 = inlined_call_operand.<no memory space> [shape: s32[1], index: 0, kind: input, shape index: {}]
  %s1 = inlined_call_operand.vmem [shape: f32[8,1024], index: 1, kind: input, shape index: {}]
  %s2 = inlined_call_operand.hbm [shape: f32[1024,128], index: 2, kind: input, shape index: {}]
  %s3 = inlined_call_operand.vmem [shape: f32[1,128], index: 3, kind: input, shape index: {}]
  %s4 = inlined_call_operand.vmem [shape: f32[128,128], index: 4, kind: input, shape index: {}]
  %s5 = inlined_call_operand.vmem [shape: f32[1,128], index: 5, kind: input, shape index: {}]
  %s6 = inlined_call_operand.vmem [shape: f32[1024,128], index: 6, kind: input, shape index: {}, may-alias: {6,12}]
  %s7 = inlined_call_operand.vmem [shape: f32[1,128], index: 7, kind: input, shape index: {}, may-alias: {7,13}]
  %s8 = inlined_call_operand.vmem [shape: f32[128,128], index: 8, kind: input, shape index: {}, may-alias: {8,14}]
  %s9 = inlined_call_operand.vmem [shape: f32[1,128], index: 9, kind: input, shape index: {}, may-alias: {9,15}]
  %s10 = inlined_call_operand.vmem [shape: f32[128,128], index: 10, kind: input, shape index: {}, may-alias: {10,16}]
  %s11 = inlined_call_operand.hbm [shape: f32[1,1], index: 11, kind: output, shape index: {0}]
  %s12 = inlined_call_operand.vmem [shape: f32[1024,128], index: 12, kind: output, shape index: {1}, may-alias: {6,12}]
  %s13 = inlined_call_operand.vmem [shape: f32[1,128], index: 13, kind: output, shape index: {2}, may-alias: {7,13}]
  %s14 = inlined_call_operand.vmem [shape: f32[128,128], index: 14, kind: output, shape index: {3}, may-alias: {8,14}]
  %s15 = inlined_call_operand.vmem [shape: f32[1,128], index: 15, kind: output, shape index: {4}, may-alias: {9,15}]
  %s16 = inlined_call_operand.vmem [shape: f32[128,128], index: 16, kind: output, shape index: {5}, may-alias: {10,16}]
  %s17 = inlined_call_operand.hbm [shape: s32[1], index: 17, kind: output, shape index: {6}]
  %18 = xla_tuple %s11, %s12, %s13, %s14, %s15, %s16, %s17
  %s19 = sld [smem:[#allocation0]]
  $region147: #{moco_forward.1} parent=0
    _
  %s21 = ssub.s32 1, %s19
  %s22 = scalar_select 0, %s21, %s19
  %23 = sst [smem:[#allocation5]] %s0
  $region1: #{moco_forward.1} parent=0
    #allocation6 [shape = 'u8[524288]{0}', space=vmem, size = 0x80000, scoped, tag = 'input window, operand 2, single buffered']
    #allocation7 [shape = 's32[1]{0}', space=sflag, size = 0x4, scoped, tag = 'scoped memory for moco_forward.1']
    #allocation8 [shape = 's32[1]{0}', space=sflag, size = 0x4, scoped, tag = 'scoped memory for moco_forward.1']
    #allocation9 [shape = 'u8[512]{0}', space=smem, size = 0x200, scoped, tag = 'output window, operand 0, single buffered']
    #allocation10 [shape = 'u8[512]{0}', space=smem, size = 0x200, scoped, tag = 'output window, operand 6, single buffered']
    #allocation11 [shape = 's32[1]{0}', space=sflag, size = 0x4, scoped, tag = 'scoped memory for moco_forward.1']
    %24 = vsyncpa [#allocation7], 0
    %25 = vsyncpa [#allocation8], 0
    %26 = vsyncpa [#allocation11], 0
    // Predicated region
    $region2: #{moco_forward.1} parent=1 // pred_check
      _
    $region3: #{moco_forward.1} parent=1 // pred_check_branch
      %28 = sbr.rel (0) target = $region5
    $region4: #{moco_forward.1} parent=1 // pred_region
      _
    $region5: #{moco_forward.1} parent=1 // pred_fallthru
      _
    // Predicated region
    $region6: #{moco_forward.1} parent=1 // pred_check
      _
    $region7: #{moco_forward.1} parent=1 // pred_check_branch
      %30 = sbr.rel (0) target = $region9
    $region8: #{moco_forward.1} parent=1 // pred_region
      _
    $region9: #{moco_forward.1} parent=1 // pred_fallthru
      _
    // Predicated region
    $region10: #{moco_forward.1} parent=1 // pred_check
      _
    $region11: #{moco_forward.1} parent=1 // pred_check_branch
      %32 = sbr.rel (0) target = $region13
    $region12: #{moco_forward.1} parent=1 // pred_region
      %34 = vsyncadd [#allocation7], 0
      %s35 = sshll.u32 %s2, 4
      %s36 = int_to_ptr.hbm [resolvable:$true] %s35
      %s37 = sshll.u32 [#allocation6], 4
      %s38 = int_to_ptr.vmem [resolvable:$true] %s37
      %43 = dma.hbm_to_vmem [thread:$0]  %s36, 16384, %s38, [#allocation7], 128, 128, 8
    $region13: #{moco_forward.1} parent=1 // pred_fallthru
      _
    // Predicated region
    $region14: #{moco_forward.1} parent=1 // pred_check
      _
    $region15: #{moco_forward.1} parent=1 // pred_check_branch
      %45 = sbr.rel (0) target = $region17
    $region16: #{moco_forward.1} parent=1 // pred_region
      _
    $region17: #{moco_forward.1} parent=1 // pred_fallthru
      _
    // Predicated region
    $region18: #{moco_forward.1} parent=1 // pred_check
      _
    $region19: #{moco_forward.1} parent=1 // pred_check_branch
      %47 = sbr.rel (0) target = $region21
    $region20: #{moco_forward.1} parent=1 // pred_region
      _
    $region21: #{moco_forward.1} parent=1 // pred_fallthru
      _
    // Predicated region
    $region22: #{moco_forward.1} parent=1 // pred_check
      _
    $region23: #{moco_forward.1} parent=1 // pred_check_branch
      %49 = sbr.rel (0) target = $region25
    $region24: #{moco_forward.1} parent=1 // pred_region
      _
    $region25: #{moco_forward.1} parent=1 // pred_fallthru
      _
    // Predicated region
    $region26: #{moco_forward.1} parent=1 // pred_check
      _
    $region27: #{moco_forward.1} parent=1 // pred_check_branch
      %51 = sbr.rel (0) target = $region29
    $region28: #{moco_forward.1} parent=1 // pred_region
      _
    $region29: #{moco_forward.1} parent=1 // pred_fallthru
      _
    // Predicated region
    $region30: #{moco_forward.1} parent=1 // pred_check
      _
    $region31: #{moco_forward.1} parent=1 // pred_check_branch
      %53 = sbr.rel (0) target = $region33
    $region32: #{moco_forward.1} parent=1 // pred_region
      _
    $region33: #{moco_forward.1} parent=1 // pred_fallthru
      _
    // Predicated region
    $region34: #{moco_forward.1} parent=1 // pred_check
      _
    $region35: #{moco_forward.1} parent=1 // pred_check_branch
      %55 = sbr.rel (0) target = $region37
    $region36: #{moco_forward.1} parent=1 // pred_region
      _
    $region37: #{moco_forward.1} parent=1 // pred_fallthru
      _
    // Predicated region
    $region38: #{moco_forward.1} parent=1 // pred_check
      _
    $region39: #{moco_forward.1} parent=1 // pred_check_branch
      %57 = sbr.rel (0) target = $region41
    $region40: #{moco_forward.1} parent=1 // pred_region
      _
    $region41: #{moco_forward.1} parent=1 // pred_fallthru
      _
    // Predicated region
    $region42: #{moco_forward.1} parent=1 // pred_check
      _
    $region43: #{moco_forward.1} parent=1 // pred_check_branch
      %59 = sbr.rel (0) target = $region45
    $region44: #{moco_forward.1} parent=1 // pred_region
      %61 = dma.done [#allocation7], 16384
    $region45: #{moco_forward.1} parent=1 // pred_fallthru
      _
    // Predicated region
    $region46: #{moco_forward.1} parent=1 // pred_check
      _
    $region47: #{moco_forward.1} parent=1 // pred_check_branch
      %63 = sbr.rel (0) target = $region49
    $region48: #{moco_forward.1} parent=1 // pred_region
      loop: start=0, step=1, limit=1
      $region50: #{moco_forward.1} parent=48 // loop_pre_header
        _
      $region51: #{moco_forward.1} parent=48 // loop_header
        %s65 = sphi 0, %s69
        %p66 = scmp.ge.s32.totalorder %s65, 1
        %s70 = sphi %s10, %s10
        %s71 = sphi [#allocation2], [#allocation2]
      $region52: #{moco_forward.1} parent=48 // loop_header_branch
        %68 = sbr.rel (%p66) target = $region56
      $region53: #{moco_forward.1} parent=48 // loop_body
        %v72 = vld [vmem:[%s70] sm:$0xff]
        %73 = vst [vmem:[%s71] sm:$0xff] %v72
        %v74 = vld [vmem:[%s70 + $0x8] sm:$0xff]
        %75 = vst [vmem:[%s71 + $0x8] sm:$0xff] %v74
        %v76 = vld [vmem:[%s70 + $0x10] sm:$0xff]
        %77 = vst [vmem:[%s71 + $0x10] sm:$0xff] %v76
        %v78 = vld [vmem:[%s70 + $0x18] sm:$0xff]
        %79 = vst [vmem:[%s71 + $0x18] sm:$0xff] %v78
        %v80 = vld [vmem:[%s70 + $0x20] sm:$0xff]
        %81 = vst [vmem:[%s71 + $0x20] sm:$0xff] %v80
        %v82 = vld [vmem:[%s70 + $0x28] sm:$0xff]
        %83 = vst [vmem:[%s71 + $0x28] sm:$0xff] %v82
        %v84 = vld [vmem:[%s70 + $0x30] sm:$0xff]
        %85 = vst [vmem:[%s71 + $0x30] sm:$0xff] %v84
        %v86 = vld [vmem:[%s70 + $0x38] sm:$0xff]
        %87 = vst [vmem:[%s71 + $0x38] sm:$0xff] %v86
        %v88 = vld [vmem:[%s70 + $0x40] sm:$0xff]
        %89 = vst [vmem:[%s71 + $0x40] sm:$0xff] %v88
        %v90 = vld [vmem:[%s70 + $0x48] sm:$0xff]
        %91 = vst [vmem:[%s71 + $0x48] sm:$0xff] %v90
        %v92 = vld [vmem:[%s70 + $0x50] sm:$0xff]
        %93 = vst [vmem:[%s71 + $0x50] sm:$0xff] %v92
        %v94 = vld [vmem:[%s70 + $0x58] sm:$0xff]
        %95 = vst [vmem:[%s71 + $0x58] sm:$0xff] %v94
        %v96 = vld [vmem:[%s70 + $0x60] sm:$0xff]
        %97 = vst [vmem:[%s71 + $0x60] sm:$0xff] %v96
        %v98 = vld [vmem:[%s70 + $0x68] sm:$0xff]
        %99 = vst [vmem:[%s71 + $0x68] sm:$0xff] %v98
        %v100 = vld [vmem:[%s70 + $0x70] sm:$0xff]
        %101 = vst [vmem:[%s71 + $0x70] sm:$0xff] %v100
        %v102 = vld [vmem:[%s70 + $0x78] sm:$0xff]
        %103 = vst [vmem:[%s71 + $0x78] sm:$0xff] %v102
      $region54: #{moco_forward.1} parent=48 // loop_footer
        %s69 = sadd.s32 1, %s65
      $region55: #{moco_forward.1} parent=48 // loop_footer_branch
        %64 = sbr.rel target = $region51
      $region56: #{moco_forward.1} parent=48 // loop_exit
        _
    $region49: #{moco_forward.1} parent=1 // pred_fallthru
      _
    // Predicated region
    $region57: #{moco_forward.1} parent=1 // pred_check
      _
    $region58: #{moco_forward.1} parent=1 // pred_check_branch
      %105 = sbr.rel target = $region60
    $region59: #{moco_forward.1} parent=1 // pred_region
      _
    $region60: #{moco_forward.1} parent=1 // pred_fallthru
      _
    // Predicated region
    $region61: #{moco_forward.1} parent=1 // pred_check
      _
    $region62: #{moco_forward.1} parent=1 // pred_check_branch
      %108 = sbr.rel (0) target = $region64
    $region63: #{moco_forward.1} parent=1 // pred_region
      %109 = vsyncadd [#allocation4], 2048
    $region64: #{moco_forward.1} parent=1 // pred_fallthru
      _
    %s110 = sld [smem:[#allocation5]]
    %v111 = vld [vmem:[%s6] sm:$0xff]
    %v112 = vld [vmem:[%s6 + $0x8] sm:$0xff]
    %v113 = vld [vmem:[%s6 + $0x10] sm:$0xff]
    %v114 = vld [vmem:[%s6 + $0x18] sm:$0xff]
    %v115 = vld [vmem:[%s6 + $0x20] sm:$0xff]
    %v116 = vld [vmem:[%s6 + $0x28] sm:$0xff]
    %v117 = vld [vmem:[%s6 + $0x30] sm:$0xff]
    %v118 = vld [vmem:[%s6 + $0x38] sm:$0xff]
    %v119 = vld [vmem:[%s6 + $0x40] sm:$0xff]
    %v120 = vld [vmem:[%s6 + $0x48] sm:$0xff]
    %v121 = vld [vmem:[%s6 + $0x50] sm:$0xff]
    %v122 = vld [vmem:[%s6 + $0x58] sm:$0xff]
    %v123 = vld [vmem:[%s6 + $0x60] sm:$0xff]
    %v124 = vld [vmem:[%s6 + $0x68] sm:$0xff]
    %v125 = vld [vmem:[%s6 + $0x70] sm:$0xff]
    %v126 = vld [vmem:[%s6 + $0x78] sm:$0xff]
    %v127 = vld [vmem:[%s6 + $0x80] sm:$0xff]
    %v128 = vld [vmem:[%s6 + $0x88] sm:$0xff]
    %v129 = vld [vmem:[%s6 + $0x90] sm:$0xff]
    %v130 = vld [vmem:[%s6 + $0x98] sm:$0xff]
    %v131 = vld [vmem:[%s6 + $0xa0] sm:$0xff]
    %v132 = vld [vmem:[%s6 + $0xa8] sm:$0xff]
    %v133 = vld [vmem:[%s6 + $0xb0] sm:$0xff]
    %v134 = vld [vmem:[%s6 + $0xb8] sm:$0xff]
    %v135 = vld [vmem:[%s6 + $0xc0] sm:$0xff]
    %v136 = vld [vmem:[%s6 + $0xc8] sm:$0xff]
    %v137 = vld [vmem:[%s6 + $0xd0] sm:$0xff]
    %v138 = vld [vmem:[%s6 + $0xd8] sm:$0xff]
    %v139 = vld [vmem:[%s6 + $0xe0] sm:$0xff]
    %v140 = vld [vmem:[%s6 + $0xe8] sm:$0xff]
    %v141 = vld [vmem:[%s6 + $0xf0] sm:$0xff]
    %v142 = vld [vmem:[%s6 + $0xf8] sm:$0xff]
    %v143 = vld [vmem:[%s6 + $0x100] sm:$0xff]
    %v144 = vld [vmem:[%s6 + $0x108] sm:$0xff]
    %v145 = vld [vmem:[%s6 + $0x110] sm:$0xff]
    %v146 = vld [vmem:[%s6 + $0x118] sm:$0xff]
    %v147 = vld [vmem:[%s6 + $0x120] sm:$0xff]
    %v148 = vld [vmem:[%s6 + $0x128] sm:$0xff]
    %v149 = vld [vmem:[%s6 + $0x130] sm:$0xff]
    %v150 = vld [vmem:[%s6 + $0x138] sm:$0xff]
    %v151 = vld [vmem:[%s6 + $0x140] sm:$0xff]
    %v152 = vld [vmem:[%s6 + $0x148] sm:$0xff]
    %v153 = vld [vmem:[%s6 + $0x150] sm:$0xff]
    %v154 = vld [vmem:[%s6 + $0x158] sm:$0xff]
    %v155 = vld [vmem:[%s6 + $0x160] sm:$0xff]
    %v156 = vld [vmem:[%s6 + $0x168] sm:$0xff]
    %v157 = vld [vmem:[%s6 + $0x170] sm:$0xff]
    %v158 = vld [vmem:[%s6 + $0x178] sm:$0xff]
    %v159 = vld [vmem:[%s6 + $0x180] sm:$0xff]
    %v160 = vld [vmem:[%s6 + $0x188] sm:$0xff]
    %v161 = vld [vmem:[%s6 + $0x190] sm:$0xff]
    %v162 = vld [vmem:[%s6 + $0x198] sm:$0xff]
    %v163 = vld [vmem:[%s6 + $0x1a0] sm:$0xff]
    %v164 = vld [vmem:[%s6 + $0x1a8] sm:$0xff]
    %v165 = vld [vmem:[%s6 + $0x1b0] sm:$0xff]
    %v166 = vld [vmem:[%s6 + $0x1b8] sm:$0xff]
    %v167 = vld [vmem:[%s6 + $0x1c0] sm:$0xff]
    %v168 = vld [vmem:[%s6 + $0x1c8] sm:$0xff]
    %v169 = vld [vmem:[%s6 + $0x1d0] sm:$0xff]
    %v170 = vld [vmem:[%s6 + $0x1d8] sm:$0xff]
    %v171 = vld [vmem:[%s6 + $0x1e0] sm:$0xff]
    %v172 = vld [vmem:[%s6 + $0x1e8] sm:$0xff]
    %v173 = vld [vmem:[%s6 + $0x1f0] sm:$0xff]
    %v174 = vld [vmem:[%s6 + $0x1f8] sm:$0xff]
    %v175 = vld [vmem:[%s6 + $0x200] sm:$0xff]
    %v176 = vld [vmem:[%s6 + $0x208] sm:$0xff]
    %v177 = vld [vmem:[%s6 + $0x210] sm:$0xff]
    %v178 = vld [vmem:[%s6 + $0x218] sm:$0xff]
    %v179 = vld [vmem:[%s6 + $0x220] sm:$0xff]
    %v180 = vld [vmem:[%s6 + $0x228] sm:$0xff]
    %v181 = vld [vmem:[%s6 + $0x230] sm:$0xff]
    %v182 = vld [vmem:[%s6 + $0x238] sm:$0xff]
    %v183 = vld [vmem:[%s6 + $0x240] sm:$0xff]
    %v184 = vld [vmem:[%s6 + $0x248] sm:$0xff]
    %v185 = vld [vmem:[%s6 + $0x250] sm:$0xff]
    %v186 = vld [vmem:[%s6 + $0x258] sm:$0xff]
    %v187 = vld [vmem:[%s6 + $0x260] sm:$0xff]
    %v188 = vld [vmem:[%s6 + $0x268] sm:$0xff]
    %v189 = vld [vmem:[%s6 + $0x270] sm:$0xff]
    %v190 = vld [vmem:[%s6 + $0x278] sm:$0xff]
    %v191 = vld [vmem:[%s6 + $0x280] sm:$0xff]
    %v192 = vld [vmem:[%s6 + $0x288] sm:$0xff]
    %v193 = vld [vmem:[%s6 + $0x290] sm:$0xff]
    %v194 = vld [vmem:[%s6 + $0x298] sm:$0xff]
    %v195 = vld [vmem:[%s6 + $0x2a0] sm:$0xff]
    %v196 = vld [vmem:[%s6 + $0x2a8] sm:$0xff]
    %v197 = vld [vmem:[%s6 + $0x2b0] sm:$0xff]
    %v198 = vld [vmem:[%s6 + $0x2b8] sm:$0xff]
    %v199 = vld [vmem:[%s6 + $0x2c0] sm:$0xff]
    %v200 = vld [vmem:[%s6 + $0x2c8] sm:$0xff]
    %v201 = vld [vmem:[%s6 + $0x2d0] sm:$0xff]
    %v202 = vld [vmem:[%s6 + $0x2d8] sm:$0xff]
    %v203 = vld [vmem:[%s6 + $0x2e0] sm:$0xff]
    %v204 = vld [vmem:[%s6 + $0x2e8] sm:$0xff]
    %v205 = vld [vmem:[%s6 + $0x2f0] sm:$0xff]
    %v206 = vld [vmem:[%s6 + $0x2f8] sm:$0xff]
    %v207 = vld [vmem:[%s6 + $0x300] sm:$0xff]
    %v208 = vld [vmem:[%s6 + $0x308] sm:$0xff]
    %v209 = vld [vmem:[%s6 + $0x310] sm:$0xff]
    %v210 = vld [vmem:[%s6 + $0x318] sm:$0xff]
    %v211 = vld [vmem:[%s6 + $0x320] sm:$0xff]
    %v212 = vld [vmem:[%s6 + $0x328] sm:$0xff]
    %v213 = vld [vmem:[%s6 + $0x330] sm:$0xff]
    %v214 = vld [vmem:[%s6 + $0x338] sm:$0xff]
    %v215 = vld [vmem:[%s6 + $0x340] sm:$0xff]
    %v216 = vld [vmem:[%s6 + $0x348] sm:$0xff]
    %v217 = vld [vmem:[%s6 + $0x350] sm:$0xff]
    %v218 = vld [vmem:[%s6 + $0x358] sm:$0xff]
    %v219 = vld [vmem:[%s6 + $0x360] sm:$0xff]
    %v220 = vld [vmem:[%s6 + $0x368] sm:$0xff]
    %v221 = vld [vmem:[%s6 + $0x370] sm:$0xff]
    %v222 = vld [vmem:[%s6 + $0x378] sm:$0xff]
    %v223 = vld [vmem:[%s6 + $0x380] sm:$0xff]
    %v224 = vld [vmem:[%s6 + $0x388] sm:$0xff]
    %v225 = vld [vmem:[%s6 + $0x390] sm:$0xff]
    %v226 = vld [vmem:[%s6 + $0x398] sm:$0xff]
    %v227 = vld [vmem:[%s6 + $0x3a0] sm:$0xff]
    %v228 = vld [vmem:[%s6 + $0x3a8] sm:$0xff]
    %v229 = vld [vmem:[%s6 + $0x3b0] sm:$0xff]
    %v230 = vld [vmem:[%s6 + $0x3b8] sm:$0xff]
    %v231 = vld [vmem:[%s6 + $0x3c0] sm:$0xff]
    %v232 = vld [vmem:[%s6 + $0x3c8] sm:$0xff]
    %v233 = vld [vmem:[%s6 + $0x3d0] sm:$0xff]
    %v234 = vld [vmem:[%s6 + $0x3d8] sm:$0xff]
    %v235 = vld [vmem:[%s6 + $0x3e0] sm:$0xff]
    %v236 = vld [vmem:[%s6 + $0x3e8] sm:$0xff]
    %v237 = vld [vmem:[%s6 + $0x3f0] sm:$0xff]
    %v238 = vld [vmem:[%s6 + $0x3f8] sm:$0xff]
    %v239 = vld [vmem:[#allocation6] sm:$0xff]
    %v240 = vld [vmem:[#allocation6 + $0x8] sm:$0xff]
    %v241 = vld [vmem:[#allocation6 + $0x10] sm:$0xff]
    %v242 = vld [vmem:[#allocation6 + $0x18] sm:$0xff]
    %v243 = vld [vmem:[#allocation6 + $0x20] sm:$0xff]
    %v244 = vld [vmem:[#allocation6 + $0x28] sm:$0xff]
    %v245 = vld [vmem:[#allocation6 + $0x30] sm:$0xff]
    %v246 = vld [vmem:[#allocation6 + $0x38] sm:$0xff]
    %v247 = vld [vmem:[#allocation6 + $0x40] sm:$0xff]
    %v248 = vld [vmem:[#allocation6 + $0x48] sm:$0xff]
    %v249 = vld [vmem:[#allocation6 + $0x50] sm:$0xff]
    %v250 = vld [vmem:[#allocation6 + $0x58] sm:$0xff]
    %v251 = vld [vmem:[#allocation6 + $0x60] sm:$0xff]
    %v252 = vld [vmem:[#allocation6 + $0x68] sm:$0xff]
    %v253 = vld [vmem:[#allocation6 + $0x70] sm:$0xff]
    %v254 = vld [vmem:[#allocation6 + $0x78] sm:$0xff]
    %v255 = vld [vmem:[#allocation6 + $0x80] sm:$0xff]
    %v256 = vld [vmem:[#allocation6 + $0x88] sm:$0xff]
    %v257 = vld [vmem:[#allocation6 + $0x90] sm:$0xff]
    %v258 = vld [vmem:[#allocation6 + $0x98] sm:$0xff]
    %v259 = vld [vmem:[#allocation6 + $0xa0] sm:$0xff]
    %v260 = vld [vmem:[#allocation6 + $0xa8] sm:$0xff]
    %v261 = vld [vmem:[#allocation6 + $0xb0] sm:$0xff]
    %v262 = vld [vmem:[#allocation6 + $0xb8] sm:$0xff]
    %v263 = vld [vmem:[#allocation6 + $0xc0] sm:$0xff]
    %v264 = vld [vmem:[#allocation6 + $0xc8] sm:$0xff]
    %v265 = vld [vmem:[#allocation6 + $0xd0] sm:$0xff]
    %v266 = vld [vmem:[#allocation6 + $0xd8] sm:$0xff]
    %v267 = vld [vmem:[#allocation6 + $0xe0] sm:$0xff]
    %v268 = vld [vmem:[#allocation6 + $0xe8] sm:$0xff]
    %v269 = vld [vmem:[#allocation6 + $0xf0] sm:$0xff]
    %v270 = vld [vmem:[#allocation6 + $0xf8] sm:$0xff]
    %v271 = vld [vmem:[#allocation6 + $0x100] sm:$0xff]
    %v272 = vld [vmem:[#allocation6 + $0x108] sm:$0xff]
    %v273 = vld [vmem:[#allocation6 + $0x110] sm:$0xff]
    %v274 = vld [vmem:[#allocation6 + $0x118] sm:$0xff]
    %v275 = vld [vmem:[#allocation6 + $0x120] sm:$0xff]
    %v276 = vld [vmem:[#allocation6 + $0x128] sm:$0xff]
    %v277 = vld [vmem:[#allocation6 + $0x130] sm:$0xff]
    %v278 = vld [vmem:[#allocation6 + $0x138] sm:$0xff]
    %v279 = vld [vmem:[#allocation6 + $0x140] sm:$0xff]
    %v280 = vld [vmem:[#allocation6 + $0x148] sm:$0xff]
    %v281 = vld [vmem:[#allocation6 + $0x150] sm:$0xff]
    %v282 = vld [vmem:[#allocation6 + $0x158] sm:$0xff]
    %v283 = vld [vmem:[#allocation6 + $0x160] sm:$0xff]
    %v284 = vld [vmem:[#allocation6 + $0x168] sm:$0xff]
    %v285 = vld [vmem:[#allocation6 + $0x170] sm:$0xff]
    %v286 = vld [vmem:[#allocation6 + $0x178] sm:$0xff]
    %v287 = vld [vmem:[#allocation6 + $0x180] sm:$0xff]
    %v288 = vld [vmem:[#allocation6 + $0x188] sm:$0xff]
    %v289 = vld [vmem:[#allocation6 + $0x190] sm:$0xff]
    %v290 = vld [vmem:[#allocation6 + $0x198] sm:$0xff]
    %v291 = vld [vmem:[#allocation6 + $0x1a0] sm:$0xff]
    %v292 = vld [vmem:[#allocation6 + $0x1a8] sm:$0xff]
    %v293 = vld [vmem:[#allocation6 + $0x1b0] sm:$0xff]
    %v294 = vld [vmem:[#allocation6 + $0x1b8] sm:$0xff]
    %v295 = vld [vmem:[#allocation6 + $0x1c0] sm:$0xff]
    %v296 = vld [vmem:[#allocation6 + $0x1c8] sm:$0xff]
    %v297 = vld [vmem:[#allocation6 + $0x1d0] sm:$0xff]
    %v298 = vld [vmem:[#allocation6 + $0x1d8] sm:$0xff]
    %v299 = vld [vmem:[#allocation6 + $0x1e0] sm:$0xff]
    %v300 = vld [vmem:[#allocation6 + $0x1e8] sm:$0xff]
    %v301 = vld [vmem:[#allocation6 + $0x1f0] sm:$0xff]
    %v302 = vld [vmem:[#allocation6 + $0x1f8] sm:$0xff]
    %v303 = vld [vmem:[#allocation6 + $0x200] sm:$0xff]
    %v304 = vld [vmem:[#allocation6 + $0x208] sm:$0xff]
    %v305 = vld [vmem:[#allocation6 + $0x210] sm:$0xff]
    %v306 = vld [vmem:[#allocation6 + $0x218] sm:$0xff]
    %v307 = vld [vmem:[#allocation6 + $0x220] sm:$0xff]
    %v308 = vld [vmem:[#allocation6 + $0x228] sm:$0xff]
    %v309 = vld [vmem:[#allocation6 + $0x230] sm:$0xff]
    %v310 = vld [vmem:[#allocation6 + $0x238] sm:$0xff]
    %v311 = vld [vmem:[#allocation6 + $0x240] sm:$0xff]
    %v312 = vld [vmem:[#allocation6 + $0x248] sm:$0xff]
    %v313 = vld [vmem:[#allocation6 + $0x250] sm:$0xff]
    %v314 = vld [vmem:[#allocation6 + $0x258] sm:$0xff]
    %v315 = vld [vmem:[#allocation6 + $0x260] sm:$0xff]
    %v316 = vld [vmem:[#allocation6 + $0x268] sm:$0xff]
    %v317 = vld [vmem:[#allocation6 + $0x270] sm:$0xff]
    %v318 = vld [vmem:[#allocation6 + $0x278] sm:$0xff]
    %v319 = vld [vmem:[#allocation6 + $0x280] sm:$0xff]
    %v320 = vld [vmem:[#allocation6 + $0x288] sm:$0xff]
    %v321 = vld [vmem:[#allocation6 + $0x290] sm:$0xff]
    %v322 = vld [vmem:[#allocation6 + $0x298] sm:$0xff]
    %v323 = vld [vmem:[#allocation6 + $0x2a0] sm:$0xff]
    %v324 = vld [vmem:[#allocation6 + $0x2a8] sm:$0xff]
    %v325 = vld [vmem:[#allocation6 + $0x2b0] sm:$0xff]
    %v326 = vld [vmem:[#allocation6 + $0x2b8] sm:$0xff]
    %v327 = vld [vmem:[#allocation6 + $0x2c0] sm:$0xff]
    %v328 = vld [vmem:[#allocation6 + $0x2c8] sm:$0xff]
    %v329 = vld [vmem:[#allocation6 + $0x2d0] sm:$0xff]
    %v330 = vld [vmem:[#allocation6 + $0x2d8] sm:$0xff]
    %v331 = vld [vmem:[#allocation6 + $0x2e0] sm:$0xff]
    %v332 = vld [vmem:[#allocation6 + $0x2e8] sm:$0xff]
    %v333 = vld [vmem:[#allocation6 + $0x2f0] sm:$0xff]
    %v334 = vld [vmem:[#allocation6 + $0x2f8] sm:$0xff]
    %v335 = vld [vmem:[#allocation6 + $0x300] sm:$0xff]
    %v336 = vld [vmem:[#allocation6 + $0x308] sm:$0xff]
    %v337 = vld [vmem:[#allocation6 + $0x310] sm:$0xff]
    %v338 = vld [vmem:[#allocation6 + $0x318] sm:$0xff]
    %v339 = vld [vmem:[#allocation6 + $0x320] sm:$0xff]
    %v340 = vld [vmem:[#allocation6 + $0x328] sm:$0xff]
    %v341 = vld [vmem:[#allocation6 + $0x330] sm:$0xff]
    %v342 = vld [vmem:[#allocation6 + $0x338] sm:$0xff]
    %v343 = vld [vmem:[#allocation6 + $0x340] sm:$0xff]
    %v344 = vld [vmem:[#allocation6 + $0x348] sm:$0xff]
    %v345 = vld [vmem:[#allocation6 + $0x350] sm:$0xff]
    %v346 = vld [vmem:[#allocation6 + $0x358] sm:$0xff]
    %v347 = vld [vmem:[#allocation6 + $0x360] sm:$0xff]
    %v348 = vld [vmem:[#allocation6 + $0x368] sm:$0xff]
    %v349 = vld [vmem:[#allocation6 + $0x370] sm:$0xff]
    %v350 = vld [vmem:[#allocation6 + $0x378] sm:$0xff]
    %v351 = vld [vmem:[#allocation6 + $0x380] sm:$0xff]
    %v352 = vld [vmem:[#allocation6 + $0x388] sm:$0xff]
    %v353 = vld [vmem:[#allocation6 + $0x390] sm:$0xff]
    %v354 = vld [vmem:[#allocation6 + $0x398] sm:$0xff]
    %v355 = vld [vmem:[#allocation6 + $0x3a0] sm:$0xff]
    %v356 = vld [vmem:[#allocation6 + $0x3a8] sm:$0xff]
    %v357 = vld [vmem:[#allocation6 + $0x3b0] sm:$0xff]
    %v358 = vld [vmem:[#allocation6 + $0x3b8] sm:$0xff]
    %v359 = vld [vmem:[#allocation6 + $0x3c0] sm:$0xff]
    %v360 = vld [vmem:[#allocation6 + $0x3c8] sm:$0xff]
    %v361 = vld [vmem:[#allocation6 + $0x3d0] sm:$0xff]
    %v362 = vld [vmem:[#allocation6 + $0x3d8] sm:$0xff]
    %v363 = vld [vmem:[#allocation6 + $0x3e0] sm:$0xff]
    %v364 = vld [vmem:[#allocation6 + $0x3e8] sm:$0xff]
    %v365 = vld [vmem:[#allocation6 + $0x3f0] sm:$0xff]
    %v366 = vld [vmem:[#allocation6 + $0x3f8] sm:$0xff]
    %v367 = vsub.f32 %v239, %v111
    %v368 = vsub.f32 %v240, %v112
    %v369 = vsub.f32 %v241, %v113
    %v370 = vsub.f32 %v242, %v114
    %v371 = vsub.f32 %v243, %v115
    %v372 = vsub.f32 %v244, %v116
    %v373 = vsub.f32 %v245, %v117
    %v374 = vsub.f32 %v246, %v118
    %v375 = vsub.f32 %v247, %v119
    %v376 = vsub.f32 %v248, %v120
    %v377 = vsub.f32 %v249, %v121
    %v378 = vsub.f32 %v250, %v122
    %v379 = vsub.f32 %v251, %v123
    %v380 = vsub.f32 %v252, %v124
    %v381 = vsub.f32 %v253, %v125
    %v382 = vsub.f32 %v254, %v126
    %v383 = vsub.f32 %v255, %v127
    %v384 = vsub.f32 %v256, %v128
    %v385 = vsub.f32 %v257, %v129
    %v386 = vsub.f32 %v258, %v130
    %v387 = vsub.f32 %v259, %v131
    %v388 = vsub.f32 %v260, %v132
    %v389 = vsub.f32 %v261, %v133
    %v390 = vsub.f32 %v262, %v134
    %v391 = vsub.f32 %v263, %v135
    %v392 = vsub.f32 %v264, %v136
    %v393 = vsub.f32 %v265, %v137
    %v394 = vsub.f32 %v266, %v138
    %v395 = vsub.f32 %v267, %v139
    %v396 = vsub.f32 %v268, %v140
    %v397 = vsub.f32 %v269, %v141
    %v398 = vsub.f32 %v270, %v142
    %v399 = vsub.f32 %v271, %v143
    %v400 = vsub.f32 %v272, %v144
    %v401 = vsub.f32 %v273, %v145
    %v402 = vsub.f32 %v274, %v146
    %v403 = vsub.f32 %v275, %v147
    %v404 = vsub.f32 %v276, %v148
    %v405 = vsub.f32 %v277, %v149
    %v406 = vsub.f32 %v278, %v150
    %v407 = vsub.f32 %v279, %v151
    %v408 = vsub.f32 %v280, %v152
    %v409 = vsub.f32 %v281, %v153
    %v410 = vsub.f32 %v282, %v154
    %v411 = vsub.f32 %v283, %v155
    %v412 = vsub.f32 %v284, %v156
    %v413 = vsub.f32 %v285, %v157
    %v414 = vsub.f32 %v286, %v158
    %v415 = vsub.f32 %v287, %v159
    %v416 = vsub.f32 %v288, %v160
    %v417 = vsub.f32 %v289, %v161
    %v418 = vsub.f32 %v290, %v162
    %v419 = vsub.f32 %v291, %v163
    %v420 = vsub.f32 %v292, %v164
    %v421 = vsub.f32 %v293, %v165
    %v422 = vsub.f32 %v294, %v166
    %v423 = vsub.f32 %v295, %v167
    %v424 = vsub.f32 %v296, %v168
    %v425 = vsub.f32 %v297, %v169
    %v426 = vsub.f32 %v298, %v170
    %v427 = vsub.f32 %v299, %v171
    %v428 = vsub.f32 %v300, %v172
    %v429 = vsub.f32 %v301, %v173
    %v430 = vsub.f32 %v302, %v174
    %v431 = vsub.f32 %v303, %v175
    %v432 = vsub.f32 %v304, %v176
    %v433 = vsub.f32 %v305, %v177
    %v434 = vsub.f32 %v306, %v178
    %v435 = vsub.f32 %v307, %v179
    %v436 = vsub.f32 %v308, %v180
    %v437 = vsub.f32 %v309, %v181
    %v438 = vsub.f32 %v310, %v182
    %v439 = vsub.f32 %v311, %v183
    %v440 = vsub.f32 %v312, %v184
    %v441 = vsub.f32 %v313, %v185
    %v442 = vsub.f32 %v314, %v186
    %v443 = vsub.f32 %v315, %v187
    %v444 = vsub.f32 %v316, %v188
    %v445 = vsub.f32 %v317, %v189
    %v446 = vsub.f32 %v318, %v190
    %v447 = vsub.f32 %v319, %v191
    %v448 = vsub.f32 %v320, %v192
    %v449 = vsub.f32 %v321, %v193
    %v450 = vsub.f32 %v322, %v194
    %v451 = vsub.f32 %v323, %v195
    %v452 = vsub.f32 %v324, %v196
    %v453 = vsub.f32 %v325, %v197
    %v454 = vsub.f32 %v326, %v198
    %v455 = vsub.f32 %v327, %v199
    %v456 = vsub.f32 %v328, %v200
    %v457 = vsub.f32 %v329, %v201
    %v458 = vsub.f32 %v330, %v202
    %v459 = vsub.f32 %v331, %v203
    %v460 = vsub.f32 %v332, %v204
    %v461 = vsub.f32 %v333, %v205
    %v462 = vsub.f32 %v334, %v206
    %v463 = vsub.f32 %v335, %v207
    %v464 = vsub.f32 %v336, %v208
    %v465 = vsub.f32 %v337, %v209
    %v466 = vsub.f32 %v338, %v210
    %v467 = vsub.f32 %v339, %v211
    %v468 = vsub.f32 %v340, %v212
    %v469 = vsub.f32 %v341, %v213
    %v470 = vsub.f32 %v342, %v214
    %v471 = vsub.f32 %v343, %v215
    %v472 = vsub.f32 %v344, %v216
    %v473 = vsub.f32 %v345, %v217
    %v474 = vsub.f32 %v346, %v218
    %v475 = vsub.f32 %v347, %v219
    %v476 = vsub.f32 %v348, %v220
    %v477 = vsub.f32 %v349, %v221
    %v478 = vsub.f32 %v350, %v222
    %v479 = vsub.f32 %v351, %v223
    %v480 = vsub.f32 %v352, %v224
    %v481 = vsub.f32 %v353, %v225
    %v482 = vsub.f32 %v354, %v226
    %v483 = vsub.f32 %v355, %v227
    %v484 = vsub.f32 %v356, %v228
    %v485 = vsub.f32 %v357, %v229
    %v486 = vsub.f32 %v358, %v230
    %v487 = vsub.f32 %v359, %v231
    %v488 = vsub.f32 %v360, %v232
    %v489 = vsub.f32 %v361, %v233
    %v490 = vsub.f32 %v362, %v234
    %v491 = vsub.f32 %v363, %v235
    %v492 = vsub.f32 %v364, %v236
    %v493 = vsub.f32 %v365, %v237
    %v494 = vsub.f32 %v366, %v238
    %v495 = vmul.f32 %v367, 0.01
    %v496 = vmul.f32 %v368, 0.01
    %v497 = vmul.f32 %v369, 0.01
    %v498 = vmul.f32 %v370, 0.01
    %v499 = vmul.f32 %v371, 0.01
    %v500 = vmul.f32 %v372, 0.01
    %v501 = vmul.f32 %v373, 0.01
    %v502 = vmul.f32 %v374, 0.01
    %v503 = vmul.f32 %v375, 0.01
    %v504 = vmul.f32 %v376, 0.01
    %v505 = vmul.f32 %v377, 0.01
    %v506 = vmul.f32 %v378, 0.01
    %v507 = vmul.f32 %v379, 0.01
    %v508 = vmul.f32 %v380, 0.01
    %v509 = vmul.f32 %v381, 0.01
    %v510 = vmul.f32 %v382, 0.01
    %v511 = vmul.f32 %v383, 0.01
    %v512 = vmul.f32 %v384, 0.01
    %v513 = vmul.f32 %v385, 0.01
    %v514 = vmul.f32 %v386, 0.01
    %v515 = vmul.f32 %v387, 0.01
    %v516 = vmul.f32 %v388, 0.01
    %v517 = vmul.f32 %v389, 0.01
    %v518 = vmul.f32 %v390, 0.01
    %v519 = vmul.f32 %v391, 0.01
    %v520 = vmul.f32 %v392, 0.01
    %v521 = vmul.f32 %v393, 0.01
    %v522 = vmul.f32 %v394, 0.01
    %v523 = vmul.f32 %v395, 0.01
    %v524 = vmul.f32 %v396, 0.01
    %v525 = vmul.f32 %v397, 0.01
    %v526 = vmul.f32 %v398, 0.01
    %v527 = vmul.f32 %v399, 0.01
    %v528 = vmul.f32 %v400, 0.01
    %v529 = vmul.f32 %v401, 0.01
    %v530 = vmul.f32 %v402, 0.01
    %v531 = vmul.f32 %v403, 0.01
    %v532 = vmul.f32 %v404, 0.01
    %v533 = vmul.f32 %v405, 0.01
    %v534 = vmul.f32 %v406, 0.01
    %v535 = vmul.f32 %v407, 0.01
    %v536 = vmul.f32 %v408, 0.01
    %v537 = vmul.f32 %v409, 0.01
    %v538 = vmul.f32 %v410, 0.01
    %v539 = vmul.f32 %v411, 0.01
    %v540 = vmul.f32 %v412, 0.01
    %v541 = vmul.f32 %v413, 0.01
    %v542 = vmul.f32 %v414, 0.01
    %v543 = vmul.f32 %v415, 0.01
    %v544 = vmul.f32 %v416, 0.01
    %v545 = vmul.f32 %v417, 0.01
    %v546 = vmul.f32 %v418, 0.01
    %v547 = vmul.f32 %v419, 0.01
    %v548 = vmul.f32 %v420, 0.01
    %v549 = vmul.f32 %v421, 0.01
    %v550 = vmul.f32 %v422, 0.01
    %v551 = vmul.f32 %v423, 0.01
    %v552 = vmul.f32 %v424, 0.01
    %v553 = vmul.f32 %v425, 0.01
    %v554 = vmul.f32 %v426, 0.01
    %v555 = vmul.f32 %v427, 0.01
    %v556 = vmul.f32 %v428, 0.01
    %v557 = vmul.f32 %v429, 0.01
    %v558 = vmul.f32 %v430, 0.01
    %v559 = vmul.f32 %v431, 0.01
    %v560 = vmul.f32 %v432, 0.01
    %v561 = vmul.f32 %v433, 0.01
    %v562 = vmul.f32 %v434, 0.01
    %v563 = vmul.f32 %v435, 0.01
    %v564 = vmul.f32 %v436, 0.01
    %v565 = vmul.f32 %v437, 0.01
    %v566 = vmul.f32 %v438, 0.01
    %v567 = vmul.f32 %v439, 0.01
    %v568 = vmul.f32 %v440, 0.01
    %v569 = vmul.f32 %v441, 0.01
    %v570 = vmul.f32 %v442, 0.01
    %v571 = vmul.f32 %v443, 0.01
    %v572 = vmul.f32 %v444, 0.01
    %v573 = vmul.f32 %v445, 0.01
    %v574 = vmul.f32 %v446, 0.01
    %v575 = vmul.f32 %v447, 0.01
    %v576 = vmul.f32 %v448, 0.01
    %v577 = vmul.f32 %v449, 0.01
    %v578 = vmul.f32 %v450, 0.01
    %v579 = vmul.f32 %v451, 0.01
    %v580 = vmul.f32 %v452, 0.01
    %v581 = vmul.f32 %v453, 0.01
    %v582 = vmul.f32 %v454, 0.01
    %v583 = vmul.f32 %v455, 0.01
    %v584 = vmul.f32 %v456, 0.01
    %v585 = vmul.f32 %v457, 0.01
    %v586 = vmul.f32 %v458, 0.01
    %v587 = vmul.f32 %v459, 0.01
    %v588 = vmul.f32 %v460, 0.01
    %v589 = vmul.f32 %v461, 0.01
    %v590 = vmul.f32 %v462, 0.01
    %v591 = vmul.f32 %v463, 0.01
    %v592 = vmul.f32 %v464, 0.01
    %v593 = vmul.f32 %v465, 0.01
    %v594 = vmul.f32 %v466, 0.01
    %v595 = vmul.f32 %v467, 0.01
    %v596 = vmul.f32 %v468, 0.01
    %v597 = vmul.f32 %v469, 0.01
    %v598 = vmul.f32 %v470, 0.01
    %v599 = vmul.f32 %v471, 0.01
    %v600 = vmul.f32 %v472, 0.01
    %v601 = vmul.f32 %v473, 0.01
    %v602 = vmul.f32 %v474, 0.01
    %v603 = vmul.f32 %v475, 0.01
    %v604 = vmul.f32 %v476, 0.01
    %v605 = vmul.f32 %v477, 0.01
    %v606 = vmul.f32 %v478, 0.01
    %v607 = vmul.f32 %v479, 0.01
    %v608 = vmul.f32 %v480, 0.01
    %v609 = vmul.f32 %v481, 0.01
    %v610 = vmul.f32 %v482, 0.01
    %v611 = vmul.f32 %v483, 0.01
    %v612 = vmul.f32 %v484, 0.01
    %v613 = vmul.f32 %v485, 0.01
    %v614 = vmul.f32 %v486, 0.01
    %v615 = vmul.f32 %v487, 0.01
    %v616 = vmul.f32 %v488, 0.01
    %v617 = vmul.f32 %v489, 0.01
    %v618 = vmul.f32 %v490, 0.01
    %v619 = vmul.f32 %v491, 0.01
    %v620 = vmul.f32 %v492, 0.01
    %v621 = vmul.f32 %v493, 0.01
    %v622 = vmul.f32 %v494, 0.01
    %v623 = vadd.f32 %v111, %v495
    %v624 = vadd.f32 %v112, %v496
    %v625 = vadd.f32 %v113, %v497
    %v626 = vadd.f32 %v114, %v498
    %v627 = vadd.f32 %v115, %v499
    %v628 = vadd.f32 %v116, %v500
    %v629 = vadd.f32 %v117, %v501
    %v630 = vadd.f32 %v118, %v502
    %v631 = vadd.f32 %v119, %v503
    %v632 = vadd.f32 %v120, %v504
    %v633 = vadd.f32 %v121, %v505
    %v634 = vadd.f32 %v122, %v506
    %v635 = vadd.f32 %v123, %v507
    %v636 = vadd.f32 %v124, %v508
    %v637 = vadd.f32 %v125, %v509
    %v638 = vadd.f32 %v126, %v510
    %v639 = vadd.f32 %v127, %v511
    %v640 = vadd.f32 %v128, %v512
    %v641 = vadd.f32 %v129, %v513
    %v642 = vadd.f32 %v130, %v514
    %v643 = vadd.f32 %v131, %v515
    %v644 = vadd.f32 %v132, %v516
    %v645 = vadd.f32 %v133, %v517
    %v646 = vadd.f32 %v134, %v518
    %v647 = vadd.f32 %v135, %v519
    %v648 = vadd.f32 %v136, %v520
    %v649 = vadd.f32 %v137, %v521
    %v650 = vadd.f32 %v138, %v522
    %v651 = vadd.f32 %v139, %v523
    %v652 = vadd.f32 %v140, %v524
    %v653 = vadd.f32 %v141, %v525
    %v654 = vadd.f32 %v142, %v526
    %v655 = vadd.f32 %v143, %v527
    %v656 = vadd.f32 %v144, %v528
    %v657 = vadd.f32 %v145, %v529
    %v658 = vadd.f32 %v146, %v530
    %v659 = vadd.f32 %v147, %v531
    %v660 = vadd.f32 %v148, %v532
    %v661 = vadd.f32 %v149, %v533
    %v662 = vadd.f32 %v150, %v534
    %v663 = vadd.f32 %v151, %v535
    %v664 = vadd.f32 %v152, %v536
    %v665 = vadd.f32 %v153, %v537
    %v666 = vadd.f32 %v154, %v538
    %v667 = vadd.f32 %v155, %v539
    %v668 = vadd.f32 %v156, %v540
    %v669 = vadd.f32 %v157, %v541
    %v670 = vadd.f32 %v158, %v542
    %v671 = vadd.f32 %v159, %v543
    %v672 = vadd.f32 %v160, %v544
    %v673 = vadd.f32 %v161, %v545
    %v674 = vadd.f32 %v162, %v546
    %v675 = vadd.f32 %v163, %v547
    %v676 = vadd.f32 %v164, %v548
    %v677 = vadd.f32 %v165, %v549
    %v678 = vadd.f32 %v166, %v550
    %v679 = vadd.f32 %v167, %v551
    %v680 = vadd.f32 %v168, %v552
    %v681 = vadd.f32 %v169, %v553
    %v682 = vadd.f32 %v170, %v554
    %v683 = vadd.f32 %v171, %v555
    %v684 = vadd.f32 %v172, %v556
    %v685 = vadd.f32 %v173, %v557
    %v686 = vadd.f32 %v174, %v558
    %v687 = vadd.f32 %v175, %v559
    %v688 = vadd.f32 %v176, %v560
    %v689 = vadd.f32 %v177, %v561
    %v690 = vadd.f32 %v178, %v562
    %v691 = vadd.f32 %v179, %v563
    %v692 = vadd.f32 %v180, %v564
    %v693 = vadd.f32 %v181, %v565
    %v694 = vadd.f32 %v182, %v566
    %v695 = vadd.f32 %v183, %v567
    %v696 = vadd.f32 %v184, %v568
    %v697 = vadd.f32 %v185, %v569
    %v698 = vadd.f32 %v186, %v570
    %v699 = vadd.f32 %v187, %v571
    %v700 = vadd.f32 %v188, %v572
    %v701 = vadd.f32 %v189, %v573
    %v702 = vadd.f32 %v190, %v574
    %v703 = vadd.f32 %v191, %v575
    %v704 = vadd.f32 %v192, %v576
    %v705 = vadd.f32 %v193, %v577
    %v706 = vadd.f32 %v194, %v578
    %v707 = vadd.f32 %v195, %v579
    %v708 = vadd.f32 %v196, %v580
    %v709 = vadd.f32 %v197, %v581
    %v710 = vadd.f32 %v198, %v582
    %v711 = vadd.f32 %v199, %v583
    %v712 = vadd.f32 %v200, %v584
    %v713 = vadd.f32 %v201, %v585
    %v714 = vadd.f32 %v202, %v586
    %v715 = vadd.f32 %v203, %v587
    %v716 = vadd.f32 %v204, %v588
    %v717 = vadd.f32 %v205, %v589
    %v718 = vadd.f32 %v206, %v590
    %v719 = vadd.f32 %v207, %v591
    %v720 = vadd.f32 %v208, %v592
    %v721 = vadd.f32 %v209, %v593
    %v722 = vadd.f32 %v210, %v594
    %v723 = vadd.f32 %v211, %v595
    %v724 = vadd.f32 %v212, %v596
    %v725 = vadd.f32 %v213, %v597
    %v726 = vadd.f32 %v214, %v598
    %v727 = vadd.f32 %v215, %v599
    %v728 = vadd.f32 %v216, %v600
    %v729 = vadd.f32 %v217, %v601
    %v730 = vadd.f32 %v218, %v602
    %v731 = vadd.f32 %v219, %v603
    %v732 = vadd.f32 %v220, %v604
    %v733 = vadd.f32 %v221, %v605
    %v734 = vadd.f32 %v222, %v606
    %v735 = vadd.f32 %v223, %v607
    %v736 = vadd.f32 %v224, %v608
    %v737 = vadd.f32 %v225, %v609
    %v738 = vadd.f32 %v226, %v610
    %v739 = vadd.f32 %v227, %v611
    %v740 = vadd.f32 %v228, %v612
    %v741 = vadd.f32 %v229, %v613
    %v742 = vadd.f32 %v230, %v614
    %v743 = vadd.f32 %v231, %v615
    %v744 = vadd.f32 %v232, %v616
    %v745 = vadd.f32 %v233, %v617
    %v746 = vadd.f32 %v234, %v618
    %v747 = vadd.f32 %v235, %v619
    %v748 = vadd.f32 %v236, %v620
    %v749 = vadd.f32 %v237, %v621
    %v750 = vadd.f32 %v238, %v622
    %751 = vst [vmem:[%s12] sm:$0xff] %v623
    %752 = vst [vmem:[%s12 + $0x8] sm:$0xff] %v624
    %753 = vst [vmem:[%s12 + $0x10] sm:$0xff] %v625
    %754 = vst [vmem:[%s12 + $0x18] sm:$0xff] %v626
    %755 = vst [vmem:[%s12 + $0x20] sm:$0xff] %v627
    %756 = vst [vmem:[%s12 + $0x28] sm:$0xff] %v628
    %757 = vst [vmem:[%s12 + $0x30] sm:$0xff] %v629
    %758 = vst [vmem:[%s12 + $0x38] sm:$0xff] %v630
    %759 = vst [vmem:[%s12 + $0x40] sm:$0xff] %v631
    %760 = vst [vmem:[%s12 + $0x48] sm:$0xff] %v632
    %761 = vst [vmem:[%s12 + $0x50] sm:$0xff] %v633
    %762 = vst [vmem:[%s12 + $0x58] sm:$0xff] %v634
    %763 = vst [vmem:[%s12 + $0x60] sm:$0xff] %v635
    %764 = vst [vmem:[%s12 + $0x68] sm:$0xff] %v636
    %765 = vst [vmem:[%s12 + $0x70] sm:$0xff] %v637
    %766 = vst [vmem:[%s12 + $0x78] sm:$0xff] %v638
    %767 = vst [vmem:[%s12 + $0x80] sm:$0xff] %v639
    %768 = vst [vmem:[%s12 + $0x88] sm:$0xff] %v640
    %769 = vst [vmem:[%s12 + $0x90] sm:$0xff] %v641
    %770 = vst [vmem:[%s12 + $0x98] sm:$0xff] %v642
    %771 = vst [vmem:[%s12 + $0xa0] sm:$0xff] %v643
    %772 = vst [vmem:[%s12 + $0xa8] sm:$0xff] %v644
    %773 = vst [vmem:[%s12 + $0xb0] sm:$0xff] %v645
    %774 = vst [vmem:[%s12 + $0xb8] sm:$0xff] %v646
    %775 = vst [vmem:[%s12 + $0xc0] sm:$0xff] %v647
    %776 = vst [vmem:[%s12 + $0xc8] sm:$0xff] %v648
    %777 = vst [vmem:[%s12 + $0xd0] sm:$0xff] %v649
    %778 = vst [vmem:[%s12 + $0xd8] sm:$0xff] %v650
    %779 = vst [vmem:[%s12 + $0xe0] sm:$0xff] %v651
    %780 = vst [vmem:[%s12 + $0xe8] sm:$0xff] %v652
    %781 = vst [vmem:[%s12 + $0xf0] sm:$0xff] %v653
    %782 = vst [vmem:[%s12 + $0xf8] sm:$0xff] %v654
    %783 = vst [vmem:[%s12 + $0x100] sm:$0xff] %v655
    %784 = vst [vmem:[%s12 + $0x108] sm:$0xff] %v656
    %785 = vst [vmem:[%s12 + $0x110] sm:$0xff] %v657
    %786 = vst [vmem:[%s12 + $0x118] sm:$0xff] %v658
    %787 = vst [vmem:[%s12 + $0x120] sm:$0xff] %v659
    %788 = vst [vmem:[%s12 + $0x128] sm:$0xff] %v660
    %789 = vst [vmem:[%s12 + $0x130] sm:$0xff] %v661
    %790 = vst [vmem:[%s12 + $0x138] sm:$0xff] %v662
    %791 = vst [vmem:[%s12 + $0x140] sm:$0xff] %v663
    %792 = vst [vmem:[%s12 + $0x148] sm:$0xff] %v664
    %793 = vst [vmem:[%s12 + $0x150] sm:$0xff] %v665
    %794 = vst [vmem:[%s12 + $0x158] sm:$0xff] %v666
    %795 = vst [vmem:[%s12 + $0x160] sm:$0xff] %v667
    %796 = vst [vmem:[%s12 + $0x168] sm:$0xff] %v668
    %797 = vst [vmem:[%s12 + $0x170] sm:$0xff] %v669
    %798 = vst [vmem:[%s12 + $0x178] sm:$0xff] %v670
    %799 = vst [vmem:[%s12 + $0x180] sm:$0xff] %v671
    %800 = vst [vmem:[%s12 + $0x188] sm:$0xff] %v672
    %801 = vst [vmem:[%s12 + $0x190] sm:$0xff] %v673
    %802 = vst [vmem:[%s12 + $0x198] sm:$0xff] %v674
    %803 = vst [vmem:[%s12 + $0x1a0] sm:$0xff] %v675
    %804 = vst [vmem:[%s12 + $0x1a8] sm:$0xff] %v676
    %805 = vst [vmem:[%s12 + $0x1b0] sm:$0xff] %v677
    %806 = vst [vmem:[%s12 + $0x1b8] sm:$0xff] %v678
    %807 = vst [vmem:[%s12 + $0x1c0] sm:$0xff] %v679
    %808 = vst [vmem:[%s12 + $0x1c8] sm:$0xff] %v680
    %809 = vst [vmem:[%s12 + $0x1d0] sm:$0xff] %v681
    %810 = vst [vmem:[%s12 + $0x1d8] sm:$0xff] %v682
    %811 = vst [vmem:[%s12 + $0x1e0] sm:$0xff] %v683
    %812 = vst [vmem:[%s12 + $0x1e8] sm:$0xff] %v684
    %813 = vst [vmem:[%s12 + $0x1f0] sm:$0xff] %v685
    %814 = vst [vmem:[%s12 + $0x1f8] sm:$0xff] %v686
    %815 = vst [vmem:[%s12 + $0x200] sm:$0xff] %v687
    %816 = vst [vmem:[%s12 + $0x208] sm:$0xff] %v688
    %817 = vst [vmem:[%s12 + $0x210] sm:$0xff] %v689
    %818 = vst [vmem:[%s12 + $0x218] sm:$0xff] %v690
    %819 = vst [vmem:[%s12 + $0x220] sm:$0xff] %v691
    %820 = vst [vmem:[%s12 + $0x228] sm:$0xff] %v692
    %821 = vst [vmem:[%s12 + $0x230] sm:$0xff] %v693
    %822 = vst [vmem:[%s12 + $0x238] sm:$0xff] %v694
    %823 = vst [vmem:[%s12 + $0x240] sm:$0xff] %v695
    %824 = vst [vmem:[%s12 + $0x248] sm:$0xff] %v696
    %825 = vst [vmem:[%s12 + $0x250] sm:$0xff] %v697
    %826 = vst [vmem:[%s12 + $0x258] sm:$0xff] %v698
    %827 = vst [vmem:[%s12 + $0x260] sm:$0xff] %v699
    %828 = vst [vmem:[%s12 + $0x268] sm:$0xff] %v700
    %829 = vst [vmem:[%s12 + $0x270] sm:$0xff] %v701
    %830 = vst [vmem:[%s12 + $0x278] sm:$0xff] %v702
    %831 = vst [vmem:[%s12 + $0x280] sm:$0xff] %v703
    %832 = vst [vmem:[%s12 + $0x288] sm:$0xff] %v704
    %833 = vst [vmem:[%s12 + $0x290] sm:$0xff] %v705
    %834 = vst [vmem:[%s12 + $0x298] sm:$0xff] %v706
    %835 = vst [vmem:[%s12 + $0x2a0] sm:$0xff] %v707
    %836 = vst [vmem:[%s12 + $0x2a8] sm:$0xff] %v708
    %837 = vst [vmem:[%s12 + $0x2b0] sm:$0xff] %v709
    %838 = vst [vmem:[%s12 + $0x2b8] sm:$0xff] %v710
    %839 = vst [vmem:[%s12 + $0x2c0] sm:$0xff] %v711
    %840 = vst [vmem:[%s12 + $0x2c8] sm:$0xff] %v712
    %841 = vst [vmem:[%s12 + $0x2d0] sm:$0xff] %v713
    %842 = vst [vmem:[%s12 + $0x2d8] sm:$0xff] %v714
    %843 = vst [vmem:[%s12 + $0x2e0] sm:$0xff] %v715
    %844 = vst [vmem:[%s12 + $0x2e8] sm:$0xff] %v716
    %845 = vst [vmem:[%s12 + $0x2f0] sm:$0xff] %v717
    %846 = vst [vmem:[%s12 + $0x2f8] sm:$0xff] %v718
    %847 = vst [vmem:[%s12 + $0x300] sm:$0xff] %v719
    %848 = vst [vmem:[%s12 + $0x308] sm:$0xff] %v720
    %849 = vst [vmem:[%s12 + $0x310] sm:$0xff] %v721
    %850 = vst [vmem:[%s12 + $0x318] sm:$0xff] %v722
    %851 = vst [vmem:[%s12 + $0x320] sm:$0xff] %v723
    %852 = vst [vmem:[%s12 + $0x328] sm:$0xff] %v724
    %853 = vst [vmem:[%s12 + $0x330] sm:$0xff] %v725
    %854 = vst [vmem:[%s12 + $0x338] sm:$0xff] %v726
    %855 = vst [vmem:[%s12 + $0x340] sm:$0xff] %v727
    %856 = vst [vmem:[%s12 + $0x348] sm:$0xff] %v728
    %857 = vst [vmem:[%s12 + $0x350] sm:$0xff] %v729
    %858 = vst [vmem:[%s12 + $0x358] sm:$0xff] %v730
    %859 = vst [vmem:[%s12 + $0x360] sm:$0xff] %v731
    %860 = vst [vmem:[%s12 + $0x368] sm:$0xff] %v732
    %861 = vst [vmem:[%s12 + $0x370] sm:$0xff] %v733
    %862 = vst [vmem:[%s12 + $0x378] sm:$0xff] %v734
    %863 = vst [vmem:[%s12 + $0x380] sm:$0xff] %v735
    %864 = vst [vmem:[%s12 + $0x388] sm:$0xff] %v736
    %865 = vst [vmem:[%s12 + $0x390] sm:$0xff] %v737
    %866 = vst [vmem:[%s12 + $0x398] sm:$0xff] %v738
    %867 = vst [vmem:[%s12 + $0x3a0] sm:$0xff] %v739
    %868 = vst [vmem:[%s12 + $0x3a8] sm:$0xff] %v740
    %869 = vst [vmem:[%s12 + $0x3b0] sm:$0xff] %v741
    %870 = vst [vmem:[%s12 + $0x3b8] sm:$0xff] %v742
    %871 = vst [vmem:[%s12 + $0x3c0] sm:$0xff] %v743
    %872 = vst [vmem:[%s12 + $0x3c8] sm:$0xff] %v744
    %873 = vst [vmem:[%s12 + $0x3d0] sm:$0xff] %v745
    %874 = vst [vmem:[%s12 + $0x3d8] sm:$0xff] %v746
    %875 = vst [vmem:[%s12 + $0x3e0] sm:$0xff] %v747
    %876 = vst [vmem:[%s12 + $0x3e8] sm:$0xff] %v748
    %877 = vst [vmem:[%s12 + $0x3f0] sm:$0xff] %v749
    %878 = vst [vmem:[%s12 + $0x3f8] sm:$0xff] %v750
    %v879 = vld [vmem:[%s7] sm:$0x1]
    %v880 = vld [vmem:[%s3] sm:$0x1]
    %v881 = vsub.f32 %v880, %v879
    %v882 = vmul.f32 %v881, 0.01
    %v883 = vadd.f32 %v879, %v882
    %884 = vst [vmem:[%s13] sm:$0x1] %v883
    %v885 = vld [vmem:[%s8] sm:$0xff]
    %v886 = vld [vmem:[%s8 + $0x8] sm:$0xff]
    %v887 = vld [vmem:[%s8 + $0x10] sm:$0xff]
    %v888 = vld [vmem:[%s8 + $0x18] sm:$0xff]
    %v889 = vld [vmem:[%s8 + $0x20] sm:$0xff]
    %v890 = vld [vmem:[%s8 + $0x28] sm:$0xff]
    %v891 = vld [vmem:[%s8 + $0x30] sm:$0xff]
    %v892 = vld [vmem:[%s8 + $0x38] sm:$0xff]
    %v893 = vld [vmem:[%s8 + $0x40] sm:$0xff]
    %v894 = vld [vmem:[%s8 + $0x48] sm:$0xff]
    %v895 = vld [vmem:[%s8 + $0x50] sm:$0xff]
    %v896 = vld [vmem:[%s8 + $0x58] sm:$0xff]
    %v897 = vld [vmem:[%s8 + $0x60] sm:$0xff]
    %v898 = vld [vmem:[%s8 + $0x68] sm:$0xff]
    %v899 = vld [vmem:[%s8 + $0x70] sm:$0xff]
    %v900 = vld [vmem:[%s8 + $0x78] sm:$0xff]
    %v901 = vld [vmem:[%s4] sm:$0xff]
    %v902 = vld [vmem:[%s4 + $0x8] sm:$0xff]
    %v903 = vld [vmem:[%s4 + $0x10] sm:$0xff]
    %v904 = vld [vmem:[%s4 + $0x18] sm:$0xff]
    %v905 = vld [vmem:[%s4 + $0x20] sm:$0xff]
    %v906 = vld [vmem:[%s4 + $0x28] sm:$0xff]
    %v907 = vld [vmem:[%s4 + $0x30] sm:$0xff]
    %v908 = vld [vmem:[%s4 + $0x38] sm:$0xff]
    %v909 = vld [vmem:[%s4 + $0x40] sm:$0xff]
    %v910 = vld [vmem:[%s4 + $0x48] sm:$0xff]
    %v911 = vld [vmem:[%s4 + $0x50] sm:$0xff]
    %v912 = vld [vmem:[%s4 + $0x58] sm:$0xff]
    %v913 = vld [vmem:[%s4 + $0x60] sm:$0xff]
    %v914 = vld [vmem:[%s4 + $0x68] sm:$0xff]
    %v915 = vld [vmem:[%s4 + $0x70] sm:$0xff]
    %v916 = vld [vmem:[%s4 + $0x78] sm:$0xff]
    %v917 = vsub.f32 %v901, %v885
    %v918 = vsub.f32 %v902, %v886
    %v919 = vsub.f32 %v903, %v887
    %v920 = vsub.f32 %v904, %v888
    %v921 = vsub.f32 %v905, %v889
    %v922 = vsub.f32 %v906, %v890
    %v923 = vsub.f32 %v907, %v891
    %v924 = vsub.f32 %v908, %v892
    %v925 = vsub.f32 %v909, %v893
    %v926 = vsub.f32 %v910, %v894
    %v927 = vsub.f32 %v911, %v895
    %v928 = vsub.f32 %v912, %v896
    %v929 = vsub.f32 %v913, %v897
    %v930 = vsub.f32 %v914, %v898
    %v931 = vsub.f32 %v915, %v899
    %v932 = vsub.f32 %v916, %v900
    %v933 = vmul.f32 %v917, 0.01
    %v934 = vmul.f32 %v918, 0.01
    %v935 = vmul.f32 %v919, 0.01
    %v936 = vmul.f32 %v920, 0.01
    %v937 = vmul.f32 %v921, 0.01
    %v938 = vmul.f32 %v922, 0.01
    %v939 = vmul.f32 %v923, 0.01
    %v940 = vmul.f32 %v924, 0.01
    %v941 = vmul.f32 %v925, 0.01
    %v942 = vmul.f32 %v926, 0.01
    %v943 = vmul.f32 %v927, 0.01
    %v944 = vmul.f32 %v928, 0.01
    %v945 = vmul.f32 %v929, 0.01
    %v946 = vmul.f32 %v930, 0.01
    %v947 = vmul.f32 %v931, 0.01
    %v948 = vmul.f32 %v932, 0.01
    %v949 = vadd.f32 %v885, %v933
    %v950 = vadd.f32 %v886, %v934
    %v951 = vadd.f32 %v887, %v935
    %v952 = vadd.f32 %v888, %v936
    %v953 = vadd.f32 %v889, %v937
    %v954 = vadd.f32 %v890, %v938
    %v955 = vadd.f32 %v891, %v939
    %v956 = vadd.f32 %v892, %v940
    %v957 = vadd.f32 %v893, %v941
    %v958 = vadd.f32 %v894, %v942
    %v959 = vadd.f32 %v895, %v943
    %v960 = vadd.f32 %v896, %v944
    %v961 = vadd.f32 %v897, %v945
    %v962 = vadd.f32 %v898, %v946
    %v963 = vadd.f32 %v899, %v947
    %v964 = vadd.f32 %v900, %v948
    %965 = vst [vmem:[%s14] sm:$0xff] %v949
    %966 = vst [vmem:[%s14 + $0x8] sm:$0xff] %v950
    %967 = vst [vmem:[%s14 + $0x10] sm:$0xff] %v951
    %968 = vst [vmem:[%s14 + $0x18] sm:$0xff] %v952
    %969 = vst [vmem:[%s14 + $0x20] sm:$0xff] %v953
    %970 = vst [vmem:[%s14 + $0x28] sm:$0xff] %v954
    %971 = vst [vmem:[%s14 + $0x30] sm:$0xff] %v955
    %972 = vst [vmem:[%s14 + $0x38] sm:$0xff] %v956
    %973 = vst [vmem:[%s14 + $0x40] sm:$0xff] %v957
    %974 = vst [vmem:[%s14 + $0x48] sm:$0xff] %v958
    %975 = vst [vmem:[%s14 + $0x50] sm:$0xff] %v959
    %976 = vst [vmem:[%s14 + $0x58] sm:$0xff] %v960
    %977 = vst [vmem:[%s14 + $0x60] sm:$0xff] %v961
    %978 = vst [vmem:[%s14 + $0x68] sm:$0xff] %v962
    %979 = vst [vmem:[%s14 + $0x70] sm:$0xff] %v963
    %980 = vst [vmem:[%s14 + $0x78] sm:$0xff] %v964
    %v981 = vld [vmem:[%s9] sm:$0x1]
    %v982 = vld [vmem:[%s5] sm:$0x1]
    %v983 = vsub.f32 %v982, %v981
    %v984 = vmul.f32 %v983, 0.01
    %v985 = vadd.f32 %v981, %v984
    %986 = vst [vmem:[%s15] sm:$0x1] %v985
    %v987 = vld [vmem:[%s1] sm:$0xff]
    %v988 = vld [vmem:[%s1 + $0x8] sm:$0xff]
    %v989 = vld [vmem:[%s1 + $0x10] sm:$0xff]
    %v990 = vld [vmem:[%s1 + $0x18] sm:$0xff]
    %v991 = vld [vmem:[%s1 + $0x20] sm:$0xff]
    %v992 = vld [vmem:[%s1 + $0x28] sm:$0xff]
    %v993 = vld [vmem:[%s1 + $0x30] sm:$0xff]
    %v994 = vld [vmem:[%s1 + $0x38] sm:$0xff]
    %v995 = vpack.c.bf16 %v987, %v987
    %v996 = vpack.c.bf16 %v988, %v988
    %v997 = vpack.c.bf16 %v989, %v989
    %v998 = vpack.c.bf16 %v990, %v990
    %v999 = vpack.c.bf16 %v991, %v991
    %v1000 = vpack.c.bf16 %v992, %v992
    %v1001 = vpack.c.bf16 %v993, %v993
    %v1002 = vpack.c.bf16 %v994, %v994
    %v1003 = vld [vmem:[#allocation6] sm:$0xff]
    %v1004 = vld [vmem:[#allocation6 + $0x8] sm:$0xff]
    %v1005 = vld [vmem:[#allocation6 + $0x10] sm:$0xff]
    %v1006 = vld [vmem:[#allocation6 + $0x18] sm:$0xff]
    %v1007 = vld [vmem:[#allocation6 + $0x20] sm:$0xff]
    %v1008 = vld [vmem:[#allocation6 + $0x28] sm:$0xff]
    %v1009 = vld [vmem:[#allocation6 + $0x30] sm:$0xff]
    %v1010 = vld [vmem:[#allocation6 + $0x38] sm:$0xff]
    %v1011 = vld [vmem:[#allocation6 + $0x40] sm:$0xff]
    %v1012 = vld [vmem:[#allocation6 + $0x48] sm:$0xff]
    %v1013 = vld [vmem:[#allocation6 + $0x50] sm:$0xff]
    %v1014 = vld [vmem:[#allocation6 + $0x58] sm:$0xff]
    %v1015 = vld [vmem:[#allocation6 + $0x60] sm:$0xff]
    %v1016 = vld [vmem:[#allocation6 + $0x68] sm:$0xff]
    %v1017 = vld [vmem:[#allocation6 + $0x70] sm:$0xff]
    %v1018 = vld [vmem:[#allocation6 + $0x78] sm:$0xff]
    %v1019 = vld [vmem:[#allocation6 + $0x80] sm:$0xff]
    %v1020 = vld [vmem:[#allocation6 + $0x88] sm:$0xff]
    %v1021 = vld [vmem:[#allocation6 + $0x90] sm:$0xff]
    %v1022 = vld [vmem:[#allocation6 + $0x98] sm:$0xff]
    %v1023 = vld [vmem:[#allocation6 + $0xa0] sm:$0xff]
    %v1024 = vld [vmem:[#allocation6 + $0xa8] sm:$0xff]
    %v1025 = vld [vmem:[#allocation6 + $0xb0] sm:$0xff]
    %v1026 = vld [vmem:[#allocation6 + $0xb8] sm:$0xff]
    %v1027 = vld [vmem:[#allocation6 + $0xc0] sm:$0xff]
    %v1028 = vld [vmem:[#allocation6 + $0xc8] sm:$0xff]
    %v1029 = vld [vmem:[#allocation6 + $0xd0] sm:$0xff]
    %v1030 = vld [vmem:[#allocation6 + $0xd8] sm:$0xff]
    %v1031 = vld [vmem:[#allocation6 + $0xe0] sm:$0xff]
    %v1032 = vld [vmem:[#allocation6 + $0xe8] sm:$0xff]
    %v1033 = vld [vmem:[#allocation6 + $0xf0] sm:$0xff]
    %v1034 = vld [vmem:[#allocation6 + $0xf8] sm:$0xff]
    %v1035 = vld [vmem:[#allocation6 + $0x100] sm:$0xff]
    %v1036 = vld [vmem:[#allocation6 + $0x108] sm:$0xff]
    %v1037 = vld [vmem:[#allocation6 + $0x110] sm:$0xff]
    %v1038 = vld [vmem:[#allocation6 + $0x118] sm:$0xff]
    %v1039 = vld [vmem:[#allocation6 + $0x120] sm:$0xff]
    %v1040 = vld [vmem:[#allocation6 + $0x128] sm:$0xff]
    %v1041 = vld [vmem:[#allocation6 + $0x130] sm:$0xff]
    %v1042 = vld [vmem:[#allocation6 + $0x138] sm:$0xff]
    %v1043 = vld [vmem:[#allocation6 + $0x140] sm:$0xff]
    %v1044 = vld [vmem:[#allocation6 + $0x148] sm:$0xff]
    %v1045 = vld [vmem:[#allocation6 + $0x150] sm:$0xff]
    %v1046 = vld [vmem:[#allocation6 + $0x158] sm:$0xff]
    %v1047 = vld [vmem:[#allocation6 + $0x160] sm:$0xff]
    %v1048 = vld [vmem:[#allocation6 + $0x168] sm:$0xff]
    %v1049 = vld [vmem:[#allocation6 + $0x170] sm:$0xff]
    %v1050 = vld [vmem:[#allocation6 + $0x178] sm:$0xff]
    %v1051 = vld [vmem:[#allocation6 + $0x180] sm:$0xff]
    %v1052 = vld [vmem:[#allocation6 + $0x188] sm:$0xff]
    %v1053 = vld [vmem:[#allocation6 + $0x190] sm:$0xff]
    %v1054 = vld [vmem:[#allocation6 + $0x198] sm:$0xff]
    %v1055 = vld [vmem:[#allocation6 + $0x1a0] sm:$0xff]
    %v1056 = vld [vmem:[#allocation6 + $0x1a8] sm:$0xff]
    %v1057 = vld [vmem:[#allocation6 + $0x1b0] sm:$0xff]
    %v1058 = vld [vmem:[#allocation6 + $0x1b8] sm:$0xff]
    %v1059 = vld [vmem:[#allocation6 + $0x1c0] sm:$0xff]
    %v1060 = vld [vmem:[#allocation6 + $0x1c8] sm:$0xff]
    %v1061 = vld [vmem:[#allocation6 + $0x1d0] sm:$0xff]
    %v1062 = vld [vmem:[#allocation6 + $0x1d8] sm:$0xff]
    %v1063 = vld [vmem:[#allocation6 + $0x1e0] sm:$0xff]
    %v1064 = vld [vmem:[#allocation6 + $0x1e8] sm:$0xff]
    %v1065 = vld [vmem:[#allocation6 + $0x1f0] sm:$0xff]
    %v1066 = vld [vmem:[#allocation6 + $0x1f8] sm:$0xff]
    %v1067 = vld [vmem:[#allocation6 + $0x200] sm:$0xff]
    %v1068 = vld [vmem:[#allocation6 + $0x208] sm:$0xff]
    %v1069 = vld [vmem:[#allocation6 + $0x210] sm:$0xff]
    %v1070 = vld [vmem:[#allocation6 + $0x218] sm:$0xff]
    %v1071 = vld [vmem:[#allocation6 + $0x220] sm:$0xff]
    %v1072 = vld [vmem:[#allocation6 + $0x228] sm:$0xff]
    %v1073 = vld [vmem:[#allocation6 + $0x230] sm:$0xff]
    %v1074 = vld [vmem:[#allocation6 + $0x238] sm:$0xff]
    %v1075 = vld [vmem:[#allocation6 + $0x240] sm:$0xff]
    %v1076 = vld [vmem:[#allocation6 + $0x248] sm:$0xff]
    %v1077 = vld [vmem:[#allocation6 + $0x250] sm:$0xff]
    %v1078 = vld [vmem:[#allocation6 + $0x258] sm:$0xff]
    %v1079 = vld [vmem:[#allocation6 + $0x260] sm:$0xff]
    %v1080 = vld [vmem:[#allocation6 + $0x268] sm:$0xff]
    %v1081 = vld [vmem:[#allocation6 + $0x270] sm:$0xff]
    %v1082 = vld [vmem:[#allocation6 + $0x278] sm:$0xff]
    %v1083 = vld [vmem:[#allocation6 + $0x280] sm:$0xff]
    %v1084 = vld [vmem:[#allocation6 + $0x288] sm:$0xff]
    %v1085 = vld [vmem:[#allocation6 + $0x290] sm:$0xff]
    %v1086 = vld [vmem:[#allocation6 + $0x298] sm:$0xff]
    %v1087 = vld [vmem:[#allocation6 + $0x2a0] sm:$0xff]
    %v1088 = vld [vmem:[#allocation6 + $0x2a8] sm:$0xff]
    %v1089 = vld [vmem:[#allocation6 + $0x2b0] sm:$0xff]
    %v1090 = vld [vmem:[#allocation6 + $0x2b8] sm:$0xff]
    %v1091 = vld [vmem:[#allocation6 + $0x2c0] sm:$0xff]
    %v1092 = vld [vmem:[#allocation6 + $0x2c8] sm:$0xff]
    %v1093 = vld [vmem:[#allocation6 + $0x2d0] sm:$0xff]
    %v1094 = vld [vmem:[#allocation6 + $0x2d8] sm:$0xff]
    %v1095 = vld [vmem:[#allocation6 + $0x2e0] sm:$0xff]
    %v1096 = vld [vmem:[#allocation6 + $0x2e8] sm:$0xff]
    %v1097 = vld [vmem:[#allocation6 + $0x2f0] sm:$0xff]
    %v1098 = vld [vmem:[#allocation6 + $0x2f8] sm:$0xff]
    %v1099 = vld [vmem:[#allocation6 + $0x300] sm:$0xff]
    %v1100 = vld [vmem:[#allocation6 + $0x308] sm:$0xff]
    %v1101 = vld [vmem:[#allocation6 + $0x310] sm:$0xff]
    %v1102 = vld [vmem:[#allocation6 + $0x318] sm:$0xff]
    %v1103 = vld [vmem:[#allocation6 + $0x320] sm:$0xff]
    %v1104 = vld [vmem:[#allocation6 + $0x328] sm:$0xff]
    %v1105 = vld [vmem:[#allocation6 + $0x330] sm:$0xff]
    %v1106 = vld [vmem:[#allocation6 + $0x338] sm:$0xff]
    %v1107 = vld [vmem:[#allocation6 + $0x340] sm:$0xff]
    %v1108 = vld [vmem:[#allocation6 + $0x348] sm:$0xff]
    %v1109 = vld [vmem:[#allocation6 + $0x350] sm:$0xff]
    %v1110 = vld [vmem:[#allocation6 + $0x358] sm:$0xff]
    %v1111 = vld [vmem:[#allocation6 + $0x360] sm:$0xff]
    %v1112 = vld [vmem:[#allocation6 + $0x368] sm:$0xff]
    %v1113 = vld [vmem:[#allocation6 + $0x370] sm:$0xff]
    %v1114 = vld [vmem:[#allocation6 + $0x378] sm:$0xff]
    %v1115 = vld [vmem:[#allocation6 + $0x380] sm:$0xff]
    %v1116 = vld [vmem:[#allocation6 + $0x388] sm:$0xff]
    %v1117 = vld [vmem:[#allocation6 + $0x390] sm:$0xff]
    %v1118 = vld [vmem:[#allocation6 + $0x398] sm:$0xff]
    %v1119 = vld [vmem:[#allocation6 + $0x3a0] sm:$0xff]
    %v1120 = vld [vmem:[#allocation6 + $0x3a8] sm:$0xff]
    %v1121 = vld [vmem:[#allocation6 + $0x3b0] sm:$0xff]
    %v1122 = vld [vmem:[#allocation6 + $0x3b8] sm:$0xff]
    %v1123 = vld [vmem:[#allocation6 + $0x3c0] sm:$0xff]
    %v1124 = vld [vmem:[#allocation6 + $0x3c8] sm:$0xff]
    %v1125 = vld [vmem:[#allocation6 + $0x3d0] sm:$0xff]
    %v1126 = vld [vmem:[#allocation6 + $0x3d8] sm:$0xff]
    %v1127 = vld [vmem:[#allocation6 + $0x3e0] sm:$0xff]
    %v1128 = vld [vmem:[#allocation6 + $0x3e8] sm:$0xff]
    %v1129 = vld [vmem:[#allocation6 + $0x3f0] sm:$0xff]
    %v1130 = vld [vmem:[#allocation6 + $0x3f8] sm:$0xff]
    %v1131 = vpack.c.bf16 %v1003, %v1003
    %v1132 = vpack.c.bf16 %v1004, %v1004
    %v1133 = vpack.c.bf16 %v1005, %v1005
    %v1134 = vpack.c.bf16 %v1006, %v1006
    %v1135 = vpack.c.bf16 %v1007, %v1007
    %v1136 = vpack.c.bf16 %v1008, %v1008
    %v1137 = vpack.c.bf16 %v1009, %v1009
    %v1138 = vpack.c.bf16 %v1010, %v1010
    %v1139 = vpack.c.bf16 %v1011, %v1011
    %v1140 = vpack.c.bf16 %v1012, %v1012
    %v1141 = vpack.c.bf16 %v1013, %v1013
    %v1142 = vpack.c.bf16 %v1014, %v1014
    %v1143 = vpack.c.bf16 %v1015, %v1015
    %v1144 = vpack.c.bf16 %v1016, %v1016
    %v1145 = vpack.c.bf16 %v1017, %v1017
    %v1146 = vpack.c.bf16 %v1018, %v1018
    %v1147 = vpack.c.bf16 %v1019, %v1019
    %v1148 = vpack.c.bf16 %v1020, %v1020
    %v1149 = vpack.c.bf16 %v1021, %v1021
    %v1150 = vpack.c.bf16 %v1022, %v1022
    %v1151 = vpack.c.bf16 %v1023, %v1023
    %v1152 = vpack.c.bf16 %v1024, %v1024
    %v1153 = vpack.c.bf16 %v1025, %v1025
    %v1154 = vpack.c.bf16 %v1026, %v1026
    %v1155 = vpack.c.bf16 %v1027, %v1027
    %v1156 = vpack.c.bf16 %v1028, %v1028
    %v1157 = vpack.c.bf16 %v1029, %v1029
    %v1158 = vpack.c.bf16 %v1030, %v1030
    %v1159 = vpack.c.bf16 %v1031, %v1031
    %v1160 = vpack.c.bf16 %v1032, %v1032
    %v1161 = vpack.c.bf16 %v1033, %v1033
    %v1162 = vpack.c.bf16 %v1034, %v1034
    %v1163 = vpack.c.bf16 %v1035, %v1035
    %v1164 = vpack.c.bf16 %v1036, %v1036
    %v1165 = vpack.c.bf16 %v1037, %v1037
    %v1166 = vpack.c.bf16 %v1038, %v1038
    %v1167 = vpack.c.bf16 %v1039, %v1039
    %v1168 = vpack.c.bf16 %v1040, %v1040
    %v1169 = vpack.c.bf16 %v1041, %v1041
    %v1170 = vpack.c.bf16 %v1042, %v1042
    %v1171 = vpack.c.bf16 %v1043, %v1043
    %v1172 = vpack.c.bf16 %v1044, %v1044
    %v1173 = vpack.c.bf16 %v1045, %v1045
    %v1174 = vpack.c.bf16 %v1046, %v1046
    %v1175 = vpack.c.bf16 %v1047, %v1047
    %v1176 = vpack.c.bf16 %v1048, %v1048
    %v1177 = vpack.c.bf16 %v1049, %v1049
    %v1178 = vpack.c.bf16 %v1050, %v1050
    %v1179 = vpack.c.bf16 %v1051, %v1051
    %v1180 = vpack.c.bf16 %v1052, %v1052
    %v1181 = vpack.c.bf16 %v1053, %v1053
    %v1182 = vpack.c.bf16 %v1054, %v1054
    %v1183 = vpack.c.bf16 %v1055, %v1055
    %v1184 = vpack.c.bf16 %v1056, %v1056
    %v1185 = vpack.c.bf16 %v1057, %v1057
    %v1186 = vpack.c.bf16 %v1058, %v1058
    %v1187 = vpack.c.bf16 %v1059, %v1059
    %v1188 = vpack.c.bf16 %v1060, %v1060
    %v1189 = vpack.c.bf16 %v1061, %v1061
    %v1190 = vpack.c.bf16 %v1062, %v1062
    %v1191 = vpack.c.bf16 %v1063, %v1063
    %v1192 = vpack.c.bf16 %v1064, %v1064
    %v1193 = vpack.c.bf16 %v1065, %v1065
    %v1194 = vpack.c.bf16 %v1066, %v1066
    %v1195 = vpack.c.bf16 %v1067, %v1067
    %v1196 = vpack.c.bf16 %v1068, %v1068
    %v1197 = vpack.c.bf16 %v1069, %v1069
    %v1198 = vpack.c.bf16 %v1070, %v1070
    %v1199 = vpack.c.bf16 %v1071, %v1071
    %v1200 = vpack.c.bf16 %v1072, %v1072
    %v1201 = vpack.c.bf16 %v1073, %v1073
    %v1202 = vpack.c.bf16 %v1074, %v1074
    %v1203 = vpack.c.bf16 %v1075, %v1075
    %v1204 = vpack.c.bf16 %v1076, %v1076
    %v1205 = vpack.c.bf16 %v1077, %v1077
    %v1206 = vpack.c.bf16 %v1078, %v1078
    %v1207 = vpack.c.bf16 %v1079, %v1079
    %v1208 = vpack.c.bf16 %v1080, %v1080
    %v1209 = vpack.c.bf16 %v1081, %v1081
    %v1210 = vpack.c.bf16 %v1082, %v1082
    %v1211 = vpack.c.bf16 %v1083, %v1083
    %v1212 = vpack.c.bf16 %v1084, %v1084
    %v1213 = vpack.c.bf16 %v1085, %v1085
    %v1214 = vpack.c.bf16 %v1086, %v1086
    %v1215 = vpack.c.bf16 %v1087, %v1087
    %v1216 = vpack.c.bf16 %v1088, %v1088
    %v1217 = vpack.c.bf16 %v1089, %v1089
    %v1218 = vpack.c.bf16 %v1090, %v1090
    %v1219 = vpack.c.bf16 %v1091, %v1091
    %v1220 = vpack.c.bf16 %v1092, %v1092
    %v1221 = vpack.c.bf16 %v1093, %v1093
    %v1222 = vpack.c.bf16 %v1094, %v1094
    %v1223 = vpack.c.bf16 %v1095, %v1095
    %v1224 = vpack.c.bf16 %v1096, %v1096
    %v1225 = vpack.c.bf16 %v1097, %v1097
    %v1226 = vpack.c.bf16 %v1098, %v1098
    %v1227 = vpack.c.bf16 %v1099, %v1099
    %v1228 = vpack.c.bf16 %v1100, %v1100
    %v1229 = vpack.c.bf16 %v1101, %v1101
    %v1230 = vpack.c.bf16 %v1102, %v1102
    %v1231 = vpack.c.bf16 %v1103, %v1103
    %v1232 = vpack.c.bf16 %v1104, %v1104
    %v1233 = vpack.c.bf16 %v1105, %v1105
    %v1234 = vpack.c.bf16 %v1106, %v1106
    %v1235 = vpack.c.bf16 %v1107, %v1107
    %v1236 = vpack.c.bf16 %v1108, %v1108
    %v1237 = vpack.c.bf16 %v1109, %v1109
    %v1238 = vpack.c.bf16 %v1110, %v1110
    %v1239 = vpack.c.bf16 %v1111, %v1111
    %v1240 = vpack.c.bf16 %v1112, %v1112
    %v1241 = vpack.c.bf16 %v1113, %v1113
    %v1242 = vpack.c.bf16 %v1114, %v1114
    %v1243 = vpack.c.bf16 %v1115, %v1115
    %v1244 = vpack.c.bf16 %v1116, %v1116
    %v1245 = vpack.c.bf16 %v1117, %v1117
    %v1246 = vpack.c.bf16 %v1118, %v1118
    %v1247 = vpack.c.bf16 %v1119, %v1119
    %v1248 = vpack.c.bf16 %v1120, %v1120
    %v1249 = vpack.c.bf16 %v1121, %v1121
    %v1250 = vpack.c.bf16 %v1122, %v1122
    %v1251 = vpack.c.bf16 %v1123, %v1123
    %v1252 = vpack.c.bf16 %v1124, %v1124
    %v1253 = vpack.c.bf16 %v1125, %v1125
    %v1254 = vpack.c.bf16 %v1126, %v1126
    %v1255 = vpack.c.bf16 %v1127, %v1127
    %v1256 = vpack.c.bf16 %v1128, %v1128
    %v1257 = vpack.c.bf16 %v1129, %v1129
    %v1258 = vpack.c.bf16 %v1130, %v1130
    %v1259 = vld [vmem:[%s12] sm:$0xff]
    %v1260 = vld [vmem:[%s12 + $0x8] sm:$0xff]
    %v1261 = vld [vmem:[%s12 + $0x10] sm:$0xff]
    %v1262 = vld [vmem:[%s12 + $0x18] sm:$0xff]
    %v1263 = vld [vmem:[%s12 + $0x20] sm:$0xff]
    %v1264 = vld [vmem:[%s12 + $0x28] sm:$0xff]
    %v1265 = vld [vmem:[%s12 + $0x30] sm:$0xff]
    %v1266 = vld [vmem:[%s12 + $0x38] sm:$0xff]
    %v1267 = vld [vmem:[%s12 + $0x40] sm:$0xff]
    %v1268 = vld [vmem:[%s12 + $0x48] sm:$0xff]
    %v1269 = vld [vmem:[%s12 + $0x50] sm:$0xff]
    %v1270 = vld [vmem:[%s12 + $0x58] sm:$0xff]
    %v1271 = vld [vmem:[%s12 + $0x60] sm:$0xff]
    %v1272 = vld [vmem:[%s12 + $0x68] sm:$0xff]
    %v1273 = vld [vmem:[%s12 + $0x70] sm:$0xff]
    %v1274 = vld [vmem:[%s12 + $0x78] sm:$0xff]
    %v1275 = vld [vmem:[%s12 + $0x80] sm:$0xff]
    %v1276 = vld [vmem:[%s12 + $0x88] sm:$0xff]
    %v1277 = vld [vmem:[%s12 + $0x90] sm:$0xff]
    %v1278 = vld [vmem:[%s12 + $0x98] sm:$0xff]
    %v1279 = vld [vmem:[%s12 + $0xa0] sm:$0xff]
    %v1280 = vld [vmem:[%s12 + $0xa8] sm:$0xff]
    %v1281 = vld [vmem:[%s12 + $0xb0] sm:$0xff]
    %v1282 = vld [vmem:[%s12 + $0xb8] sm:$0xff]
    %v1283 = vld [vmem:[%s12 + $0xc0] sm:$0xff]
    %v1284 = vld [vmem:[%s12 + $0xc8] sm:$0xff]
    %v1285 = vld [vmem:[%s12 + $0xd0] sm:$0xff]
    %v1286 = vld [vmem:[%s12 + $0xd8] sm:$0xff]
    %v1287 = vld [vmem:[%s12 + $0xe0] sm:$0xff]
    %v1288 = vld [vmem:[%s12 + $0xe8] sm:$0xff]
    %v1289 = vld [vmem:[%s12 + $0xf0] sm:$0xff]
    %v1290 = vld [vmem:[%s12 + $0xf8] sm:$0xff]
    %v1291 = vld [vmem:[%s12 + $0x100] sm:$0xff]
    %v1292 = vld [vmem:[%s12 + $0x108] sm:$0xff]
    %v1293 = vld [vmem:[%s12 + $0x110] sm:$0xff]
    %v1294 = vld [vmem:[%s12 + $0x118] sm:$0xff]
    %v1295 = vld [vmem:[%s12 + $0x120] sm:$0xff]
    %v1296 = vld [vmem:[%s12 + $0x128] sm:$0xff]
    %v1297 = vld [vmem:[%s12 + $0x130] sm:$0xff]
    %v1298 = vld [vmem:[%s12 + $0x138] sm:$0xff]
    %v1299 = vld [vmem:[%s12 + $0x140] sm:$0xff]
    %v1300 = vld [vmem:[%s12 + $0x148] sm:$0xff]
    %v1301 = vld [vmem:[%s12 + $0x150] sm:$0xff]
    %v1302 = vld [vmem:[%s12 + $0x158] sm:$0xff]
    %v1303 = vld [vmem:[%s12 + $0x160] sm:$0xff]
    %v1304 = vld [vmem:[%s12 + $0x168] sm:$0xff]
    %v1305 = vld [vmem:[%s12 + $0x170] sm:$0xff]
    %v1306 = vld [vmem:[%s12 + $0x178] sm:$0xff]
    %v1307 = vld [vmem:[%s12 + $0x180] sm:$0xff]
    %v1308 = vld [vmem:[%s12 + $0x188] sm:$0xff]
    %v1309 = vld [vmem:[%s12 + $0x190] sm:$0xff]
    %v1310 = vld [vmem:[%s12 + $0x198] sm:$0xff]
    %v1311 = vld [vmem:[%s12 + $0x1a0] sm:$0xff]
    %v1312 = vld [vmem:[%s12 + $0x1a8] sm:$0xff]
    %v1313 = vld [vmem:[%s12 + $0x1b0] sm:$0xff]
    %v1314 = vld [vmem:[%s12 + $0x1b8] sm:$0xff]
    %v1315 = vld [vmem:[%s12 + $0x1c0] sm:$0xff]
    %v1316 = vld [vmem:[%s12 + $0x1c8] sm:$0xff]
    %v1317 = vld [vmem:[%s12 + $0x1d0] sm:$0xff]
    %v1318 = vld [vmem:[%s12 + $0x1d8] sm:$0xff]
    %v1319 = vld [vmem:[%s12 + $0x1e0] sm:$0xff]
    %v1320 = vld [vmem:[%s12 + $0x1e8] sm:$0xff]
    %v1321 = vld [vmem:[%s12 + $0x1f0] sm:$0xff]
    %v1322 = vld [vmem:[%s12 + $0x1f8] sm:$0xff]
    %v1323 = vld [vmem:[%s12 + $0x200] sm:$0xff]
    %v1324 = vld [vmem:[%s12 + $0x208] sm:$0xff]
    %v1325 = vld [vmem:[%s12 + $0x210] sm:$0xff]
    %v1326 = vld [vmem:[%s12 + $0x218] sm:$0xff]
    %v1327 = vld [vmem:[%s12 + $0x220] sm:$0xff]
    %v1328 = vld [vmem:[%s12 + $0x228] sm:$0xff]
    %v1329 = vld [vmem:[%s12 + $0x230] sm:$0xff]
    %v1330 = vld [vmem:[%s12 + $0x238] sm:$0xff]
    %v1331 = vld [vmem:[%s12 + $0x240] sm:$0xff]
    %v1332 = vld [vmem:[%s12 + $0x248] sm:$0xff]
    %v1333 = vld [vmem:[%s12 + $0x250] sm:$0xff]
    %v1334 = vld [vmem:[%s12 + $0x258] sm:$0xff]
    %v1335 = vld [vmem:[%s12 + $0x260] sm:$0xff]
    %v1336 = vld [vmem:[%s12 + $0x268] sm:$0xff]
    %v1337 = vld [vmem:[%s12 + $0x270] sm:$0xff]
    %v1338 = vld [vmem:[%s12 + $0x278] sm:$0xff]
    %v1339 = vld [vmem:[%s12 + $0x280] sm:$0xff]
    %v1340 = vld [vmem:[%s12 + $0x288] sm:$0xff]
    %v1341 = vld [vmem:[%s12 + $0x290] sm:$0xff]
    %v1342 = vld [vmem:[%s12 + $0x298] sm:$0xff]
    %v1343 = vld [vmem:[%s12 + $0x2a0] sm:$0xff]
    %v1344 = vld [vmem:[%s12 + $0x2a8] sm:$0xff]
    %v1345 = vld [vmem:[%s12 + $0x2b0] sm:$0xff]
    %v1346 = vld [vmem:[%s12 + $0x2b8] sm:$0xff]
    %v1347 = vld [vmem:[%s12 + $0x2c0] sm:$0xff]
    %v1348 = vld [vmem:[%s12 + $0x2c8] sm:$0xff]
    %v1349 = vld [vmem:[%s12 + $0x2d0] sm:$0xff]
    %v1350 = vld [vmem:[%s12 + $0x2d8] sm:$0xff]
    %v1351 = vld [vmem:[%s12 + $0x2e0] sm:$0xff]
    %v1352 = vld [vmem:[%s12 + $0x2e8] sm:$0xff]
    %v1353 = vld [vmem:[%s12 + $0x2f0] sm:$0xff]
    %v1354 = vld [vmem:[%s12 + $0x2f8] sm:$0xff]
    %v1355 = vld [vmem:[%s12 + $0x300] sm:$0xff]
    %v1356 = vld [vmem:[%s12 + $0x308] sm:$0xff]
    %v1357 = vld [vmem:[%s12 + $0x310] sm:$0xff]
    %v1358 = vld [vmem:[%s12 + $0x318] sm:$0xff]
    %v1359 = vld [vmem:[%s12 + $0x320] sm:$0xff]
    %v1360 = vld [vmem:[%s12 + $0x328] sm:$0xff]
    %v1361 = vld [vmem:[%s12 + $0x330] sm:$0xff]
    %v1362 = vld [vmem:[%s12 + $0x338] sm:$0xff]
    %v1363 = vld [vmem:[%s12 + $0x340] sm:$0xff]
    %v1364 = vld [vmem:[%s12 + $0x348] sm:$0xff]
    %v1365 = vld [vmem:[%s12 + $0x350] sm:$0xff]
    %v1366 = vld [vmem:[%s12 + $0x358] sm:$0xff]
    %v1367 = vld [vmem:[%s12 + $0x360] sm:$0xff]
    %v1368 = vld [vmem:[%s12 + $0x368] sm:$0xff]
    %v1369 = vld [vmem:[%s12 + $0x370] sm:$0xff]
    %v1370 = vld [vmem:[%s12 + $0x378] sm:$0xff]
    %v1371 = vld [vmem:[%s12 + $0x380] sm:$0xff]
    %v1372 = vld [vmem:[%s12 + $0x388] sm:$0xff]
    %v1373 = vld [vmem:[%s12 + $0x390] sm:$0xff]
    %v1374 = vld [vmem:[%s12 + $0x398] sm:$0xff]
    %v1375 = vld [vmem:[%s12 + $0x3a0] sm:$0xff]
    %v1376 = vld [vmem:[%s12 + $0x3a8] sm:$0xff]
    %v1377 = vld [vmem:[%s12 + $0x3b0] sm:$0xff]
    %v1378 = vld [vmem:[%s12 + $0x3b8] sm:$0xff]
    %v1379 = vld [vmem:[%s12 + $0x3c0] sm:$0xff]
    %v1380 = vld [vmem:[%s12 + $0x3c8] sm:$0xff]
    %v1381 = vld [vmem:[%s12 + $0x3d0] sm:$0xff]
    %v1382 = vld [vmem:[%s12 + $0x3d8] sm:$0xff]
    %v1383 = vld [vmem:[%s12 + $0x3e0] sm:$0xff]
    %v1384 = vld [vmem:[%s12 + $0x3e8] sm:$0xff]
    %v1385 = vld [vmem:[%s12 + $0x3f0] sm:$0xff]
    %v1386 = vld [vmem:[%s12 + $0x3f8] sm:$0xff]
    %v1387 = vpack.c.bf16 %v1259, %v1259
    %v1388 = vpack.c.bf16 %v1260, %v1260
    %v1389 = vpack.c.bf16 %v1261, %v1261
    %v1390 = vpack.c.bf16 %v1262, %v1262
    %v1391 = vpack.c.bf16 %v1263, %v1263
    %v1392 = vpack.c.bf16 %v1264, %v1264
    %v1393 = vpack.c.bf16 %v1265, %v1265
    %v1394 = vpack.c.bf16 %v1266, %v1266
    %v1395 = vpack.c.bf16 %v1267, %v1267
    %v1396 = vpack.c.bf16 %v1268, %v1268
    %v1397 = vpack.c.bf16 %v1269, %v1269
    %v1398 = vpack.c.bf16 %v1270, %v1270
    %v1399 = vpack.c.bf16 %v1271, %v1271
    %v1400 = vpack.c.bf16 %v1272, %v1272
    %v1401 = vpack.c.bf16 %v1273, %v1273
    %v1402 = vpack.c.bf16 %v1274, %v1274
    %v1403 = vpack.c.bf16 %v1275, %v1275
    %v1404 = vpack.c.bf16 %v1276, %v1276
    %v1405 = vpack.c.bf16 %v1277, %v1277
    %v1406 = vpack.c.bf16 %v1278, %v1278
    %v1407 = vpack.c.bf16 %v1279, %v1279
    %v1408 = vpack.c.bf16 %v1280, %v1280
    %v1409 = vpack.c.bf16 %v1281, %v1281
    %v1410 = vpack.c.bf16 %v1282, %v1282
    %v1411 = vpack.c.bf16 %v1283, %v1283
    %v1412 = vpack.c.bf16 %v1284, %v1284
    %v1413 = vpack.c.bf16 %v1285, %v1285
    %v1414 = vpack.c.bf16 %v1286, %v1286
    %v1415 = vpack.c.bf16 %v1287, %v1287
    %v1416 = vpack.c.bf16 %v1288, %v1288
    %v1417 = vpack.c.bf16 %v1289, %v1289
    %v1418 = vpack.c.bf16 %v1290, %v1290
    %v1419 = vpack.c.bf16 %v1291, %v1291
    %v1420 = vpack.c.bf16 %v1292, %v1292
    %v1421 = vpack.c.bf16 %v1293, %v1293
    %v1422 = vpack.c.bf16 %v1294, %v1294
    %v1423 = vpack.c.bf16 %v1295, %v1295
    %v1424 = vpack.c.bf16 %v1296, %v1296
    %v1425 = vpack.c.bf16 %v1297, %v1297
    %v1426 = vpack.c.bf16 %v1298, %v1298
    %v1427 = vpack.c.bf16 %v1299, %v1299
    %v1428 = vpack.c.bf16 %v1300, %v1300
    %v1429 = vpack.c.bf16 %v1301, %v1301
    %v1430 = vpack.c.bf16 %v1302, %v1302
    %v1431 = vpack.c.bf16 %v1303, %v1303
    %v1432 = vpack.c.bf16 %v1304, %v1304
    %v1433 = vpack.c.bf16 %v1305, %v1305
    %v1434 = vpack.c.bf16 %v1306, %v1306
    %v1435 = vpack.c.bf16 %v1307, %v1307
    %v1436 = vpack.c.bf16 %v1308, %v1308
    %v1437 = vpack.c.bf16 %v1309, %v1309
    %v1438 = vpack.c.bf16 %v1310, %v1310
    %v1439 = vpack.c.bf16 %v1311, %v1311
    %v1440 = vpack.c.bf16 %v1312, %v1312
    %v1441 = vpack.c.bf16 %v1313, %v1313
    %v1442 = vpack.c.bf16 %v1314, %v1314
    %v1443 = vpack.c.bf16 %v1315, %v1315
    %v1444 = vpack.c.bf16 %v1316, %v1316
    %v1445 = vpack.c.bf16 %v1317, %v1317
    %v1446 = vpack.c.bf16 %v1318, %v1318
    %v1447 = vpack.c.bf16 %v1319, %v1319
    %v1448 = vpack.c.bf16 %v1320, %v1320
    %v1449 = vpack.c.bf16 %v1321, %v1321
    %v1450 = vpack.c.bf16 %v1322, %v1322
    %v1451 = vpack.c.bf16 %v1323, %v1323
    %v1452 = vpack.c.bf16 %v1324, %v1324
    %v1453 = vpack.c.bf16 %v1325, %v1325
    %v1454 = vpack.c.bf16 %v1326, %v1326
    %v1455 = vpack.c.bf16 %v1327, %v1327
    %v1456 = vpack.c.bf16 %v1328, %v1328
    %v1457 = vpack.c.bf16 %v1329, %v1329
    %v1458 = vpack.c.bf16 %v1330, %v1330
    %v1459 = vpack.c.bf16 %v1331, %v1331
    %v1460 = vpack.c.bf16 %v1332, %v1332
    %v1461 = vpack.c.bf16 %v1333, %v1333
    %v1462 = vpack.c.bf16 %v1334, %v1334
    %v1463 = vpack.c.bf16 %v1335, %v1335
    %v1464 = vpack.c.bf16 %v1336, %v1336
    %v1465 = vpack.c.bf16 %v1337, %v1337
    %v1466 = vpack.c.bf16 %v1338, %v1338
    %v1467 = vpack.c.bf16 %v1339, %v1339
    %v1468 = vpack.c.bf16 %v1340, %v1340
    %v1469 = vpack.c.bf16 %v1341, %v1341
    %v1470 = vpack.c.bf16 %v1342, %v1342
    %v1471 = vpack.c.bf16 %v1343, %v1343
    %v1472 = vpack.c.bf16 %v1344, %v1344
    %v1473 = vpack.c.bf16 %v1345, %v1345
    %v1474 = vpack.c.bf16 %v1346, %v1346
    %v1475 = vpack.c.bf16 %v1347, %v1347
    %v1476 = vpack.c.bf16 %v1348, %v1348
    %v1477 = vpack.c.bf16 %v1349, %v1349
    %v1478 = vpack.c.bf16 %v1350, %v1350
    %v1479 = vpack.c.bf16 %v1351, %v1351
    %v1480 = vpack.c.bf16 %v1352, %v1352
    %v1481 = vpack.c.bf16 %v1353, %v1353
    %v1482 = vpack.c.bf16 %v1354, %v1354
    %v1483 = vpack.c.bf16 %v1355, %v1355
    %v1484 = vpack.c.bf16 %v1356, %v1356
    %v1485 = vpack.c.bf16 %v1357, %v1357
    %v1486 = vpack.c.bf16 %v1358, %v1358
    %v1487 = vpack.c.bf16 %v1359, %v1359
    %v1488 = vpack.c.bf16 %v1360, %v1360
    %v1489 = vpack.c.bf16 %v1361, %v1361
    %v1490 = vpack.c.bf16 %v1362, %v1362
    %v1491 = vpack.c.bf16 %v1363, %v1363
    %v1492 = vpack.c.bf16 %v1364, %v1364
    %v1493 = vpack.c.bf16 %v1365, %v1365
    %v1494 = vpack.c.bf16 %v1366, %v1366
    %v1495 = vpack.c.bf16 %v1367, %v1367
    %v1496 = vpack.c.bf16 %v1368, %v1368
    %v1497 = vpack.c.bf16 %v1369, %v1369
    %v1498 = vpack.c.bf16 %v1370, %v1370
    %v1499 = vpack.c.bf16 %v1371, %v1371
    %v1500 = vpack.c.bf16 %v1372, %v1372
    %v1501 = vpack.c.bf16 %v1373, %v1373
    %v1502 = vpack.c.bf16 %v1374, %v1374
    %v1503 = vpack.c.bf16 %v1375, %v1375
    %v1504 = vpack.c.bf16 %v1376, %v1376
    %v1505 = vpack.c.bf16 %v1377, %v1377
    %v1506 = vpack.c.bf16 %v1378, %v1378
    %v1507 = vpack.c.bf16 %v1379, %v1379
    %v1508 = vpack.c.bf16 %v1380, %v1380
    %v1509 = vpack.c.bf16 %v1381, %v1381
    %v1510 = vpack.c.bf16 %v1382, %v1382
    %v1511 = vpack.c.bf16 %v1383, %v1383
    %v1512 = vpack.c.bf16 %v1384, %v1384
    %v1513 = vpack.c.bf16 %v1385, %v1385
    %v1514 = vpack.c.bf16 %v1386, %v1386
    %v1643 = vunpack.c.l.b16 %v1131
    %v1644 = vunpack.c.l.b16 %v1132
    %v1645 = vunpack.c.l.b16 %v1133
    %v1646 = vunpack.c.l.b16 %v1134
    %v1647 = vunpack.c.l.b16 %v1135
    %v1648 = vunpack.c.l.b16 %v1136
    %v1649 = vunpack.c.l.b16 %v1137
    %v1650 = vunpack.c.l.b16 %v1138
    %v1651 = vunpack.c.l.b16 %v1139
    %v1652 = vunpack.c.l.b16 %v1140
    %v1653 = vunpack.c.l.b16 %v1141
    %v1654 = vunpack.c.l.b16 %v1142
    %v1655 = vunpack.c.l.b16 %v1143
    %v1656 = vunpack.c.l.b16 %v1144
    %v1657 = vunpack.c.l.b16 %v1145
    %v1658 = vunpack.c.l.b16 %v1146
    %v1659 = vunpack.c.l.b16 %v1147
    %v1660 = vunpack.c.l.b16 %v1148
    %v1661 = vunpack.c.l.b16 %v1149
    %v1662 = vunpack.c.l.b16 %v1150
    %v1663 = vunpack.c.l.b16 %v1151
    %v1664 = vunpack.c.l.b16 %v1152
    %v1665 = vunpack.c.l.b16 %v1153
    %v1666 = vunpack.c.l.b16 %v1154
    %v1667 = vunpack.c.l.b16 %v1155
    %v1668 = vunpack.c.l.b16 %v1156
    %v1669 = vunpack.c.l.b16 %v1157
    %v1670 = vunpack.c.l.b16 %v1158
    %v1671 = vunpack.c.l.b16 %v1159
    %v1672 = vunpack.c.l.b16 %v1160
    %v1673 = vunpack.c.l.b16 %v1161
    %v1674 = vunpack.c.l.b16 %v1162
    %v1675 = vunpack.c.l.b16 %v1163
    %v1676 = vunpack.c.l.b16 %v1164
    %v1677 = vunpack.c.l.b16 %v1165
    %v1678 = vunpack.c.l.b16 %v1166
    %v1679 = vunpack.c.l.b16 %v1167
    %v1680 = vunpack.c.l.b16 %v1168
    %v1681 = vunpack.c.l.b16 %v1169
    %v1682 = vunpack.c.l.b16 %v1170
    %v1683 = vunpack.c.l.b16 %v1171
    %v1684 = vunpack.c.l.b16 %v1172
    %v1685 = vunpack.c.l.b16 %v1173
    %v1686 = vunpack.c.l.b16 %v1174
    %v1687 = vunpack.c.l.b16 %v1175
    %v1688 = vunpack.c.l.b16 %v1176
    %v1689 = vunpack.c.l.b16 %v1177
    %v1690 = vunpack.c.l.b16 %v1178
    %v1691 = vunpack.c.l.b16 %v1179
    %v1692 = vunpack.c.l.b16 %v1180
    %v1693 = vunpack.c.l.b16 %v1181
    %v1694 = vunpack.c.l.b16 %v1182
    %v1695 = vunpack.c.l.b16 %v1183
    %v1696 = vunpack.c.l.b16 %v1184
    %v1697 = vunpack.c.l.b16 %v1185
    %v1698 = vunpack.c.l.b16 %v1186
    %v1699 = vunpack.c.l.b16 %v1187
    %v1700 = vunpack.c.l.b16 %v1188
    %v1701 = vunpack.c.l.b16 %v1189
    %v1702 = vunpack.c.l.b16 %v1190
    %v1703 = vunpack.c.l.b16 %v1191
    %v1704 = vunpack.c.l.b16 %v1192
    %v1705 = vunpack.c.l.b16 %v1193
    %v1706 = vunpack.c.l.b16 %v1194
    %v1707 = vunpack.c.l.b16 %v1195
    %v1708 = vunpack.c.l.b16 %v1196
    %v1709 = vunpack.c.l.b16 %v1197
    %v1710 = vunpack.c.l.b16 %v1198
    %v1711 = vunpack.c.l.b16 %v1199
    %v1712 = vunpack.c.l.b16 %v1200
    %v1713 = vunpack.c.l.b16 %v1201
    %v1714 = vunpack.c.l.b16 %v1202
    %v1715 = vunpack.c.l.b16 %v1203
    %v1716 = vunpack.c.l.b16 %v1204
    %v1717 = vunpack.c.l.b16 %v1205
    %v1718 = vunpack.c.l.b16 %v1206
    %v1719 = vunpack.c.l.b16 %v1207
    %v1720 = vunpack.c.l.b16 %v1208
    %v1721 = vunpack.c.l.b16 %v1209
    %v1722 = vunpack.c.l.b16 %v1210
    %v1723 = vunpack.c.l.b16 %v1211
    %v1724 = vunpack.c.l.b16 %v1212
    %v1725 = vunpack.c.l.b16 %v1213
    %v1726 = vunpack.c.l.b16 %v1214
    %v1727 = vunpack.c.l.b16 %v1215
    %v1728 = vunpack.c.l.b16 %v1216
    %v1729 = vunpack.c.l.b16 %v1217
    %v1730 = vunpack.c.l.b16 %v1218
    %v1731 = vunpack.c.l.b16 %v1219
    %v1732 = vunpack.c.l.b16 %v1220
    %v1733 = vunpack.c.l.b16 %v1221
    %v1734 = vunpack.c.l.b16 %v1222
    %v1735 = vunpack.c.l.b16 %v1223
    %v1736 = vunpack.c.l.b16 %v1224
    %v1737 = vunpack.c.l.b16 %v1225
    %v1738 = vunpack.c.l.b16 %v1226
    %v1739 = vunpack.c.l.b16 %v1227
    %v1740 = vunpack.c.l.b16 %v1228
    %v1741 = vunpack.c.l.b16 %v1229
    %v1742 = vunpack.c.l.b16 %v1230
    %v1743 = vunpack.c.l.b16 %v1231
    %v1744 = vunpack.c.l.b16 %v1232
    %v1745 = vunpack.c.l.b16 %v1233
    %v1746 = vunpack.c.l.b16 %v1234
    %v1747 = vunpack.c.l.b16 %v1235
    %v1748 = vunpack.c.l.b16 %v1236
    %v1749 = vunpack.c.l.b16 %v1237
    %v1750 = vunpack.c.l.b16 %v1238
    %v1751 = vunpack.c.l.b16 %v1239
    %v1752 = vunpack.c.l.b16 %v1240
    %v1753 = vunpack.c.l.b16 %v1241
    %v1754 = vunpack.c.l.b16 %v1242
    %v1755 = vunpack.c.l.b16 %v1243
    %v1756 = vunpack.c.l.b16 %v1244
    %v1757 = vunpack.c.l.b16 %v1245
    %v1758 = vunpack.c.l.b16 %v1246
    %v1759 = vunpack.c.l.b16 %v1247
    %v1760 = vunpack.c.l.b16 %v1248
    %v1761 = vunpack.c.l.b16 %v1249
    %v1762 = vunpack.c.l.b16 %v1250
    %v1763 = vunpack.c.l.b16 %v1251
    %v1764 = vunpack.c.l.b16 %v1252
    %v1765 = vunpack.c.l.b16 %v1253
    %v1766 = vunpack.c.l.b16 %v1254
    %v1767 = vunpack.c.l.b16 %v1255
    %v1768 = vunpack.c.l.b16 %v1256
    %v1769 = vunpack.c.l.b16 %v1257
    %v1770 = vunpack.c.l.b16 %v1258
    %v1771 = vpack.c.b16 %v1644, %v1643
    %v1772 = vpack.c.b16 %v1646, %v1645
    %v1773 = vpack.c.b16 %v1648, %v1647
    %v1774 = vpack.c.b16 %v1650, %v1649
    %v1775 = vpack.c.b16 %v1652, %v1651
    %v1776 = vpack.c.b16 %v1654, %v1653
    %v1777 = vpack.c.b16 %v1656, %v1655
    %v1778 = vpack.c.b16 %v1658, %v1657
    %v1779 = vpack.c.b16 %v1660, %v1659
    %v1780 = vpack.c.b16 %v1662, %v1661
    %v1781 = vpack.c.b16 %v1664, %v1663
    %v1782 = vpack.c.b16 %v1666, %v1665
    %v1783 = vpack.c.b16 %v1668, %v1667
    %v1784 = vpack.c.b16 %v1670, %v1669
    %v1785 = vpack.c.b16 %v1672, %v1671
    %v1786 = vpack.c.b16 %v1674, %v1673
    %v1787 = vpack.c.b16 %v1676, %v1675
    %v1788 = vpack.c.b16 %v1678, %v1677
    %v1789 = vpack.c.b16 %v1680, %v1679
    %v1790 = vpack.c.b16 %v1682, %v1681
    %v1791 = vpack.c.b16 %v1684, %v1683
    %v1792 = vpack.c.b16 %v1686, %v1685
    %v1793 = vpack.c.b16 %v1688, %v1687
    %v1794 = vpack.c.b16 %v1690, %v1689
    %v1795 = vpack.c.b16 %v1692, %v1691
    %v1796 = vpack.c.b16 %v1694, %v1693
    %v1797 = vpack.c.b16 %v1696, %v1695
    %v1798 = vpack.c.b16 %v1698, %v1697
    %v1799 = vpack.c.b16 %v1700, %v1699
    %v1800 = vpack.c.b16 %v1702, %v1701
    %v1801 = vpack.c.b16 %v1704, %v1703
    %v1802 = vpack.c.b16 %v1706, %v1705
    %v1803 = vpack.c.b16 %v1708, %v1707
    %v1804 = vpack.c.b16 %v1710, %v1709
    %v1805 = vpack.c.b16 %v1712, %v1711
    %v1806 = vpack.c.b16 %v1714, %v1713
    %v1807 = vpack.c.b16 %v1716, %v1715
    %v1808 = vpack.c.b16 %v1718, %v1717
    %v1809 = vpack.c.b16 %v1720, %v1719
    %v1810 = vpack.c.b16 %v1722, %v1721
    %v1811 = vpack.c.b16 %v1724, %v1723
    %v1812 = vpack.c.b16 %v1726, %v1725
    %v1813 = vpack.c.b16 %v1728, %v1727
    %v1814 = vpack.c.b16 %v1730, %v1729
    %v1815 = vpack.c.b16 %v1732, %v1731
    %v1816 = vpack.c.b16 %v1734, %v1733
    %v1817 = vpack.c.b16 %v1736, %v1735
    %v1818 = vpack.c.b16 %v1738, %v1737
    %v1819 = vpack.c.b16 %v1740, %v1739
    %v1820 = vpack.c.b16 %v1742, %v1741
    %v1821 = vpack.c.b16 %v1744, %v1743
    %v1822 = vpack.c.b16 %v1746, %v1745
    %v1823 = vpack.c.b16 %v1748, %v1747
    %v1824 = vpack.c.b16 %v1750, %v1749
    %v1825 = vpack.c.b16 %v1752, %v1751
    %v1826 = vpack.c.b16 %v1754, %v1753
    %v1827 = vpack.c.b16 %v1756, %v1755
    %v1828 = vpack.c.b16 %v1758, %v1757
    %v1829 = vpack.c.b16 %v1760, %v1759
    %v1830 = vpack.c.b16 %v1762, %v1761
    %v1831 = vpack.c.b16 %v1764, %v1763
    %v1832 = vpack.c.b16 %v1766, %v1765
    %v1833 = vpack.c.b16 %v1768, %v1767
    %v1834 = vpack.c.b16 %v1770, %v1769
    %v2027 = vunpack.c.l.b16 %v1387
    %v2028 = vunpack.c.l.b16 %v1388
    %v2029 = vunpack.c.l.b16 %v1389
    %v2030 = vunpack.c.l.b16 %v1390
    %v2031 = vunpack.c.l.b16 %v1391
    %v2032 = vunpack.c.l.b16 %v1392
    %v2033 = vunpack.c.l.b16 %v1393
    %v2034 = vunpack.c.l.b16 %v1394
    %v2035 = vunpack.c.l.b16 %v1395
    %v2036 = vunpack.c.l.b16 %v1396
    %v2037 = vunpack.c.l.b16 %v1397
    %v2038 = vunpack.c.l.b16 %v1398
    %v2039 = vunpack.c.l.b16 %v1399
    %v2040 = vunpack.c.l.b16 %v1400
    %v2041 = vunpack.c.l.b16 %v1401
    %v2042 = vunpack.c.l.b16 %v1402
    %v2043 = vunpack.c.l.b16 %v1403
    %v2044 = vunpack.c.l.b16 %v1404
    %v2045 = vunpack.c.l.b16 %v1405
    %v2046 = vunpack.c.l.b16 %v1406
    %v2047 = vunpack.c.l.b16 %v1407
    %v2048 = vunpack.c.l.b16 %v1408
    %v2049 = vunpack.c.l.b16 %v1409
    %v2050 = vunpack.c.l.b16 %v1410
    %v2051 = vunpack.c.l.b16 %v1411
    %v2052 = vunpack.c.l.b16 %v1412
    %v2053 = vunpack.c.l.b16 %v1413
    %v2054 = vunpack.c.l.b16 %v1414
    %v2055 = vunpack.c.l.b16 %v1415
    %v2056 = vunpack.c.l.b16 %v1416
    %v2057 = vunpack.c.l.b16 %v1417
    %v2058 = vunpack.c.l.b16 %v1418
    %v2059 = vunpack.c.l.b16 %v1419
    %v2060 = vunpack.c.l.b16 %v1420
    %v2061 = vunpack.c.l.b16 %v1421
    %v2062 = vunpack.c.l.b16 %v1422
    %v2063 = vunpack.c.l.b16 %v1423
    %v2064 = vunpack.c.l.b16 %v1424
    %v2065 = vunpack.c.l.b16 %v1425
    %v2066 = vunpack.c.l.b16 %v1426
    %v2067 = vunpack.c.l.b16 %v1427
    %v2068 = vunpack.c.l.b16 %v1428
    %v2069 = vunpack.c.l.b16 %v1429
    %v2070 = vunpack.c.l.b16 %v1430
    %v2071 = vunpack.c.l.b16 %v1431
    %v2072 = vunpack.c.l.b16 %v1432
    %v2073 = vunpack.c.l.b16 %v1433
    %v2074 = vunpack.c.l.b16 %v1434
    %v2075 = vunpack.c.l.b16 %v1435
    %v2076 = vunpack.c.l.b16 %v1436
    %v2077 = vunpack.c.l.b16 %v1437
    %v2078 = vunpack.c.l.b16 %v1438
    %v2079 = vunpack.c.l.b16 %v1439
    %v2080 = vunpack.c.l.b16 %v1440
    %v2081 = vunpack.c.l.b16 %v1441
    %v2082 = vunpack.c.l.b16 %v1442
    %v2083 = vunpack.c.l.b16 %v1443
    %v2084 = vunpack.c.l.b16 %v1444
    %v2085 = vunpack.c.l.b16 %v1445
    %v2086 = vunpack.c.l.b16 %v1446
    %v2087 = vunpack.c.l.b16 %v1447
    %v2088 = vunpack.c.l.b16 %v1448
    %v2089 = vunpack.c.l.b16 %v1449
    %v2090 = vunpack.c.l.b16 %v1450
    %v2091 = vunpack.c.l.b16 %v1451
    %v2092 = vunpack.c.l.b16 %v1452
    %v2093 = vunpack.c.l.b16 %v1453
    %v2094 = vunpack.c.l.b16 %v1454
    %v2095 = vunpack.c.l.b16 %v1455
    %v2096 = vunpack.c.l.b16 %v1456
    %v2097 = vunpack.c.l.b16 %v1457
    %v2098 = vunpack.c.l.b16 %v1458
    %v2099 = vunpack.c.l.b16 %v1459
    %v2100 = vunpack.c.l.b16 %v1460
    %v2101 = vunpack.c.l.b16 %v1461
    %v2102 = vunpack.c.l.b16 %v1462
    %v2103 = vunpack.c.l.b16 %v1463
    %v2104 = vunpack.c.l.b16 %v1464
    %v2105 = vunpack.c.l.b16 %v1465
    %v2106 = vunpack.c.l.b16 %v1466
    %v2107 = vunpack.c.l.b16 %v1467
    %v2108 = vunpack.c.l.b16 %v1468
    %v2109 = vunpack.c.l.b16 %v1469
    %v2110 = vunpack.c.l.b16 %v1470
    %v2111 = vunpack.c.l.b16 %v1471
    %v2112 = vunpack.c.l.b16 %v1472
    %v2113 = vunpack.c.l.b16 %v1473
    %v2114 = vunpack.c.l.b16 %v1474
    %v2115 = vunpack.c.l.b16 %v1475
    %v2116 = vunpack.c.l.b16 %v1476
    %v2117 = vunpack.c.l.b16 %v1477
    %v2118 = vunpack.c.l.b16 %v1478
    %v2119 = vunpack.c.l.b16 %v1479
    %v2120 = vunpack.c.l.b16 %v1480
    %v2121 = vunpack.c.l.b16 %v1481
    %v2122 = vunpack.c.l.b16 %v1482
    %v2123 = vunpack.c.l.b16 %v1483
    %v2124 = vunpack.c.l.b16 %v1484
    %v2125 = vunpack.c.l.b16 %v1485
    %v2126 = vunpack.c.l.b16 %v1486
    %v2127 = vunpack.c.l.b16 %v1487
    %v2128 = vunpack.c.l.b16 %v1488
    %v2129 = vunpack.c.l.b16 %v1489
    %v2130 = vunpack.c.l.b16 %v1490
    %v2131 = vunpack.c.l.b16 %v1491
    %v2132 = vunpack.c.l.b16 %v1492
    %v2133 = vunpack.c.l.b16 %v1493
    %v2134 = vunpack.c.l.b16 %v1494
    %v2135 = vunpack.c.l.b16 %v1495
    %v2136 = vunpack.c.l.b16 %v1496
    %v2137 = vunpack.c.l.b16 %v1497
    %v2138 = vunpack.c.l.b16 %v1498
    %v2139 = vunpack.c.l.b16 %v1499
    %v2140 = vunpack.c.l.b16 %v1500
    %v2141 = vunpack.c.l.b16 %v1501
    %v2142 = vunpack.c.l.b16 %v1502
    %v2143 = vunpack.c.l.b16 %v1503
    %v2144 = vunpack.c.l.b16 %v1504
    %v2145 = vunpack.c.l.b16 %v1505
    %v2146 = vunpack.c.l.b16 %v1506
    %v2147 = vunpack.c.l.b16 %v1507
    %v2148 = vunpack.c.l.b16 %v1508
    %v2149 = vunpack.c.l.b16 %v1509
    %v2150 = vunpack.c.l.b16 %v1510
    %v2151 = vunpack.c.l.b16 %v1511
    %v2152 = vunpack.c.l.b16 %v1512
    %v2153 = vunpack.c.l.b16 %v1513
    %v2154 = vunpack.c.l.b16 %v1514
    %v2155 = vpack.c.b16 %v2028, %v2027
    %v2156 = vpack.c.b16 %v2030, %v2029
    %v2157 = vpack.c.b16 %v2032, %v2031
    %v2158 = vpack.c.b16 %v2034, %v2033
    %v2159 = vpack.c.b16 %v2036, %v2035
    %v2160 = vpack.c.b16 %v2038, %v2037
    %v2161 = vpack.c.b16 %v2040, %v2039
    %v2162 = vpack.c.b16 %v2042, %v2041
    %v2163 = vpack.c.b16 %v2044, %v2043
    %v2164 = vpack.c.b16 %v2046, %v2045
    %v2165 = vpack.c.b16 %v2048, %v2047
    %v2166 = vpack.c.b16 %v2050, %v2049
    %v2167 = vpack.c.b16 %v2052, %v2051
    %v2168 = vpack.c.b16 %v2054, %v2053
    %v2169 = vpack.c.b16 %v2056, %v2055
    %v2170 = vpack.c.b16 %v2058, %v2057
    %v2171 = vpack.c.b16 %v2060, %v2059
    %v2172 = vpack.c.b16 %v2062, %v2061
    %v2173 = vpack.c.b16 %v2064, %v2063
    %v2174 = vpack.c.b16 %v2066, %v2065
    %v2175 = vpack.c.b16 %v2068, %v2067
    %v2176 = vpack.c.b16 %v2070, %v2069
    %v2177 = vpack.c.b16 %v2072, %v2071
    %v2178 = vpack.c.b16 %v2074, %v2073
    %v2179 = vpack.c.b16 %v2076, %v2075
    %v2180 = vpack.c.b16 %v2078, %v2077
    %v2181 = vpack.c.b16 %v2080, %v2079
    %v2182 = vpack.c.b16 %v2082, %v2081
    %v2183 = vpack.c.b16 %v2084, %v2083
    %v2184 = vpack.c.b16 %v2086, %v2085
    %v2185 = vpack.c.b16 %v2088, %v2087
    %v2186 = vpack.c.b16 %v2090, %v2089
    %v2187 = vpack.c.b16 %v2092, %v2091
    %v2188 = vpack.c.b16 %v2094, %v2093
    %v2189 = vpack.c.b16 %v2096, %v2095
    %v2190 = vpack.c.b16 %v2098, %v2097
    %v2191 = vpack.c.b16 %v2100, %v2099
    %v2192 = vpack.c.b16 %v2102, %v2101
    %v2193 = vpack.c.b16 %v2104, %v2103
    %v2194 = vpack.c.b16 %v2106, %v2105
    %v2195 = vpack.c.b16 %v2108, %v2107
    %v2196 = vpack.c.b16 %v2110, %v2109
    %v2197 = vpack.c.b16 %v2112, %v2111
    %v2198 = vpack.c.b16 %v2114, %v2113
    %v2199 = vpack.c.b16 %v2116, %v2115
    %v2200 = vpack.c.b16 %v2118, %v2117
    %v2201 = vpack.c.b16 %v2120, %v2119
    %v2202 = vpack.c.b16 %v2122, %v2121
    %v2203 = vpack.c.b16 %v2124, %v2123
    %v2204 = vpack.c.b16 %v2126, %v2125
    %v2205 = vpack.c.b16 %v2128, %v2127
    %v2206 = vpack.c.b16 %v2130, %v2129
    %v2207 = vpack.c.b16 %v2132, %v2131
    %v2208 = vpack.c.b16 %v2134, %v2133
    %v2209 = vpack.c.b16 %v2136, %v2135
    %v2210 = vpack.c.b16 %v2138, %v2137
    %v2211 = vpack.c.b16 %v2140, %v2139
    %v2212 = vpack.c.b16 %v2142, %v2141
    %v2213 = vpack.c.b16 %v2144, %v2143
    %v2214 = vpack.c.b16 %v2146, %v2145
    %v2215 = vpack.c.b16 %v2148, %v2147
    %v2216 = vpack.c.b16 %v2150, %v2149
    %v2217 = vpack.c.b16 %v2152, %v2151
    %v2218 = vpack.c.b16 %v2154, %v2153
    %2283 = vmatpush.bf16.msra.mxu0 %v1778
    %2284 = vmatpush.bf16.msra.mxu0 %v1777
    %2285 = vmatpush.bf16.msra.mxu0 %v1776
    %2286 = vmatpush.bf16.msra.mxu0 %v1775
    %2287 = vmatpush.bf16.msra.mxu0 %v1774
    %2288 = vmatpush.bf16.msra.mxu0 %v1773
    %2289 = vmatpush.bf16.msra.mxu0 %v1772
    %2290 = vmatpush.bf16.msra.mxu0 %v1771
    %2291 = vmatmul.bf16.gmra.mxu0 %v995
    %v2292 = vpop.f32.mrf.mxu0
    %v2293 = vadd.f32 0.0, %v2292
    %v2294 = vpop.f32.mrf.mxu0
    %2295 = vdwg.mxu0
    %2296 = vmatpush.bf16.msra.mxu0 %v1786
    %2297 = vmatpush.bf16.msra.mxu0 %v1785
    %2298 = vmatpush.bf16.msra.mxu0 %v1784
    %2299 = vmatpush.bf16.msra.mxu0 %v1783
    %2300 = vmatpush.bf16.msra.mxu0 %v1782
    %2301 = vmatpush.bf16.msra.mxu0 %v1781
    %2302 = vmatpush.bf16.msra.mxu0 %v1780
    %2303 = vmatpush.bf16.msra.mxu0 %v1779
    %2304 = vmatmul.bf16.gmra.mxu0 %v996
    %v2305 = vpop.f32.mrf.mxu0
    %v2306 = vadd.f32 %v2293, %v2305
    %v2307 = vpop.f32.mrf.mxu0
    %2308 = vdwg.mxu0
    %2309 = vmatpush.bf16.msra.mxu0 %v1794
    %2310 = vmatpush.bf16.msra.mxu0 %v1793
    %2311 = vmatpush.bf16.msra.mxu0 %v1792
    %2312 = vmatpush.bf16.msra.mxu0 %v1791
    %2313 = vmatpush.bf16.msra.mxu0 %v1790
    %2314 = vmatpush.bf16.msra.mxu0 %v1789
    %2315 = vmatpush.bf16.msra.mxu0 %v1788
    %2316 = vmatpush.bf16.msra.mxu0 %v1787
    %2317 = vmatmul.bf16.gmra.mxu0 %v997
    %v2318 = vpop.f32.mrf.mxu0
    %v2319 = vadd.f32 %v2306, %v2318
    %v2320 = vpop.f32.mrf.mxu0
    %2321 = vdwg.mxu0
    %2322 = vmatpush.bf16.msra.mxu0 %v1802
    %2323 = vmatpush.bf16.msra.mxu0 %v1801
    %2324 = vmatpush.bf16.msra.mxu0 %v1800
    %2325 = vmatpush.bf16.msra.mxu0 %v1799
    %2326 = vmatpush.bf16.msra.mxu0 %v1798
    %2327 = vmatpush.bf16.msra.mxu0 %v1797
    %2328 = vmatpush.bf16.msra.mxu0 %v1796
    %2329 = vmatpush.bf16.msra.mxu0 %v1795
    %2330 = vmatmul.bf16.gmra.mxu0 %v998
    %v2331 = vpop.f32.mrf.mxu0
    %v2332 = vadd.f32 %v2319, %v2331
    %v2333 = vpop.f32.mrf.mxu0
    %2334 = vdwg.mxu0
    %2335 = vmatpush.bf16.msra.mxu0 %v1810
    %2336 = vmatpush.bf16.msra.mxu0 %v1809
    %2337 = vmatpush.bf16.msra.mxu0 %v1808
    %2338 = vmatpush.bf16.msra.mxu0 %v1807
    %2339 = vmatpush.bf16.msra.mxu0 %v1806
    %2340 = vmatpush.bf16.msra.mxu0 %v1805
    %2341 = vmatpush.bf16.msra.mxu0 %v1804
    %2342 = vmatpush.bf16.msra.mxu0 %v1803
    %2343 = vmatmul.bf16.gmra.mxu0 %v999
    %v2344 = vpop.f32.mrf.mxu0
    %v2345 = vadd.f32 %v2332, %v2344
    %v2346 = vpop.f32.mrf.mxu0
    %2347 = vdwg.mxu0
    %2348 = vmatpush.bf16.msra.mxu0 %v1818
    %2349 = vmatpush.bf16.msra.mxu0 %v1817
    %2350 = vmatpush.bf16.msra.mxu0 %v1816
    %2351 = vmatpush.bf16.msra.mxu0 %v1815
    %2352 = vmatpush.bf16.msra.mxu0 %v1814
    %2353 = vmatpush.bf16.msra.mxu0 %v1813
    %2354 = vmatpush.bf16.msra.mxu0 %v1812
    %2355 = vmatpush.bf16.msra.mxu0 %v1811
    %2356 = vmatmul.bf16.gmra.mxu0 %v1000
    %v2357 = vpop.f32.mrf.mxu0
    %v2358 = vadd.f32 %v2345, %v2357
    %v2359 = vpop.f32.mrf.mxu0
    %2360 = vdwg.mxu0
    %2361 = vmatpush.bf16.msra.mxu0 %v1826
    %2362 = vmatpush.bf16.msra.mxu0 %v1825
    %2363 = vmatpush.bf16.msra.mxu0 %v1824
    %2364 = vmatpush.bf16.msra.mxu0 %v1823
    %2365 = vmatpush.bf16.msra.mxu0 %v1822
    %2366 = vmatpush.bf16.msra.mxu0 %v1821
    %2367 = vmatpush.bf16.msra.mxu0 %v1820
    %2368 = vmatpush.bf16.msra.mxu0 %v1819
    %2369 = vmatmul.bf16.gmra.mxu0 %v1001
    %v2370 = vpop.f32.mrf.mxu0
    %v2371 = vadd.f32 %v2358, %v2370
    %v2372 = vpop.f32.mrf.mxu0
    %2373 = vdwg.mxu0
    %2374 = vmatpush.bf16.msra.mxu0 %v1834
    %2375 = vmatpush.bf16.msra.mxu0 %v1833
    %2376 = vmatpush.bf16.msra.mxu0 %v1832
    %2377 = vmatpush.bf16.msra.mxu0 %v1831
    %2378 = vmatpush.bf16.msra.mxu0 %v1830
    %2379 = vmatpush.bf16.msra.mxu0 %v1829
    %2380 = vmatpush.bf16.msra.mxu0 %v1828
    %2381 = vmatpush.bf16.msra.mxu0 %v1827
    %2382 = vmatmul.bf16.gmra.mxu0 %v1002
    %v2383 = vpop.f32.mrf.mxu0
    %v2384 = vadd.f32 %v2371, %v2383
    %v2385 = vpop.f32.mrf.mxu0
    %2386 = vdwg.mxu0
    %2387 = vmatpush.bf16.msra.mxu0 %v2162
    %2388 = vmatpush.bf16.msra.mxu0 %v2161
    %2389 = vmatpush.bf16.msra.mxu0 %v2160
    %2390 = vmatpush.bf16.msra.mxu0 %v2159
    %2391 = vmatpush.bf16.msra.mxu0 %v2158
    %2392 = vmatpush.bf16.msra.mxu0 %v2157
    %2393 = vmatpush.bf16.msra.mxu0 %v2156
    %2394 = vmatpush.bf16.msra.mxu0 %v2155
    %2395 = vmatmul.bf16.gmra.mxu0 %v995
    %v2396 = vpop.f32.mrf.mxu0
    %v2397 = vadd.f32 0.0, %v2396
    %v2398 = vpop.f32.mrf.mxu0
    %2399 = vdwg.mxu0
    %2400 = vmatpush.bf16.msra.mxu0 %v2170
    %2401 = vmatpush.bf16.msra.mxu0 %v2169
    %2402 = vmatpush.bf16.msra.mxu0 %v2168
    %2403 = vmatpush.bf16.msra.mxu0 %v2167
    %2404 = vmatpush.bf16.msra.mxu0 %v2166
    %2405 = vmatpush.bf16.msra.mxu0 %v2165
    %2406 = vmatpush.bf16.msra.mxu0 %v2164
    %2407 = vmatpush.bf16.msra.mxu0 %v2163
    %2408 = vmatmul.bf16.gmra.mxu0 %v996
    %v2409 = vpop.f32.mrf.mxu0
    %v2410 = vadd.f32 %v2397, %v2409
    %v2411 = vpop.f32.mrf.mxu0
    %2412 = vdwg.mxu0
    %2413 = vmatpush.bf16.msra.mxu0 %v2178
    %2414 = vmatpush.bf16.msra.mxu0 %v2177
    %2415 = vmatpush.bf16.msra.mxu0 %v2176
    %2416 = vmatpush.bf16.msra.mxu0 %v2175
    %2417 = vmatpush.bf16.msra.mxu0 %v2174
    %2418 = vmatpush.bf16.msra.mxu0 %v2173
    %2419 = vmatpush.bf16.msra.mxu0 %v2172
    %2420 = vmatpush.bf16.msra.mxu0 %v2171
    %2421 = vmatmul.bf16.gmra.mxu0 %v997
    %v2422 = vpop.f32.mrf.mxu0
    %v2423 = vadd.f32 %v2410, %v2422
    %v2424 = vpop.f32.mrf.mxu0
    %2425 = vdwg.mxu0
    %2426 = vmatpush.bf16.msra.mxu0 %v2186
    %2427 = vmatpush.bf16.msra.mxu0 %v2185
    %2428 = vmatpush.bf16.msra.mxu0 %v2184
    %2429 = vmatpush.bf16.msra.mxu0 %v2183
    %2430 = vmatpush.bf16.msra.mxu0 %v2182
    %2431 = vmatpush.bf16.msra.mxu0 %v2181
    %2432 = vmatpush.bf16.msra.mxu0 %v2180
    %2433 = vmatpush.bf16.msra.mxu0 %v2179
    %2434 = vmatmul.bf16.gmra.mxu0 %v998
    %v2435 = vpop.f32.mrf.mxu0
    %v2436 = vadd.f32 %v2423, %v2435
    %v2437 = vpop.f32.mrf.mxu0
    %2438 = vdwg.mxu0
    %2439 = vmatpush.bf16.msra.mxu0 %v2194
    %2440 = vmatpush.bf16.msra.mxu0 %v2193
    %2441 = vmatpush.bf16.msra.mxu0 %v2192
    %2442 = vmatpush.bf16.msra.mxu0 %v2191
    %2443 = vmatpush.bf16.msra.mxu0 %v2190
    %2444 = vmatpush.bf16.msra.mxu0 %v2189
    %2445 = vmatpush.bf16.msra.mxu0 %v2188
    %2446 = vmatpush.bf16.msra.mxu0 %v2187
    %2447 = vmatmul.bf16.gmra.mxu0 %v999
    %v2448 = vpop.f32.mrf.mxu0
    %v2449 = vadd.f32 %v2436, %v2448
    %v2450 = vpop.f32.mrf.mxu0
    %2451 = vdwg.mxu0
    %2452 = vmatpush.bf16.msra.mxu0 %v2202
    %2453 = vmatpush.bf16.msra.mxu0 %v2201
    %2454 = vmatpush.bf16.msra.mxu0 %v2200
    %2455 = vmatpush.bf16.msra.mxu0 %v2199
    %2456 = vmatpush.bf16.msra.mxu0 %v2198
    %2457 = vmatpush.bf16.msra.mxu0 %v2197
    %2458 = vmatpush.bf16.msra.mxu0 %v2196
    %2459 = vmatpush.bf16.msra.mxu0 %v2195
    %2460 = vmatmul.bf16.gmra.mxu0 %v1000
    %v2461 = vpop.f32.mrf.mxu0
    %v2462 = vadd.f32 %v2449, %v2461
    %v2463 = vpop.f32.mrf.mxu0
    %2464 = vdwg.mxu0
    %2465 = vmatpush.bf16.msra.mxu0 %v2210
    %2466 = vmatpush.bf16.msra.mxu0 %v2209
    %2467 = vmatpush.bf16.msra.mxu0 %v2208
    %2468 = vmatpush.bf16.msra.mxu0 %v2207
    %2469 = vmatpush.bf16.msra.mxu0 %v2206
    %2470 = vmatpush.bf16.msra.mxu0 %v2205
    %2471 = vmatpush.bf16.msra.mxu0 %v2204
    %2472 = vmatpush.bf16.msra.mxu0 %v2203
    %2473 = vmatmul.bf16.gmra.mxu0 %v1001
    %v2474 = vpop.f32.mrf.mxu0
    %v2475 = vadd.f32 %v2462, %v2474
    %v2476 = vpop.f32.mrf.mxu0
    %2477 = vdwg.mxu0
    %2478 = vmatpush.bf16.msra.mxu0 %v2218
    %2479 = vmatpush.bf16.msra.mxu0 %v2217
    %2480 = vmatpush.bf16.msra.mxu0 %v2216
    %2481 = vmatpush.bf16.msra.mxu0 %v2215
    %2482 = vmatpush.bf16.msra.mxu0 %v2214
    %2483 = vmatpush.bf16.msra.mxu0 %v2213
    %2484 = vmatpush.bf16.msra.mxu0 %v2212
    %2485 = vmatpush.bf16.msra.mxu0 %v2211
    %2486 = vmatmul.bf16.gmra.mxu0 %v1002
    %v2487 = vpop.f32.mrf.mxu0
    %v2488 = vadd.f32 %v2475, %v2487
    %v2489 = vpop.f32.mrf.mxu0
    %2490 = vdwg.mxu0
    %v2491 = vld [vmem:[%s3] sm:$0x1]
    %v2493 = vperm.slane %v2491, 0
    %v2495 = vadd.f32 %v2384, %v2493
    %v2496 = vmax.f32 %v2495, 0.0
    %v2497 = vld [vmem:[%s13] sm:$0x1]
    %v2499 = vperm.slane %v2497, 0
    %v2501 = vadd.f32 %v2488, %v2499
    %v2502 = vmax.f32 %v2501, 0.0
    %v2503 = vld [vmem:[%s4] sm:$0xff]
    %v2504 = vld [vmem:[%s4 + $0x8] sm:$0xff]
    %v2505 = vld [vmem:[%s4 + $0x10] sm:$0xff]
    %v2506 = vld [vmem:[%s4 + $0x18] sm:$0xff]
    %v2507 = vld [vmem:[%s4 + $0x20] sm:$0xff]
    %v2508 = vld [vmem:[%s4 + $0x28] sm:$0xff]
    %v2509 = vld [vmem:[%s4 + $0x30] sm:$0xff]
    %v2510 = vld [vmem:[%s4 + $0x38] sm:$0xff]
    %v2511 = vld [vmem:[%s4 + $0x40] sm:$0xff]
    %v2512 = vld [vmem:[%s4 + $0x48] sm:$0xff]
    %v2513 = vld [vmem:[%s4 + $0x50] sm:$0xff]
    %v2514 = vld [vmem:[%s4 + $0x58] sm:$0xff]
    %v2515 = vld [vmem:[%s4 + $0x60] sm:$0xff]
    %v2516 = vld [vmem:[%s4 + $0x68] sm:$0xff]
    %v2517 = vld [vmem:[%s4 + $0x70] sm:$0xff]
    %v2518 = vld [vmem:[%s4 + $0x78] sm:$0xff]
    %v2519 = vld [vmem:[%s5] sm:$0x1]
    %v2520 = vpack.c.bf16 %v2496, %v2496
    %v2521 = vpack.c.bf16 %v2504, %v2503
    %v2522 = vpack.c.bf16 %v2506, %v2505
    %v2523 = vpack.c.bf16 %v2508, %v2507
    %v2524 = vpack.c.bf16 %v2510, %v2509
    %v2525 = vpack.c.bf16 %v2512, %v2511
    %v2526 = vpack.c.bf16 %v2514, %v2513
    %v2527 = vpack.c.bf16 %v2516, %v2515
    %v2528 = vpack.c.bf16 %v2518, %v2517
    %v2530 = vperm.slane %v2519, 0
    %2532 = vmatpush.bf16.msra.mxu0 %v2528
    %2533 = vmatpush.bf16.msra.mxu0 %v2527
    %2534 = vmatpush.bf16.msra.mxu0 %v2526
    %2535 = vmatpush.bf16.msra.mxu0 %v2525
    %2536 = vmatpush.bf16.msra.mxu0 %v2524
    %2537 = vmatpush.bf16.msra.mxu0 %v2523
    %2538 = vmatpush.bf16.msra.mxu0 %v2522
    %2539 = vmatpush.bf16.msra.mxu0 %v2521
    %2540 = vmatmul.bf16.gmra.mxu0 %v2520
    %v2541 = vpop.f32.mrf.mxu0
    %v2542 = vadd.f32 %v2530, %v2541
    %v2543 = vpop.f32.mrf.mxu0
    %2544 = vdwg.mxu0
    %v2545 = vmul.f32 %v2542, %v2542
    %2546 = vadd.xlane.f32.xlu0 %v2545
    %v2547 = vpop.xlane.xlu0 %2546
    %v2548 = vmax.f32 %v2547, 1e-24
    %v2549 = vrsqrt.pop %v2548
    %v2550 = vmul.f32 %v2549, %v2548
    %v2551 = vmul.f32 %v2550, %v2549
    %v2552 = vmul.f32 0.5, %v2551
    %v2553 = vsub.f32 1.5, %v2552
    %v2554 = vmul.f32 %v2549, %v2553
    %vm2555 = vweird.f32 %v2548
    %vm2556 = vweird.f32 %v2549
    %vm2557 = vmor %vm2555, %vm2556
    %v2558 = vsel %vm2557, %v2549, %v2554
    %v2559 = vmul.f32 %v2542, %v2558
    %v2560 = vld [vmem:[%s14] sm:$0xff]
    %v2561 = vld [vmem:[%s14 + $0x8] sm:$0xff]
    %v2562 = vld [vmem:[%s14 + $0x10] sm:$0xff]
    %v2563 = vld [vmem:[%s14 + $0x18] sm:$0xff]
    %v2564 = vld [vmem:[%s14 + $0x20] sm:$0xff]
    %v2565 = vld [vmem:[%s14 + $0x28] sm:$0xff]
    %v2566 = vld [vmem:[%s14 + $0x30] sm:$0xff]
    %v2567 = vld [vmem:[%s14 + $0x38] sm:$0xff]
    %v2568 = vld [vmem:[%s14 + $0x40] sm:$0xff]
    %v2569 = vld [vmem:[%s14 + $0x48] sm:$0xff]
    %v2570 = vld [vmem:[%s14 + $0x50] sm:$0xff]
    %v2571 = vld [vmem:[%s14 + $0x58] sm:$0xff]
    %v2572 = vld [vmem:[%s14 + $0x60] sm:$0xff]
    %v2573 = vld [vmem:[%s14 + $0x68] sm:$0xff]
    %v2574 = vld [vmem:[%s14 + $0x70] sm:$0xff]
    %v2575 = vld [vmem:[%s14 + $0x78] sm:$0xff]
    %v2576 = vld [vmem:[%s15] sm:$0x1]
    %v2577 = vpack.c.bf16 %v2502, %v2502
    %v2578 = vpack.c.bf16 %v2561, %v2560
    %v2579 = vpack.c.bf16 %v2563, %v2562
    %v2580 = vpack.c.bf16 %v2565, %v2564
    %v2581 = vpack.c.bf16 %v2567, %v2566
    %v2582 = vpack.c.bf16 %v2569, %v2568
    %v2583 = vpack.c.bf16 %v2571, %v2570
    %v2584 = vpack.c.bf16 %v2573, %v2572
    %v2585 = vpack.c.bf16 %v2575, %v2574
    %v2587 = vperm.slane %v2576, 0
    %2589 = vmatpush.bf16.msra.mxu0 %v2585
    %2590 = vmatpush.bf16.msra.mxu0 %v2584
    %2591 = vmatpush.bf16.msra.mxu0 %v2583
    %2592 = vmatpush.bf16.msra.mxu0 %v2582
    %2593 = vmatpush.bf16.msra.mxu0 %v2581
    %2594 = vmatpush.bf16.msra.mxu0 %v2580
    %2595 = vmatpush.bf16.msra.mxu0 %v2579
    %2596 = vmatpush.bf16.msra.mxu0 %v2578
    %2597 = vmatmul.bf16.gmra.mxu0 %v2577
    %v2598 = vpop.f32.mrf.mxu0
    %v2599 = vadd.f32 %v2587, %v2598
    %v2600 = vpop.f32.mrf.mxu0
    %2601 = vdwg.mxu0
    %v2602 = vmul.f32 %v2599, %v2599
    %2603 = vadd.xlane.f32.xlu0 %v2602
    %v2604 = vpop.xlane.xlu0 %2603
    %v2605 = vmax.f32 %v2604, 1e-24
    %v2606 = vrsqrt.pop %v2605
    %v2607 = vmul.f32 %v2606, %v2605
    %v2608 = vmul.f32 %v2607, %v2606
    %v2609 = vmul.f32 0.5, %v2608
    %v2610 = vsub.f32 1.5, %v2609
    %v2611 = vmul.f32 %v2606, %v2610
    %vm2612 = vweird.f32 %v2605
    %vm2613 = vweird.f32 %v2606
    %vm2614 = vmor %vm2612, %vm2613
    %v2615 = vsel %vm2614, %v2606, %v2611
    %v2616 = vmul.f32 %v2599, %v2615
    %2617 = vst [vmem:[#allocation3] sm:$0xff] %v2616
    %s2618 = smul.u32 128, 1
    %s2619 = sshll.u32 %s2618, 4
    %2620 = dma.done [#allocation4], %s2619
    %s2621 = scalar_lea.vmem %s16, %s110
    %s2622 = scalar_lea.sflag [#allocation4], 1
    // Predicated region
    $region65: #{moco_forward.1} parent=1 // pred_check
      _
    $region66: #{moco_forward.1} parent=1 // pred_check_branch
      %2624 = sbr.rel (0) target = $region68
    $region67: #{moco_forward.1} parent=1 // pred_region
      // Predicated region
      $region80: #{moco_forward.1} parent=67 // pred_check
        _
      $region81: #{moco_forward.1} parent=67 // pred_check_branch
        %2640 = sbr.rel (0) target = $region83
      $region82: #{moco_forward.1} parent=67 // pred_region
        loop: start=0, step=1, limit=1
        $region84: #{moco_forward.1} parent=82 // loop_pre_header
          _
        $region85: #{moco_forward.1} parent=82 // loop_header
          %s2642 = sphi 0, %s2646
          %p2643 = scmp.ge.s32.totalorder %s2642, 1
          %s2647 = sphi [#allocation3], [#allocation3]
          %s2648 = sphi %s2621, %s2621
        $region86: #{moco_forward.1} parent=82 // loop_header_branch
          %2645 = sbr.rel (%p2643) target = $region90
        $region87: #{moco_forward.1} parent=82 // loop_body
          %v2649 = vld [vmem:[%s2647] sm:$0xff]
          %2650 = vst [vmem:[%s2648] sm:$0xff] %v2649
        $region88: #{moco_forward.1} parent=82 // loop_footer
          %s2646 = sadd.s32 1, %s2642
        $region89: #{moco_forward.1} parent=82 // loop_footer_branch
          %2641 = sbr.rel target = $region85
        $region90: #{moco_forward.1} parent=82 // loop_exit
          _
      $region83: #{moco_forward.1} parent=67 // pred_fallthru
        _
      // Predicated region
      $region91: #{moco_forward.1} parent=67 // pred_check
        _
      $region92: #{moco_forward.1} parent=67 // pred_check_branch
        %2652 = sbr.rel target = $region94
      $region93: #{moco_forward.1} parent=67 // pred_region
        _
      $region94: #{moco_forward.1} parent=67 // pred_fallthru
        _
    $region68: #{moco_forward.1} parent=1 // pred_fallthru
      _
    // Predicated region
    $region69: #{moco_forward.1} parent=1 // pred_check
      _
    $region70: #{moco_forward.1} parent=1 // pred_check_branch
      %2626 = sbr.rel target = $region72
    $region71: #{moco_forward.1} parent=1 // pred_region
      %s2628 = ssub.s32 256, 1
      loop: start=0, step=1, limit=1
      $region73: #{moco_forward.1} parent=71 // loop_pre_header
        _
      $region74: #{moco_forward.1} parent=71 // loop_header
        %s2630 = sphi 0, %s2634
        %p2631 = scmp.ge.s32.totalorder %s2630, 1
        %s2635 = sphi [#allocation3], [#allocation3]
        %s2636 = sphi %s2621, %s2621
      $region75: #{moco_forward.1} parent=71 // loop_header_branch
        %2633 = sbr.rel (%p2631) target = $region79
      $region76: #{moco_forward.1} parent=71 // loop_body
        %v2637 = vld [vmem:[%s2635] sm:%s2628]
        %2638 = vst [vmem:[%s2636] sm:%s2628] %v2637
      $region77: #{moco_forward.1} parent=71 // loop_footer
        %s2634 = sadd.s32 1, %s2630
      $region78: #{moco_forward.1} parent=71 // loop_footer_branch
        %2629 = sbr.rel target = $region74
      $region79: #{moco_forward.1} parent=71 // loop_exit
        _
    $region72: #{moco_forward.1} parent=1 // pred_fallthru
      _
    // Predicated region
    $region95: #{moco_forward.1} parent=1 // pred_check
      _
    $region96: #{moco_forward.1} parent=1 // pred_check_branch
      %2655 = sbr.rel (0) target = $region98
    $region97: #{moco_forward.1} parent=1 // pred_region
      %2656 = vsyncadd %s2622, 128
    $region98: #{moco_forward.1} parent=1 // pred_fallthru
      _
    %v2657 = vrot.slane %v2616, 4
    %v2658 = vmul.f32 %v2559, %v2657
    %2659 = vadd.xlane.f32.xlu0 %v2658
    %v2660 = vpop.xlane.xlu0 %2659
    %v2661 = vpack.c.bf16 %v2559, %v2559
    %v2662 = vld [vmem:[#allocation2] sm:$0xff]
    %v2663 = vld [vmem:[#allocation2 + $0x8] sm:$0xff]
    %v2664 = vld [vmem:[#allocation2 + $0x10] sm:$0xff]
    %v2665 = vld [vmem:[#allocation2 + $0x18] sm:$0xff]
    %v2666 = vld [vmem:[#allocation2 + $0x20] sm:$0xff]
    %v2667 = vld [vmem:[#allocation2 + $0x28] sm:$0xff]
    %v2668 = vld [vmem:[#allocation2 + $0x30] sm:$0xff]
    %v2669 = vld [vmem:[#allocation2 + $0x38] sm:$0xff]
    %v2670 = vld [vmem:[#allocation2 + $0x40] sm:$0xff]
    %v2671 = vld [vmem:[#allocation2 + $0x48] sm:$0xff]
    %v2672 = vld [vmem:[#allocation2 + $0x50] sm:$0xff]
    %v2673 = vld [vmem:[#allocation2 + $0x58] sm:$0xff]
    %v2674 = vld [vmem:[#allocation2 + $0x60] sm:$0xff]
    %v2675 = vld [vmem:[#allocation2 + $0x68] sm:$0xff]
    %v2676 = vld [vmem:[#allocation2 + $0x70] sm:$0xff]
    %v2677 = vld [vmem:[#allocation2 + $0x78] sm:$0xff]
    %v2678 = vpack.c.bf16 %v2663, %v2662
    %v2679 = vpack.c.bf16 %v2665, %v2664
    %v2680 = vpack.c.bf16 %v2667, %v2666
    %v2681 = vpack.c.bf16 %v2669, %v2668
    %v2682 = vpack.c.bf16 %v2671, %v2670
    %v2683 = vpack.c.bf16 %v2673, %v2672
    %v2684 = vpack.c.bf16 %v2675, %v2674
    %v2685 = vpack.c.bf16 %v2677, %v2676
    %2686 = vmatpush.bf16.xpose.msra.mxu0 %v2685
    %2687 = vmatpush.bf16.xpose.msra.mxu0 %v2684
    %2688 = vmatpush.bf16.xpose.msra.mxu0 %v2683
    %2689 = vmatpush.bf16.xpose.msra.mxu0 %v2682
    %2690 = vmatpush.bf16.xpose.msra.mxu0 %v2681
    %2691 = vmatpush.bf16.xpose.msra.mxu0 %v2680
    %2692 = vmatpush.bf16.xpose.msra.mxu0 %v2679
    %2693 = vmatpush.bf16.xpose.msra.mxu0 %v2678
    %2694 = vmatmul.bf16.gmra.mxu0 %v2661
    %v2695 = vpop.f32.mrf.mxu0
    %v2696 = vadd.f32 0.0, %v2695
    %v2697 = vpop.f32.mrf.mxu0
    %2698 = vdwg.mxu0
    %v2699 = vmul.f32 %v2660, 10.0
    %v2700 = vmul.f32 %v2696, 10.0
    %2701 = vmax.xlane.f32.xlu0 %v2700
    %v2702 = vpop.xlane.xlu0 %2701
    %v2703 = vmax.f32 %v2702, %v2699
    %v2704 = vsub.f32 %v2699, %v2703
    %v2705 = vmul.f32 %v2704, 1.442695
    %v2706 = vpow.pop %v2705
    %v2707 = vsub.f32 %v2700, %v2703
    %v2708 = vmul.f32 %v2707, 1.442695
    %v2709 = vpow.pop %v2708
    %2710 = vadd.xlane.f32.xlu0 %v2709
    %v2711 = vpop.xlane.xlu0 %2710
    %v2712 = vadd.f32 %v2706, %v2711
    %v2713 = vlog2.pop %v2712
    %v2714 = vmul.f32 %v2713, 0.6931472
    %v2715 = vadd.f32 %v2714, %v2703
    %v2716 = vsub.f32 %v2715, %v2699
    %vm2717 = vcmask 7168
    %v2718 = vsel %vm2717, %v2716, 0.0
    %2719 = vadd.xlane.f32.xlu0 %v2718
    %v2720 = vpop.xlane.xlu0 %2719
    %v2721 = vrot.slane %v2720, 4
    %v2722 = vadd.f32 %v2720, %v2721
    %v2723 = vrot.slane %v2722, 2
    %v2724 = vadd.f32 %v2722, %v2723
    %v2725 = vrot.slane %v2724, 1
    %v2726 = vadd.f32 %v2724, %v2725
    %s2727 = vtos %v2726
    %s2728 = smul.f32 %s2727, 0.25
    %s2729 = scalar_lea.smem [#allocation9], 0
    %2730 = sst [smem:[%s2729]] %s2728
    %s2731 = sadd.s32 %s110, 8
    %p2732 = scmp.lt.s32.totalorder %s2731, 0
    %s2733 = ssub.s32 0, %s2731
    %s2734 = scalar_select %p2732, %s2733, %s2731
    %s2735 = sand.u32 %s2734, 127
    %s2736 = ssub.s32 0, %s2735
    %s2737 = scalar_select %p2732, %s2736, %s2735
    %p2738 = scmp.ne.s32.totalorder %s2737, 0
    %p2739 = scmp.lt.s32.totalorder %s2737, 0
    %p2740 = pnand %p2739, %p2738
    %p2741 = pneg %p2740
    %s2742 = sadd.s32 %s2737, 128
    %s2743 = scalar_select %p2741, %s2742, %s2737
    %s2744 = scalar_lea.smem [#allocation10], 0
    %2745 = sst [smem:[%s2744]] %s2743
    %s2746 = smul.u32 8, 1
    %s2747 = sshll.u32 %s2746, 4
    %2748 = dma.done %s2622, %s2747
    // Predicated region
    $region99: #{moco_forward.1} parent=1 // pred_check
      _
    $region100: #{moco_forward.1} parent=1 // pred_check_branch
      %2750 = sbr.rel (0) target = $region102
    $region101: #{moco_forward.1} parent=1 // pred_region
      %2752 = vsyncadd [#allocation8], 0
      %s2754 = sshll.u32 %s11, 4
      %s2755 = int_to_ptr.hbm [resolvable:$true] %s2754
      %2757 = dma.smem_to_hbm [#allocation9], 16, %s2755, [#allocation8]
    $region102: #{moco_forward.1} parent=1 // pred_fallthru
      _
    // Predicated region
    $region103: #{moco_forward.1} parent=1 // pred_check
      _
    $region104: #{moco_forward.1} parent=1 // pred_check_branch
      %2759 = sbr.rel (0) target = $region106
    $region105: #{moco_forward.1} parent=1 // pred_region
      _
    $region106: #{moco_forward.1} parent=1 // pred_fallthru
      _
    // Predicated region
    $region107: #{moco_forward.1} parent=1 // pred_check
      _
    $region108: #{moco_forward.1} parent=1 // pred_check_branch
      %2761 = sbr.rel (0) target = $region110
    $region109: #{moco_forward.1} parent=1 // pred_region
      _
    $region110: #{moco_forward.1} parent=1 // pred_fallthru
      _
    // Predicated region
    $region111: #{moco_forward.1} parent=1 // pred_check
      _
    $region112: #{moco_forward.1} parent=1 // pred_check_branch
      %2763 = sbr.rel (0) target = $region114
    $region113: #{moco_forward.1} parent=1 // pred_region
      _
    $region114: #{moco_forward.1} parent=1 // pred_fallthru
      _
    // Predicated region
    $region115: #{moco_forward.1} parent=1 // pred_check
      _
    $region116: #{moco_forward.1} parent=1 // pred_check_branch
      %2765 = sbr.rel (0) target = $region118
    $region117: #{moco_forward.1} parent=1 // pred_region
      _
    $region118: #{moco_forward.1} parent=1 // pred_fallthru
      _
    // Predicated region
    $region119: #{moco_forward.1} parent=1 // pred_check
      _
    $region120: #{moco_forward.1} parent=1 // pred_check_branch
      %2767 = sbr.rel (0) target = $region122
    $region121: #{moco_forward.1} parent=1 // pred_region
      %2769 = vsyncadd [#allocation11], 0
      %s2771 = sshll.u32 %s17, 4
      %s2772 = int_to_ptr.hbm [resolvable:$true] %s2771
      %2774 = dma.smem_to_hbm [#allocation10], 16, %s2772, [#allocation11]
    $region122: #{moco_forward.1} parent=1 // pred_fallthru
      _
    // Predicated region
    $region123: #{moco_forward.1} parent=1 // pred_check
      _
    $region124: #{moco_forward.1} parent=1 // pred_check_branch
      %2776 = sbr.rel (0) target = $region126
    $region125: #{moco_forward.1} parent=1 // pred_region
      %2778 = dma.done [#allocation8], 16
    $region126: #{moco_forward.1} parent=1 // pred_fallthru
      _
    // Predicated region
    $region127: #{moco_forward.1} parent=1 // pred_check
      _
    $region128: #{moco_forward.1} parent=1 // pred_check_branch
      %2780 = sbr.rel (0) target = $region130
    $region129: #{moco_forward.1} parent=1 // pred_region
      _
    $region130: #{moco_forward.1} parent=1 // pred_fallthru
      _
    // Predicated region
    $region131: #{moco_forward.1} parent=1 // pred_check
      _
    $region132: #{moco_forward.1} parent=1 // pred_check_branch
      %2782 = sbr.rel (0) target = $region134
    $region133: #{moco_forward.1} parent=1 // pred_region
      _
    $region134: #{moco_forward.1} parent=1 // pred_fallthru
      _
    // Predicated region
    $region135: #{moco_forward.1} parent=1 // pred_check
      _
    $region136: #{moco_forward.1} parent=1 // pred_check_branch
      %2784 = sbr.rel (0) target = $region138
    $region137: #{moco_forward.1} parent=1 // pred_region
      _
    $region138: #{moco_forward.1} parent=1 // pred_fallthru
      _
    // Predicated region
    $region139: #{moco_forward.1} parent=1 // pred_check
      _
    $region140: #{moco_forward.1} parent=1 // pred_check_branch
      %2786 = sbr.rel (0) target = $region142
    $region141: #{moco_forward.1} parent=1 // pred_region
      _
    $region142: #{moco_forward.1} parent=1 // pred_fallthru
      _
    // Predicated region
    $region143: #{moco_forward.1} parent=1 // pred_check
      _
    $region144: #{moco_forward.1} parent=1 // pred_check_branch
      %2788 = sbr.rel (0) target = $region146
    $region145: #{moco_forward.1} parent=1 // pred_region
      %2790 = dma.done [#allocation11], 16
    $region146: #{moco_forward.1} parent=1 // pred_fallthru
      _
    %2791 = sfence
    %2792 = vsyncpa [#allocation7], 1
    %2793 = vsyncpa [#allocation8], 1
    %2794 = vsyncpa [#allocation11], 1
  %2795 = vsyncmov [#allocation4]
  %s2796 = vpop.sfrf %2795
  %p2797 = scmp.eq.s32.totalorder %s2796, 0
  %p2798 = pneg %p2797
  %2800 = shalt.err (%p2798)
  %s2801 = scalar_lea.sflag [#allocation4], 1
  %2802 = vsyncmov %s2801
  %s2803 = vpop.sfrf %2802
  %p2804 = scmp.eq.s32.totalorder %s2803, 0
  %p2805 = pneg %p2804
  %2807 = shalt.err (%p2805)

</llo_original>
